<compile_context>
chip_gen: v6e
topology: v6e:2x2x1
jax: 0.10.0
libtpu: 0.0.40
codegen_flags: <defaults>
</compile_context>

<pallas_src>
import functools

import jax
import jax.numpy as jnp
from jax.experimental import pallas as pl
from jax.experimental.pallas import tpu as pltpu

KH, KW = 5, 5
PAD = 2
C_TILE = 256      # lane-width channel tile (2 x 128 lanes)
SUBLANE = 8


def _dwconv_kernel(x_ref, w_ref, o_ref, *, H, W_out):
    # x_ref: (H + KH - 1, W_out + KW - 1, C_TILE)  zero-padded input tile (VMEM)
    # w_ref: (KH * KW, C_TILE)                     per-channel filter taps (VMEM)
    # o_ref: (H, W_out, C_TILE)                    output tile (VMEM)
    c = o_ref.shape[-1]
    w_all = w_ref[...].astype(jnp.float32)                       # hoisted: all 25 taps, once
    acc = jnp.zeros((H, W_out, c), jnp.float32)
    for kw in range(KW):
        # One sublane-shifted load per kw covering every input row needed (5 loads total).
        slab = x_ref[:, kw:kw + W_out, :].astype(jnp.float32)    # (H + KH - 1, W_out, C)
        for kh in range(KH):
            tap = slab[kh:kh + H]                                # leading-dim slice: free
            acc = acc + tap * w_all[kh * KW + kw]                # VPU MAC, wt bcast over (H,W)
    o_ref[...] = acc.astype(o_ref.dtype)


@jax.jit
def depthwise_conv2d_nchw(x_nchw, w_torch):
    """x_nchw: (1, C, H, W); w_torch: (C, 1, KH, KW). Returns (1, C, H, W)."""
    n, c, h, w = x_nchw.shape
    assert n == 1
    assert w_torch.shape == (c, 1, KH, KW)

    # Padded sizes: channels to a lane-tile multiple, output W to a full sublane group.
    c_pad = ((c + C_TILE - 1) // C_TILE) * C_TILE
    w_out_pad = ((w + SUBLANE - 1) // SUBLANE) * SUBLANE
    h_in = h + KH - 1                      # == h + 2*PAD for this module (stride 1, pad 2)
    w_in = w_out_pad + KW - 1

    # ---- glue (fused under this jit): NCHW -> HWC, spatial + channel zero-pad ----
    x_hwc = jnp.transpose(x_nchw[0], (1, 2, 0))                              # (H, W, C)
    x_pad = jnp.pad(
        x_hwc, ((PAD, PAD), (PAD, w_in - w - PAD), (0, c_pad - c))
    )                                                                        # (h_in, w_in, c_pad)
    w_flat = jnp.transpose(w_torch[:, 0, :, :].reshape(c, KH * KW), (1, 0))  # (KH*KW, C)
    w_flat = jnp.pad(w_flat, ((0, 0), (0, c_pad - c)))

    n_cblk = c_pad // C_TILE
    kernel = functools.partial(_dwconv_kernel, H=h, W_out=w_out_pad)

    out_hwc = pl.pallas_call(
        kernel,
        out_shape=jax.ShapeDtypeStruct((h, w_out_pad, c_pad), x_nchw.dtype),
        grid_spec=pltpu.PrefetchScalarGridSpec(
            num_scalar_prefetch=0,
            grid=(n_cblk,),
            in_specs=[
                pl.BlockSpec((h_in, w_in, C_TILE), lambda ci: (0, 0, ci)),
                pl.BlockSpec((KH * KW, C_TILE), lambda ci: (0, ci)),
            ],
            out_specs=pl.BlockSpec((h, w_out_pad, C_TILE), lambda ci: (0, 0, ci)),
        ),
        compiler_params=pltpu.CompilerParams(
            dimension_semantics=("parallel",),   # >=2 channel blocks -> both v7x TCs get work
        ),
    )(x_pad, w_flat)

    out_hwc = out_hwc[:, :w, :c]                        # drop W / channel padding
    return jnp.transpose(out_hwc, (2, 0, 1))[None]      # back to (1, C, H, W)


def _reference(x_nchw, w_torch):
    # jax reference: grouped conv, groups == channels
    return jax.lax.conv_general_dilated(
        x_nchw, w_torch,
        window_strides=(1, 1),
        padding=((PAD, PAD), (PAD, PAD)),
        dimension_numbers=("NCHW", "OIHW", "NCHW"),
        feature_group_count=x_nchw.shape[1],
    )


if __name__ == "__main__":
    C, H, W = 2064, 7, 7  # shapes from the PyTorch module
    key = jax.random.PRNGKey(0)
    kx, kw_key = jax.random.split(key)
    x = jax.random.normal(kx, (1, C, H, W), dtype=jnp.float32)
    weight = jax.random.normal(kw_key, (C, 1, KH, KW), dtype=jnp.float32) * 0.1

    out = depthwise_conv2d_nchw(x, weight)
    out = jax.block_until_ready(out)

    ref = _reference(x, weight)
    assert out.shape == (1, C, H, W)
    assert jnp.allclose(out, ref, atol=1e-4, rtol=1e-4)

    print("KERNEL_OK")
</pallas_src>

<mosaic_0001>
module attributes {stable_mosaic.version = 11 : i64} {
  func.func @_dwconv_kernel(%arg0: i32, %arg1: memref<11x12x256xf32, #tpu.memory_space<vmem>>, %arg2: memref<25x256xf32, #tpu.memory_space<vmem>>, %arg3: memref<7x8x256xf32, #tpu.memory_space<vmem>>) attributes {dimension_semantics = [#tpu.dimension_semantics<parallel>], iteration_bounds = array<i64: 9>, scalar_prefetch = 0 : i64, scratch_operands = 0 : i64, tpu.core_type = #tpu.core_type<tc>, window_params = [{transform_indices = @transform_0, window_bounds = array<i64: 11, 12, 256>}, {transform_indices = @transform_1, window_bounds = array<i64: 25, 256>}, {transform_indices = @transform_2, window_bounds = array<i64: 7, 8, 256>}]} {
    %c0 = arith.constant 0 : index
    %c0_0 = arith.constant 0 : index
    %0 = vector.load %arg2[%c0, %c0_0] : memref<25x256xf32, #tpu.memory_space<vmem>>, vector<25x256xf32>
    %cst = arith.constant 0.000000e+00 : f32
    %1 = vector.broadcast %cst : f32 to vector<7x8x256xf32>
    %c0_1 = arith.constant 0 : index
    %c0_2 = arith.constant 0 : index
    %c0_3 = arith.constant 0 : index
    %2 = vector.load %arg1[%c0_1, %c0_2, %c0_3] : memref<11x12x256xf32, #tpu.memory_space<vmem>>, vector<11x8x256xf32>
    %3 = vector.extract_strided_slice %2 {offsets = [0, 0, 0], sizes = [7, 8, 256], strides = [1, 1, 1]} : vector<11x8x256xf32> to vector<7x8x256xf32>
    %4 = vector.extract_strided_slice %0 {offsets = [0, 0], sizes = [1, 256], strides = [1, 1]} : vector<25x256xf32> to vector<1x256xf32>
    %5 = vector.shape_cast %4 : vector<1x256xf32> to vector<256xf32>
    %6 = vector.shape_cast %5 : vector<256xf32> to vector<1x1x256xf32>
    %7 = vector.broadcast %6 : vector<1x1x256xf32> to vector<7x8x256xf32>
    %8 = arith.mulf %3, %7 : vector<7x8x256xf32>
    %9 = arith.addf %1, %8 : vector<7x8x256xf32>
    %10 = vector.extract_strided_slice %2 {offsets = [1, 0, 0], sizes = [7, 8, 256], strides = [1, 1, 1]} : vector<11x8x256xf32> to vector<7x8x256xf32>
    %11 = vector.extract_strided_slice %0 {offsets = [5, 0], sizes = [1, 256], strides = [1, 1]} : vector<25x256xf32> to vector<1x256xf32>
    %12 = vector.shape_cast %11 : vector<1x256xf32> to vector<256xf32>
    %13 = vector.shape_cast %12 : vector<256xf32> to vector<1x1x256xf32>
    %14 = vector.broadcast %13 : vector<1x1x256xf32> to vector<7x8x256xf32>
    %15 = arith.mulf %10, %14 : vector<7x8x256xf32>
    %16 = arith.addf %9, %15 : vector<7x8x256xf32>
    %17 = vector.extract_strided_slice %2 {offsets = [2, 0, 0], sizes = [7, 8, 256], strides = [1, 1, 1]} : vector<11x8x256xf32> to vector<7x8x256xf32>
    %18 = vector.extract_strided_slice %0 {offsets = [10, 0], sizes = [1, 256], strides = [1, 1]} : vector<25x256xf32> to vector<1x256xf32>
    %19 = vector.shape_cast %18 : vector<1x256xf32> to vector<256xf32>
    %20 = vector.shape_cast %19 : vector<256xf32> to vector<1x1x256xf32>
    %21 = vector.broadcast %20 : vector<1x1x256xf32> to vector<7x8x256xf32>
    %22 = arith.mulf %17, %21 : vector<7x8x256xf32>
    %23 = arith.addf %16, %22 : vector<7x8x256xf32>
    %24 = vector.extract_strided_slice %2 {offsets = [3, 0, 0], sizes = [7, 8, 256], strides = [1, 1, 1]} : vector<11x8x256xf32> to vector<7x8x256xf32>
    %25 = vector.extract_strided_slice %0 {offsets = [15, 0], sizes = [1, 256], strides = [1, 1]} : vector<25x256xf32> to vector<1x256xf32>
    %26 = vector.shape_cast %25 : vector<1x256xf32> to vector<256xf32>
    %27 = vector.shape_cast %26 : vector<256xf32> to vector<1x1x256xf32>
    %28 = vector.broadcast %27 : vector<1x1x256xf32> to vector<7x8x256xf32>
    %29 = arith.mulf %24, %28 : vector<7x8x256xf32>
    %30 = arith.addf %23, %29 : vector<7x8x256xf32>
    %31 = vector.extract_strided_slice %2 {offsets = [4, 0, 0], sizes = [7, 8, 256], strides = [1, 1, 1]} : vector<11x8x256xf32> to vector<7x8x256xf32>
    %32 = vector.extract_strided_slice %0 {offsets = [20, 0], sizes = [1, 256], strides = [1, 1]} : vector<25x256xf32> to vector<1x256xf32>
    %33 = vector.shape_cast %32 : vector<1x256xf32> to vector<256xf32>
    %34 = vector.shape_cast %33 : vector<256xf32> to vector<1x1x256xf32>
    %35 = vector.broadcast %34 : vector<1x1x256xf32> to vector<7x8x256xf32>
    %36 = arith.mulf %31, %35 : vector<7x8x256xf32>
    %37 = arith.addf %30, %36 : vector<7x8x256xf32>
    %c0_4 = arith.constant 0 : index
    %c1 = arith.constant 1 : index
    %c0_5 = arith.constant 0 : index
    %38 = vector.load %arg1[%c0_4, %c1, %c0_5] : memref<11x12x256xf32, #tpu.memory_space<vmem>>, vector<11x8x256xf32>
    %39 = vector.extract_strided_slice %38 {offsets = [0, 0, 0], sizes = [7, 8, 256], strides = [1, 1, 1]} : vector<11x8x256xf32> to vector<7x8x256xf32>
    %40 = vector.extract_strided_slice %0 {offsets = [1, 0], sizes = [1, 256], strides = [1, 1]} : vector<25x256xf32> to vector<1x256xf32>
    %41 = vector.shape_cast %40 : vector<1x256xf32> to vector<256xf32>
    %42 = vector.shape_cast %41 : vector<256xf32> to vector<1x1x256xf32>
    %43 = vector.broadcast %42 : vector<1x1x256xf32> to vector<7x8x256xf32>
    %44 = arith.mulf %39, %43 : vector<7x8x256xf32>
    %45 = arith.addf %37, %44 : vector<7x8x256xf32>
    %46 = vector.extract_strided_slice %38 {offsets = [1, 0, 0], sizes = [7, 8, 256], strides = [1, 1, 1]} : vector<11x8x256xf32> to vector<7x8x256xf32>
    %47 = vector.extract_strided_slice %0 {offsets = [6, 0], sizes = [1, 256], strides = [1, 1]} : vector<25x256xf32> to vector<1x256xf32>
    %48 = vector.shape_cast %47 : vector<1x256xf32> to vector<256xf32>
    %49 = vector.shape_cast %48 : vector<256xf32> to vector<1x1x256xf32>
    %50 = vector.broadcast %49 : vector<1x1x256xf32> to vector<7x8x256xf32>
    %51 = arith.mulf %46, %50 : vector<7x8x256xf32>
    %52 = arith.addf %45, %51 : vector<7x8x256xf32>
    %53 = vector.extract_strided_slice %38 {offsets = [2, 0, 0], sizes = [7, 8, 256], strides = [1, 1, 1]} : vector<11x8x256xf32> to vector<7x8x256xf32>
    %54 = vector.extract_strided_slice %0 {offsets = [11, 0], sizes = [1, 256], strides = [1, 1]} : vector<25x256xf32> to vector<1x256xf32>
    %55 = vector.shape_cast %54 : vector<1x256xf32> to vector<256xf32>
    %56 = vector.shape_cast %55 : vector<256xf32> to vector<1x1x256xf32>
    %57 = vector.broadcast %56 : vector<1x1x256xf32> to vector<7x8x256xf32>
    %58 = arith.mulf %53, %57 : vector<7x8x256xf32>
    %59 = arith.addf %52, %58 : vector<7x8x256xf32>
    %60 = vector.extract_strided_slice %38 {offsets = [3, 0, 0], sizes = [7, 8, 256], strides = [1, 1, 1]} : vector<11x8x256xf32> to vector<7x8x256xf32>
    %61 = vector.extract_strided_slice %0 {offsets = [16, 0], sizes = [1, 256], strides = [1, 1]} : vector<25x256xf32> to vector<1x256xf32>
    %62 = vector.shape_cast %61 : vector<1x256xf32> to vector<256xf32>
    %63 = vector.shape_cast %62 : vector<256xf32> to vector<1x1x256xf32>
    %64 = vector.broadcast %63 : vector<1x1x256xf32> to vector<7x8x256xf32>
    %65 = arith.mulf %60, %64 : vector<7x8x256xf32>
    %66 = arith.addf %59, %65 : vector<7x8x256xf32>
    %67 = vector.extract_strided_slice %38 {offsets = [4, 0, 0], sizes = [7, 8, 256], strides = [1, 1, 1]} : vector<11x8x256xf32> to vector<7x8x256xf32>
    %68 = vector.extract_strided_slice %0 {offsets = [21, 0], sizes = [1, 256], strides = [1, 1]} : vector<25x256xf32> to vector<1x256xf32>
    %69 = vector.shape_cast %68 : vector<1x256xf32> to vector<256xf32>
    %70 = vector.shape_cast %69 : vector<256xf32> to vector<1x1x256xf32>
    %71 = vector.broadcast %70 : vector<1x1x256xf32> to vector<7x8x256xf32>
    %72 = arith.mulf %67, %71 : vector<7x8x256xf32>
    %73 = arith.addf %66, %72 : vector<7x8x256xf32>
    %c0_6 = arith.constant 0 : index
    %c2 = arith.constant 2 : index
    %c0_7 = arith.constant 0 : index
    %74 = vector.load %arg1[%c0_6, %c2, %c0_7] : memref<11x12x256xf32, #tpu.memory_space<vmem>>, vector<11x8x256xf32>
    %75 = vector.extract_strided_slice %74 {offsets = [0, 0, 0], sizes = [7, 8, 256], strides = [1, 1, 1]} : vector<11x8x256xf32> to vector<7x8x256xf32>
    %76 = vector.extract_strided_slice %0 {offsets = [2, 0], sizes = [1, 256], strides = [1, 1]} : vector<25x256xf32> to vector<1x256xf32>
    %77 = vector.shape_cast %76 : vector<1x256xf32> to vector<256xf32>
    %78 = vector.shape_cast %77 : vector<256xf32> to vector<1x1x256xf32>
    %79 = vector.broadcast %78 : vector<1x1x256xf32> to vector<7x8x256xf32>
    %80 = arith.mulf %75, %79 : vector<7x8x256xf32>
    %81 = arith.addf %73, %80 : vector<7x8x256xf32>
    %82 = vector.extract_strided_slice %74 {offsets = [1, 0, 0], sizes = [7, 8, 256], strides = [1, 1, 1]} : vector<11x8x256xf32> to vector<7x8x256xf32>
    %83 = vector.extract_strided_slice %0 {offsets = [7, 0], sizes = [1, 256], strides = [1, 1]} : vector<25x256xf32> to vector<1x256xf32>
    %84 = vector.shape_cast %83 : vector<1x256xf32> to vector<256xf32>
    %85 = vector.shape_cast %84 : vector<256xf32> to vector<1x1x256xf32>
    %86 = vector.broadcast %85 : vector<1x1x256xf32> to vector<7x8x256xf32>
    %87 = arith.mulf %82, %86 : vector<7x8x256xf32>
    %88 = arith.addf %81, %87 : vector<7x8x256xf32>
    %89 = vector.extract_strided_slice %74 {offsets = [2, 0, 0], sizes = [7, 8, 256], strides = [1, 1, 1]} : vector<11x8x256xf32> to vector<7x8x256xf32>
    %90 = vector.extract_strided_slice %0 {offsets = [12, 0], sizes = [1, 256], strides = [1, 1]} : vector<25x256xf32> to vector<1x256xf32>
    %91 = vector.shape_cast %90 : vector<1x256xf32> to vector<256xf32>
    %92 = vector.shape_cast %91 : vector<256xf32> to vector<1x1x256xf32>
    %93 = vector.broadcast %92 : vector<1x1x256xf32> to vector<7x8x256xf32>
    %94 = arith.mulf %89, %93 : vector<7x8x256xf32>
    %95 = arith.addf %88, %94 : vector<7x8x256xf32>
    %96 = vector.extract_strided_slice %74 {offsets = [3, 0, 0], sizes = [7, 8, 256], strides = [1, 1, 1]} : vector<11x8x256xf32> to vector<7x8x256xf32>
    %97 = vector.extract_strided_slice %0 {offsets = [17, 0], sizes = [1, 256], strides = [1, 1]} : vector<25x256xf32> to vector<1x256xf32>
    %98 = vector.shape_cast %97 : vector<1x256xf32> to vector<256xf32>
    %99 = vector.shape_cast %98 : vector<256xf32> to vector<1x1x256xf32>
    %100 = vector.broadcast %99 : vector<1x1x256xf32> to vector<7x8x256xf32>
    %101 = arith.mulf %96, %100 : vector<7x8x256xf32>
    %102 = arith.addf %95, %101 : vector<7x8x256xf32>
    %103 = vector.extract_strided_slice %74 {offsets = [4, 0, 0], sizes = [7, 8, 256], strides = [1, 1, 1]} : vector<11x8x256xf32> to vector<7x8x256xf32>
    %104 = vector.extract_strided_slice %0 {offsets = [22, 0], sizes = [1, 256], strides = [1, 1]} : vector<25x256xf32> to vector<1x256xf32>
    %105 = vector.shape_cast %104 : vector<1x256xf32> to vector<256xf32>
    %106 = vector.shape_cast %105 : vector<256xf32> to vector<1x1x256xf32>
    %107 = vector.broadcast %106 : vector<1x1x256xf32> to vector<7x8x256xf32>
    %108 = arith.mulf %103, %107 : vector<7x8x256xf32>
    %109 = arith.addf %102, %108 : vector<7x8x256xf32>
    %c0_8 = arith.constant 0 : index
    %c3 = arith.constant 3 : index
    %c0_9 = arith.constant 0 : index
    %110 = vector.load %arg1[%c0_8, %c3, %c0_9] : memref<11x12x256xf32, #tpu.memory_space<vmem>>, vector<11x8x256xf32>
    %111 = vector.extract_strided_slice %110 {offsets = [0, 0, 0], sizes = [7, 8, 256], strides = [1, 1, 1]} : vector<11x8x256xf32> to vector<7x8x256xf32>
    %112 = vector.extract_strided_slice %0 {offsets = [3, 0], sizes = [1, 256], strides = [1, 1]} : vector<25x256xf32> to vector<1x256xf32>
    %113 = vector.shape_cast %112 : vector<1x256xf32> to vector<256xf32>
    %114 = vector.shape_cast %113 : vector<256xf32> to vector<1x1x256xf32>
    %115 = vector.broadcast %114 : vector<1x1x256xf32> to vector<7x8x256xf32>
    %116 = arith.mulf %111, %115 : vector<7x8x256xf32>
    %117 = arith.addf %109, %116 : vector<7x8x256xf32>
    %118 = vector.extract_strided_slice %110 {offsets = [1, 0, 0], sizes = [7, 8, 256], strides = [1, 1, 1]} : vector<11x8x256xf32> to vector<7x8x256xf32>
    %119 = vector.extract_strided_slice %0 {offsets = [8, 0], sizes = [1, 256], strides = [1, 1]} : vector<25x256xf32> to vector<1x256xf32>
    %120 = vector.shape_cast %119 : vector<1x256xf32> to vector<256xf32>
    %121 = vector.shape_cast %120 : vector<256xf32> to vector<1x1x256xf32>
    %122 = vector.broadcast %121 : vector<1x1x256xf32> to vector<7x8x256xf32>
    %123 = arith.mulf %118, %122 : vector<7x8x256xf32>
    %124 = arith.addf %117, %123 : vector<7x8x256xf32>
    %125 = vector.extract_strided_slice %110 {offsets = [2, 0, 0], sizes = [7, 8, 256], strides = [1, 1, 1]} : vector<11x8x256xf32> to vector<7x8x256xf32>
    %126 = vector.extract_strided_slice %0 {offsets = [13, 0], sizes = [1, 256], strides = [1, 1]} : vector<25x256xf32> to vector<1x256xf32>
    %127 = vector.shape_cast %126 : vector<1x256xf32> to vector<256xf32>
    %128 = vector.shape_cast %127 : vector<256xf32> to vector<1x1x256xf32>
    %129 = vector.broadcast %128 : vector<1x1x256xf32> to vector<7x8x256xf32>
    %130 = arith.mulf %125, %129 : vector<7x8x256xf32>
    %131 = arith.addf %124, %130 : vector<7x8x256xf32>
    %132 = vector.extract_strided_slice %110 {offsets = [3, 0, 0], sizes = [7, 8, 256], strides = [1, 1, 1]} : vector<11x8x256xf32> to vector<7x8x256xf32>
    %133 = vector.extract_strided_slice %0 {offsets = [18, 0], sizes = [1, 256], strides = [1, 1]} : vector<25x256xf32> to vector<1x256xf32>
    %134 = vector.shape_cast %133 : vector<1x256xf32> to vector<256xf32>
    %135 = vector.shape_cast %134 : vector<256xf32> to vector<1x1x256xf32>
    %136 = vector.broadcast %135 : vector<1x1x256xf32> to vector<7x8x256xf32>
    %137 = arith.mulf %132, %136 : vector<7x8x256xf32>
    %138 = arith.addf %131, %137 : vector<7x8x256xf32>
    %139 = vector.extract_strided_slice %110 {offsets = [4, 0, 0], sizes = [7, 8, 256], strides = [1, 1, 1]} : vector<11x8x256xf32> to vector<7x8x256xf32>
    %140 = vector.extract_strided_slice %0 {offsets = [23, 0], sizes = [1, 256], strides = [1, 1]} : vector<25x256xf32> to vector<1x256xf32>
    %141 = vector.shape_cast %140 : vector<1x256xf32> to vector<256xf32>
    %142 = vector.shape_cast %141 : vector<256xf32> to vector<1x1x256xf32>
    %143 = vector.broadcast %142 : vector<1x1x256xf32> to vector<7x8x256xf32>
    %144 = arith.mulf %139, %143 : vector<7x8x256xf32>
    %145 = arith.addf %138, %144 : vector<7x8x256xf32>
    %c0_10 = arith.constant 0 : index
    %c4 = arith.constant 4 : index
    %c0_11 = arith.constant 0 : index
    %146 = vector.load %arg1[%c0_10, %c4, %c0_11] : memref<11x12x256xf32, #tpu.memory_space<vmem>>, vector<11x8x256xf32>
    %147 = vector.extract_strided_slice %146 {offsets = [0, 0, 0], sizes = [7, 8, 256], strides = [1, 1, 1]} : vector<11x8x256xf32> to vector<7x8x256xf32>
    %148 = vector.extract_strided_slice %0 {offsets = [4, 0], sizes = [1, 256], strides = [1, 1]} : vector<25x256xf32> to vector<1x256xf32>
    %149 = vector.shape_cast %148 : vector<1x256xf32> to vector<256xf32>
    %150 = vector.shape_cast %149 : vector<256xf32> to vector<1x1x256xf32>
    %151 = vector.broadcast %150 : vector<1x1x256xf32> to vector<7x8x256xf32>
    %152 = arith.mulf %147, %151 : vector<7x8x256xf32>
    %153 = arith.addf %145, %152 : vector<7x8x256xf32>
    %154 = vector.extract_strided_slice %146 {offsets = [1, 0, 0], sizes = [7, 8, 256], strides = [1, 1, 1]} : vector<11x8x256xf32> to vector<7x8x256xf32>
    %155 = vector.extract_strided_slice %0 {offsets = [9, 0], sizes = [1, 256], strides = [1, 1]} : vector<25x256xf32> to vector<1x256xf32>
    %156 = vector.shape_cast %155 : vector<1x256xf32> to vector<256xf32>
    %157 = vector.shape_cast %156 : vector<256xf32> to vector<1x1x256xf32>
    %158 = vector.broadcast %157 : vector<1x1x256xf32> to vector<7x8x256xf32>
    %159 = arith.mulf %154, %158 : vector<7x8x256xf32>
    %160 = arith.addf %153, %159 : vector<7x8x256xf32>
    %161 = vector.extract_strided_slice %146 {offsets = [2, 0, 0], sizes = [7, 8, 256], strides = [1, 1, 1]} : vector<11x8x256xf32> to vector<7x8x256xf32>
    %162 = vector.extract_strided_slice %0 {offsets = [14, 0], sizes = [1, 256], strides = [1, 1]} : vector<25x256xf32> to vector<1x256xf32>
    %163 = vector.shape_cast %162 : vector<1x256xf32> to vector<256xf32>
    %164 = vector.shape_cast %163 : vector<256xf32> to vector<1x1x256xf32>
    %165 = vector.broadcast %164 : vector<1x1x256xf32> to vector<7x8x256xf32>
    %166 = arith.mulf %161, %165 : vector<7x8x256xf32>
    %167 = arith.addf %160, %166 : vector<7x8x256xf32>
    %168 = vector.extract_strided_slice %146 {offsets = [3, 0, 0], sizes = [7, 8, 256], strides = [1, 1, 1]} : vector<11x8x256xf32> to vector<7x8x256xf32>
    %169 = vector.extract_strided_slice %0 {offsets = [19, 0], sizes = [1, 256], strides = [1, 1]} : vector<25x256xf32> to vector<1x256xf32>
    %170 = vector.shape_cast %169 : vector<1x256xf32> to vector<256xf32>
    %171 = vector.shape_cast %170 : vector<256xf32> to vector<1x1x256xf32>
    %172 = vector.broadcast %171 : vector<1x1x256xf32> to vector<7x8x256xf32>
    %173 = arith.mulf %168, %172 : vector<7x8x256xf32>
    %174 = arith.addf %167, %173 : vector<7x8x256xf32>
    %175 = vector.extract_strided_slice %146 {offsets = [4, 0, 0], sizes = [7, 8, 256], strides = [1, 1, 1]} : vector<11x8x256xf32> to vector<7x8x256xf32>
    %176 = vector.extract_strided_slice %0 {offsets = [24, 0], sizes = [1, 256], strides = [1, 1]} : vector<25x256xf32> to vector<1x256xf32>
    %177 = vector.shape_cast %176 : vector<1x256xf32> to vector<256xf32>
    %178 = vector.shape_cast %177 : vector<256xf32> to vector<1x1x256xf32>
    %179 = vector.broadcast %178 : vector<1x1x256xf32> to vector<7x8x256xf32>
    %180 = arith.mulf %175, %179 : vector<7x8x256xf32>
    %181 = arith.addf %174, %180 : vector<7x8x256xf32>
    %c0_12 = arith.constant 0 : index
    %c0_13 = arith.constant 0 : index
    %c0_14 = arith.constant 0 : index
    %182 = vector.load %arg3[%c0_12, %c0_13, %c0_14] : memref<7x8x256xf32, #tpu.memory_space<vmem>>, vector<7x8x256xf32>
    tpu.vector_store %arg3[%c0_12, %c0_13, %c0_14], %181 {strides = array<i32>} : memref<7x8x256xf32, #tpu.memory_space<vmem>>, vector<7x8x256xf32>,
    return
  }
  func.func @transform_0(%arg0: i32) -> (i32, i32, i32) {
    %c0_i32 = arith.constant 0 : i32
    %c0_i32_0 = arith.constant 0 : i32
    %c0_i32_1 = arith.constant 0 : i32
    return %c0_i32, %c0_i32_0, %arg0 : i32, i32, i32
  }
  func.func @transform_1(%arg0: i32) -> (i32, i32) {
    %c0_i32 = arith.constant 0 : i32
    %c0_i32_0 = arith.constant 0 : i32
    return %c0_i32, %arg0 : i32, i32
  }
  func.func @transform_2(%arg0: i32) -> (i32, i32, i32) {
    %c0_i32 = arith.constant 0 : i32
    %c0_i32_0 = arith.constant 0 : i32
    %c0_i32_1 = arith.constant 0 : i32
    return %c0_i32, %c0_i32_0, %arg0 : i32, i32, i32
  }
}

</mosaic_0001>

<llo_original>
// kernel: squeeze.3
$region0: #{squeeze.3}
  %s0 = inlined_call_operand.vmem [shape: f32[2064,5,5], index: 0, kind: input, shape index: {}]
  %s1 = inlined_call_operand.vmem [shape: f32[2064,25], index: 1, kind: output, shape index: {}]
  %s2 = scalar_lea.vmem %s0, 128
  %v3 = vld [vmem:[%s2] sm:$0x1f]
  %vm4 = vcmask 130048
  %s5 = scalar_lea.vmem %s1, 128
  %6 = vst.msk [vmem:[%s5] sm:$0x1f] %vm4, %v3
  %s7 = scalar_lea.vmem %s0, 264
  %v8 = vld [vmem:[%s7] sm:$0x1f]
  %vm9 = vcmask 130048
  %s10 = scalar_lea.vmem %s1, 133
  %11 = vst.msk [vmem:[%s10] sm:$0x7] %vm9, %v8
  %s12 = scalar_lea.vmem %s1, 261
  %13 = vst.msk [vmem:[%s12] sm:$0x18] %vm9, %v8
  %s14 = scalar_lea.vmem %s0, 400
  %v15 = vld [vmem:[%s14] sm:$0x1f]
  %vm16 = vcmask 130048
  %s17 = scalar_lea.vmem %s1, 266
  %18 = vst.msk [vmem:[%s17] sm:$0x1f] %vm16, %v15
  %s19 = scalar_lea.vmem %s0, 536
  %v20 = vld [vmem:[%s19] sm:$0x1f]
  %vm21 = vcmask 130048
  %s22 = scalar_lea.vmem %s1, 271
  %23 = vst.msk [vmem:[%s22] ss:$129 sm:$0x3] %vm21, %v20
  %s24 = scalar_lea.vmem %s1, 399
  %25 = vst.msk [vmem:[%s24] sm:$0x1c] %vm21, %v20
  %s26 = scalar_lea.vmem %s0, 672
  %v27 = vld [vmem:[%s26] sm:$0x1f]
  %vm28 = vcmask 130048
  %s29 = scalar_lea.vmem %s1, 404
  %30 = vst.msk [vmem:[%s29] sm:$0xf] %vm28, %v27
  %s31 = scalar_lea.vmem %s1, 532
  %32 = vst.msk [vmem:[%s31] sm:$0x10] %vm28, %v27
  %v33 = vld [vmem:[%s0] sm:$0x1f]
  %34 = vst [vmem:[%s1] sm:$0x1f] %v33
  %s35 = scalar_lea.vmem %s0, 8
  %v36 = vld [vmem:[%s35] sm:$0x1f]
  %s37 = scalar_lea.vmem %s1, 8
  %38 = vst [vmem:[%s37] sm:$0x1f] %v36
  %s39 = scalar_lea.vmem %s0, 16
  %v40 = vld [vmem:[%s39] sm:$0x1f]
  %s41 = scalar_lea.vmem %s1, 16
  %42 = vst [vmem:[%s41] sm:$0x1f] %v40
  %s43 = scalar_lea.vmem %s0, 24
  %v44 = vld [vmem:[%s43] sm:$0x1f]
  %s45 = scalar_lea.vmem %s1, 24
  %46 = vst [vmem:[%s45] sm:$0x1f] %v44
  %s47 = scalar_lea.vmem %s0, 32
  %v48 = vld [vmem:[%s47] sm:$0x1f]
  %s49 = scalar_lea.vmem %s1, 32
  %50 = vst [vmem:[%s49] sm:$0x1f] %v48
  %s51 = scalar_lea.vmem %s0, 40
  %v52 = vld [vmem:[%s51] sm:$0x1f]
  %s53 = scalar_lea.vmem %s1, 40
  %54 = vst [vmem:[%s53] sm:$0x1f] %v52
  %s55 = scalar_lea.vmem %s0, 48
  %v56 = vld [vmem:[%s55] sm:$0x1f]
  %s57 = scalar_lea.vmem %s1, 48
  %58 = vst [vmem:[%s57] sm:$0x1f] %v56
  %s59 = scalar_lea.vmem %s0, 56
  %v60 = vld [vmem:[%s59] sm:$0x1f]
  %s61 = scalar_lea.vmem %s1, 56
  %62 = vst [vmem:[%s61] sm:$0x1f] %v60
  %s63 = scalar_lea.vmem %s0, 64
  %v64 = vld [vmem:[%s63] sm:$0x1f]
  %s65 = scalar_lea.vmem %s1, 64
  %66 = vst [vmem:[%s65] sm:$0x1f] %v64
  %s67 = scalar_lea.vmem %s0, 72
  %v68 = vld [vmem:[%s67] sm:$0x1f]
  %s69 = scalar_lea.vmem %s1, 72
  %70 = vst [vmem:[%s69] sm:$0x1f] %v68
  %s71 = scalar_lea.vmem %s0, 80
  %v72 = vld [vmem:[%s71] sm:$0x1f]
  %s73 = scalar_lea.vmem %s1, 80
  %74 = vst [vmem:[%s73] sm:$0x1f] %v72
  %s75 = scalar_lea.vmem %s0, 88
  %v76 = vld [vmem:[%s75] sm:$0x1f]
  %s77 = scalar_lea.vmem %s1, 88
  %78 = vst [vmem:[%s77] sm:$0x1f] %v76
  %s79 = scalar_lea.vmem %s0, 96
  %v80 = vld [vmem:[%s79] sm:$0x1f]
  %s81 = scalar_lea.vmem %s1, 96
  %82 = vst [vmem:[%s81] sm:$0x1f] %v80
  %s83 = scalar_lea.vmem %s0, 104
  %v84 = vld [vmem:[%s83] sm:$0x1f]
  %s85 = scalar_lea.vmem %s1, 104
  %86 = vst [vmem:[%s85] sm:$0x1f] %v84
  %s87 = scalar_lea.vmem %s0, 112
  %v88 = vld [vmem:[%s87] sm:$0x1f]
  %s89 = scalar_lea.vmem %s1, 112
  %90 = vst [vmem:[%s89] sm:$0x1f] %v88
  %s91 = scalar_lea.vmem %s0, 120
  %v92 = vld [vmem:[%s91] sm:$0x1f]
  %s93 = scalar_lea.vmem %s1, 120
  %94 = vst [vmem:[%s93] sm:$0x1f] %v92
  %s95 = scalar_lea.vmem %s0, 136
  %v96 = vld [vmem:[%s95] sm:$0x1f]
  %s97 = scalar_lea.vmem %s1, 5
  %98 = vst [vmem:[%s97] sm:$0x7] %v96
  %s99 = scalar_lea.vmem %s1, 133
  %100 = vst [vmem:[%s99] sm:$0x18] %v96
  %s101 = scalar_lea.vmem %s0, 144
  %v102 = vld [vmem:[%s101] sm:$0x1f]
  %s103 = scalar_lea.vmem %s1, 13
  %104 = vst [vmem:[%s103] sm:$0x7] %v102
  %s105 = scalar_lea.vmem %s1, 141
  %106 = vst [vmem:[%s105] sm:$0x18] %v102
  %s107 = scalar_lea.vmem %s0, 152
  %v108 = vld [vmem:[%s107] sm:$0x1f]
  %s109 = scalar_lea.vmem %s1, 21
  %110 = vst [vmem:[%s109] sm:$0x7] %v108
  %s111 = scalar_lea.vmem %s1, 149
  %112 = vst [vmem:[%s111] sm:$0x18] %v108
  %s113 = scalar_lea.vmem %s0, 160
  %v114 = vld [vmem:[%s113] sm:$0x1f]
  %s115 = scalar_lea.vmem %s1, 29
  %116 = vst [vmem:[%s115] sm:$0x7] %v114
  %s117 = scalar_lea.vmem %s1, 157
  %118 = vst [vmem:[%s117] sm:$0x18] %v114
  %s119 = scalar_lea.vmem %s0, 168
  %v120 = vld [vmem:[%s119] sm:$0x1f]
  %s121 = scalar_lea.vmem %s1, 37
  %122 = vst [vmem:[%s121] sm:$0x7] %v120
  %s123 = scalar_lea.vmem %s1, 165
  %124 = vst [vmem:[%s123] sm:$0x18] %v120
  %s125 = scalar_lea.vmem %s0, 176
  %v126 = vld [vmem:[%s125] sm:$0x1f]
  %s127 = scalar_lea.vmem %s1, 45
  %128 = vst [vmem:[%s127] sm:$0x7] %v126
  %s129 = scalar_lea.vmem %s1, 173
  %130 = vst [vmem:[%s129] sm:$0x18] %v126
  %s131 = scalar_lea.vmem %s0, 184
  %v132 = vld [vmem:[%s131] sm:$0x1f]
  %s133 = scalar_lea.vmem %s1, 53
  %134 = vst [vmem:[%s133] sm:$0x7] %v132
  %s135 = scalar_lea.vmem %s1, 181
  %136 = vst [vmem:[%s135] sm:$0x18] %v132
  %s137 = scalar_lea.vmem %s0, 192
  %v138 = vld [vmem:[%s137] sm:$0x1f]
  %s139 = scalar_lea.vmem %s1, 61
  %140 = vst [vmem:[%s139] sm:$0x7] %v138
  %s141 = scalar_lea.vmem %s1, 189
  %142 = vst [vmem:[%s141] sm:$0x18] %v138
  %s143 = scalar_lea.vmem %s0, 200
  %v144 = vld [vmem:[%s143] sm:$0x1f]
  %s145 = scalar_lea.vmem %s1, 69
  %146 = vst [vmem:[%s145] sm:$0x7] %v144
  %s147 = scalar_lea.vmem %s1, 197
  %148 = vst [vmem:[%s147] sm:$0x18] %v144
  %s149 = scalar_lea.vmem %s0, 208
  %v150 = vld [vmem:[%s149] sm:$0x1f]
  %s151 = scalar_lea.vmem %s1, 77
  %152 = vst [vmem:[%s151] sm:$0x7] %v150
  %s153 = scalar_lea.vmem %s1, 205
  %154 = vst [vmem:[%s153] sm:$0x18] %v150
  %s155 = scalar_lea.vmem %s0, 216
  %v156 = vld [vmem:[%s155] sm:$0x1f]
  %s157 = scalar_lea.vmem %s1, 85
  %158 = vst [vmem:[%s157] sm:$0x7] %v156
  %s159 = scalar_lea.vmem %s1, 213
  %160 = vst [vmem:[%s159] sm:$0x18] %v156
  %s161 = scalar_lea.vmem %s0, 224
  %v162 = vld [vmem:[%s161] sm:$0x1f]
  %s163 = scalar_lea.vmem %s1, 93
  %164 = vst [vmem:[%s163] sm:$0x7] %v162
  %s165 = scalar_lea.vmem %s1, 221
  %166 = vst [vmem:[%s165] sm:$0x18] %v162
  %s167 = scalar_lea.vmem %s0, 232
  %v168 = vld [vmem:[%s167] sm:$0x1f]
  %s169 = scalar_lea.vmem %s1, 101
  %170 = vst [vmem:[%s169] sm:$0x7] %v168
  %s171 = scalar_lea.vmem %s1, 229
  %172 = vst [vmem:[%s171] sm:$0x18] %v168
  %s173 = scalar_lea.vmem %s0, 240
  %v174 = vld [vmem:[%s173] sm:$0x1f]
  %s175 = scalar_lea.vmem %s1, 109
  %176 = vst [vmem:[%s175] sm:$0x7] %v174
  %s177 = scalar_lea.vmem %s1, 237
  %178 = vst [vmem:[%s177] sm:$0x18] %v174
  %s179 = scalar_lea.vmem %s0, 248
  %v180 = vld [vmem:[%s179] sm:$0x1f]
  %s181 = scalar_lea.vmem %s1, 117
  %182 = vst [vmem:[%s181] sm:$0x7] %v180
  %s183 = scalar_lea.vmem %s1, 245
  %184 = vst [vmem:[%s183] sm:$0x18] %v180
  %s185 = scalar_lea.vmem %s0, 256
  %v186 = vld [vmem:[%s185] sm:$0x1f]
  %s187 = scalar_lea.vmem %s1, 125
  %188 = vst [vmem:[%s187] sm:$0x7] %v186
  %s189 = scalar_lea.vmem %s1, 253
  %190 = vst [vmem:[%s189] sm:$0x18] %v186
  %s191 = scalar_lea.vmem %s0, 272
  %v192 = vld [vmem:[%s191] sm:$0x1f]
  %s193 = scalar_lea.vmem %s1, 138
  %194 = vst [vmem:[%s193] sm:$0x1f] %v192
  %s195 = scalar_lea.vmem %s0, 280
  %v196 = vld [vmem:[%s195] sm:$0x1f]
  %s197 = scalar_lea.vmem %s1, 146
  %198 = vst [vmem:[%s197] sm:$0x1f] %v196
  %s199 = scalar_lea.vmem %s0, 288
  %v200 = vld [vmem:[%s199] sm:$0x1f]
  %s201 = scalar_lea.vmem %s1, 154
  %202 = vst [vmem:[%s201] sm:$0x1f] %v200
  %s203 = scalar_lea.vmem %s0, 296
  %v204 = vld [vmem:[%s203] sm:$0x1f]
  %s205 = scalar_lea.vmem %s1, 162
  %206 = vst [vmem:[%s205] sm:$0x1f] %v204
  %s207 = scalar_lea.vmem %s0, 304
  %v208 = vld [vmem:[%s207] sm:$0x1f]
  %s209 = scalar_lea.vmem %s1, 170
  %210 = vst [vmem:[%s209] sm:$0x1f] %v208
  %s211 = scalar_lea.vmem %s0, 312
  %v212 = vld [vmem:[%s211] sm:$0x1f]
  %s213 = scalar_lea.vmem %s1, 178
  %214 = vst [vmem:[%s213] sm:$0x1f] %v212
  %s215 = scalar_lea.vmem %s0, 320
  %v216 = vld [vmem:[%s215] sm:$0x1f]
  %s217 = scalar_lea.vmem %s1, 186
  %218 = vst [vmem:[%s217] sm:$0x1f] %v216
  %s219 = scalar_lea.vmem %s0, 328
  %v220 = vld [vmem:[%s219] sm:$0x1f]
  %s221 = scalar_lea.vmem %s1, 194
  %222 = vst [vmem:[%s221] sm:$0x1f] %v220
  %s223 = scalar_lea.vmem %s0, 336
  %v224 = vld [vmem:[%s223] sm:$0x1f]
  %s225 = scalar_lea.vmem %s1, 202
  %226 = vst [vmem:[%s225] sm:$0x1f] %v224
  %s227 = scalar_lea.vmem %s0, 344
  %v228 = vld [vmem:[%s227] sm:$0x1f]
  %s229 = scalar_lea.vmem %s1, 210
  %230 = vst [vmem:[%s229] sm:$0x1f] %v228
  %s231 = scalar_lea.vmem %s0, 352
  %v232 = vld [vmem:[%s231] sm:$0x1f]
  %s233 = scalar_lea.vmem %s1, 218
  %234 = vst [vmem:[%s233] sm:$0x1f] %v232
  %s235 = scalar_lea.vmem %s0, 360
  %v236 = vld [vmem:[%s235] sm:$0x1f]
  %s237 = scalar_lea.vmem %s1, 226
  %238 = vst [vmem:[%s237] sm:$0x1f] %v236
  %s239 = scalar_lea.vmem %s0, 368
  %v240 = vld [vmem:[%s239] sm:$0x1f]
  %s241 = scalar_lea.vmem %s1, 234
  %242 = vst [vmem:[%s241] sm:$0x1f] %v240
  %s243 = scalar_lea.vmem %s0, 376
  %v244 = vld [vmem:[%s243] sm:$0x1f]
  %s245 = scalar_lea.vmem %s1, 242
  %246 = vst [vmem:[%s245] sm:$0x1f] %v244
  %s247 = scalar_lea.vmem %s0, 384
  %v248 = vld [vmem:[%s247] sm:$0x1f]
  %s249 = scalar_lea.vmem %s1, 250
  %250 = vst [vmem:[%s249] sm:$0x1f] %v248
  %s251 = scalar_lea.vmem %s0, 392
  %v252 = vld [vmem:[%s251] sm:$0x1f]
  %s253 = scalar_lea.vmem %s1, 258
  %254 = vst [vmem:[%s253] sm:$0x1f] %v252
  %s255 = scalar_lea.vmem %s0, 408
  %v256 = vld [vmem:[%s255] sm:$0x1f]
  %s257 = scalar_lea.vmem %s1, 143
  %258 = vst [vmem:[%s257] ss:$129 sm:$0x3] %v256
  %s259 = scalar_lea.vmem %s1, 271
  %260 = vst [vmem:[%s259] sm:$0x1c] %v256
  %s261 = scalar_lea.vmem %s0, 416
  %v262 = vld [vmem:[%s261] sm:$0x1f]
  %s263 = scalar_lea.vmem %s1, 151
  %264 = vst [vmem:[%s263] ss:$129 sm:$0x3] %v262
  %s265 = scalar_lea.vmem %s1, 279
  %266 = vst [vmem:[%s265] sm:$0x1c] %v262
  %s267 = scalar_lea.vmem %s0, 424
  %v268 = vld [vmem:[%s267] sm:$0x1f]
  %s269 = scalar_lea.vmem %s1, 159
  %270 = vst [vmem:[%s269] ss:$129 sm:$0x3] %v268
  %s271 = scalar_lea.vmem %s1, 287
  %272 = vst [vmem:[%s271] sm:$0x1c] %v268
  %s273 = scalar_lea.vmem %s0, 432
  %v274 = vld [vmem:[%s273] sm:$0x1f]
  %s275 = scalar_lea.vmem %s1, 167
  %276 = vst [vmem:[%s275] ss:$129 sm:$0x3] %v274
  %s277 = scalar_lea.vmem %s1, 295
  %278 = vst [vmem:[%s277] sm:$0x1c] %v274
  %s279 = scalar_lea.vmem %s0, 440
  %v280 = vld [vmem:[%s279] sm:$0x1f]
  %s281 = scalar_lea.vmem %s1, 175
  %282 = vst [vmem:[%s281] ss:$129 sm:$0x3] %v280
  %s283 = scalar_lea.vmem %s1, 303
  %284 = vst [vmem:[%s283] sm:$0x1c] %v280
  %s285 = scalar_lea.vmem %s0, 448
  %v286 = vld [vmem:[%s285] sm:$0x1f]
  %s287 = scalar_lea.vmem %s1, 183
  %288 = vst [vmem:[%s287] ss:$129 sm:$0x3] %v286
  %s289 = scalar_lea.vmem %s1, 311
  %290 = vst [vmem:[%s289] sm:$0x1c] %v286
  %s291 = scalar_lea.vmem %s0, 456
  %v292 = vld [vmem:[%s291] sm:$0x1f]
  %s293 = scalar_lea.vmem %s1, 191
  %294 = vst [vmem:[%s293] ss:$129 sm:$0x3] %v292
  %s295 = scalar_lea.vmem %s1, 319
  %296 = vst [vmem:[%s295] sm:$0x1c] %v292
  %s297 = scalar_lea.vmem %s0, 464
  %v298 = vld [vmem:[%s297] sm:$0x1f]
  %s299 = scalar_lea.vmem %s1, 199
  %300 = vst [vmem:[%s299] ss:$129 sm:$0x3] %v298
  %s301 = scalar_lea.vmem %s1, 327
  %302 = vst [vmem:[%s301] sm:$0x1c] %v298
  %s303 = scalar_lea.vmem %s0, 472
  %v304 = vld [vmem:[%s303] sm:$0x1f]
  %s305 = scalar_lea.vmem %s1, 207
  %306 = vst [vmem:[%s305] ss:$129 sm:$0x3] %v304
  %s307 = scalar_lea.vmem %s1, 335
  %308 = vst [vmem:[%s307] sm:$0x1c] %v304
  %s309 = scalar_lea.vmem %s0, 480
  %v310 = vld [vmem:[%s309] sm:$0x1f]
  %s311 = scalar_lea.vmem %s1, 215
  %312 = vst [vmem:[%s311] ss:$129 sm:$0x3] %v310
  %s313 = scalar_lea.vmem %s1, 343
  %314 = vst [vmem:[%s313] sm:$0x1c] %v310
  %s315 = scalar_lea.vmem %s0, 488
  %v316 = vld [vmem:[%s315] sm:$0x1f]
  %s317 = scalar_lea.vmem %s1, 223
  %318 = vst [vmem:[%s317] ss:$129 sm:$0x3] %v316
  %s319 = scalar_lea.vmem %s1, 351
  %320 = vst [vmem:[%s319] sm:$0x1c] %v316
  %s321 = scalar_lea.vmem %s0, 496
  %v322 = vld [vmem:[%s321] sm:$0x1f]
  %s323 = scalar_lea.vmem %s1, 231
  %324 = vst [vmem:[%s323] ss:$129 sm:$0x3] %v322
  %s325 = scalar_lea.vmem %s1, 359
  %326 = vst [vmem:[%s325] sm:$0x1c] %v322
  %s327 = scalar_lea.vmem %s0, 504
  %v328 = vld [vmem:[%s327] sm:$0x1f]
  %s329 = scalar_lea.vmem %s1, 239
  %330 = vst [vmem:[%s329] ss:$129 sm:$0x3] %v328
  %s331 = scalar_lea.vmem %s1, 367
  %332 = vst [vmem:[%s331] sm:$0x1c] %v328
  %s333 = scalar_lea.vmem %s0, 512
  %v334 = vld [vmem:[%s333] sm:$0x1f]
  %s335 = scalar_lea.vmem %s1, 247
  %336 = vst [vmem:[%s335] ss:$129 sm:$0x3] %v334
  %s337 = scalar_lea.vmem %s1, 375
  %338 = vst [vmem:[%s337] sm:$0x1c] %v334
  %s339 = scalar_lea.vmem %s0, 520
  %v340 = vld [vmem:[%s339] sm:$0x1f]
  %s341 = scalar_lea.vmem %s1, 255
  %342 = vst [vmem:[%s341] ss:$129 sm:$0x3] %v340
  %s343 = scalar_lea.vmem %s1, 383
  %344 = vst [vmem:[%s343] sm:$0x1c] %v340
  %s345 = scalar_lea.vmem %s0, 528
  %v346 = vld [vmem:[%s345] sm:$0x1f]
  %s347 = scalar_lea.vmem %s1, 263
  %348 = vst [vmem:[%s347] ss:$129 sm:$0x3] %v346
  %s349 = scalar_lea.vmem %s1, 391
  %350 = vst [vmem:[%s349] sm:$0x1c] %v346
  %s351 = scalar_lea.vmem %s0, 544
  %v352 = vld [vmem:[%s351] sm:$0x1f]
  %s353 = scalar_lea.vmem %s1, 276
  %354 = vst [vmem:[%s353] sm:$0xf] %v352
  %s355 = scalar_lea.vmem %s1, 404
  %356 = vst [vmem:[%s355] sm:$0x10] %v352
  %s357 = scalar_lea.vmem %s0, 552
  %v358 = vld [vmem:[%s357] sm:$0x1f]
  %s359 = scalar_lea.vmem %s1, 284
  %360 = vst [vmem:[%s359] sm:$0xf] %v358
  %s361 = scalar_lea.vmem %s1, 412
  %362 = vst [vmem:[%s361] sm:$0x10] %v358
  %s363 = scalar_lea.vmem %s0, 560
  %v364 = vld [vmem:[%s363] sm:$0x1f]
  %s365 = scalar_lea.vmem %s1, 292
  %366 = vst [vmem:[%s365] sm:$0xf] %v364
  %s367 = scalar_lea.vmem %s1, 420
  %368 = vst [vmem:[%s367] sm:$0x10] %v364
  %s369 = scalar_lea.vmem %s0, 568
  %v370 = vld [vmem:[%s369] sm:$0x1f]
  %s371 = scalar_lea.vmem %s1, 300
  %372 = vst [vmem:[%s371] sm:$0xf] %v370
  %s373 = scalar_lea.vmem %s1, 428
  %374 = vst [vmem:[%s373] sm:$0x10] %v370
  %s375 = scalar_lea.vmem %s0, 576
  %v376 = vld [vmem:[%s375] sm:$0x1f]
  %s377 = scalar_lea.vmem %s1, 308
  %378 = vst [vmem:[%s377] sm:$0xf] %v376
  %s379 = scalar_lea.vmem %s1, 436
  %380 = vst [vmem:[%s379] sm:$0x10] %v376
  %s381 = scalar_lea.vmem %s0, 584
  %v382 = vld [vmem:[%s381] sm:$0x1f]
  %s383 = scalar_lea.vmem %s1, 316
  %384 = vst [vmem:[%s383] sm:$0xf] %v382
  %s385 = scalar_lea.vmem %s1, 444
  %386 = vst [vmem:[%s385] sm:$0x10] %v382
  %s387 = scalar_lea.vmem %s0, 592
  %v388 = vld [vmem:[%s387] sm:$0x1f]
  %s389 = scalar_lea.vmem %s1, 324
  %390 = vst [vmem:[%s389] sm:$0xf] %v388
  %s391 = scalar_lea.vmem %s1, 452
  %392 = vst [vmem:[%s391] sm:$0x10] %v388
  %s393 = scalar_lea.vmem %s0, 600
  %v394 = vld [vmem:[%s393] sm:$0x1f]
  %s395 = scalar_lea.vmem %s1, 332
  %396 = vst [vmem:[%s395] sm:$0xf] %v394
  %s397 = scalar_lea.vmem %s1, 460
  %398 = vst [vmem:[%s397] sm:$0x10] %v394
  %s399 = scalar_lea.vmem %s0, 608
  %v400 = vld [vmem:[%s399] sm:$0x1f]
  %s401 = scalar_lea.vmem %s1, 340
  %402 = vst [vmem:[%s401] sm:$0xf] %v400
  %s403 = scalar_lea.vmem %s1, 468
  %404 = vst [vmem:[%s403] sm:$0x10] %v400
  %s405 = scalar_lea.vmem %s0, 616
  %v406 = vld [vmem:[%s405] sm:$0x1f]
  %s407 = scalar_lea.vmem %s1, 348
  %408 = vst [vmem:[%s407] sm:$0xf] %v406
  %s409 = scalar_lea.vmem %s1, 476
  %410 = vst [vmem:[%s409] sm:$0x10] %v406
  %s411 = scalar_lea.vmem %s0, 624
  %v412 = vld [vmem:[%s411] sm:$0x1f]
  %s413 = scalar_lea.vmem %s1, 356
  %414 = vst [vmem:[%s413] sm:$0xf] %v412
  %s415 = scalar_lea.vmem %s1, 484
  %416 = vst [vmem:[%s415] sm:$0x10] %v412
  %s417 = scalar_lea.vmem %s0, 632
  %v418 = vld [vmem:[%s417] sm:$0x1f]
  %s419 = scalar_lea.vmem %s1, 364
  %420 = vst [vmem:[%s419] sm:$0xf] %v418
  %s421 = scalar_lea.vmem %s1, 492
  %422 = vst [vmem:[%s421] sm:$0x10] %v418
  %s423 = scalar_lea.vmem %s0, 640
  %v424 = vld [vmem:[%s423] sm:$0x1f]
  %s425 = scalar_lea.vmem %s1, 372
  %426 = vst [vmem:[%s425] sm:$0xf] %v424
  %s427 = scalar_lea.vmem %s1, 500
  %428 = vst [vmem:[%s427] sm:$0x10] %v424
  %s429 = scalar_lea.vmem %s0, 648
  %v430 = vld [vmem:[%s429] sm:$0x1f]
  %s431 = scalar_lea.vmem %s1, 380
  %432 = vst [vmem:[%s431] sm:$0xf] %v430
  %s433 = scalar_lea.vmem %s1, 508
  %434 = vst [vmem:[%s433] sm:$0x10] %v430
  %s435 = scalar_lea.vmem %s0, 656
  %v436 = vld [vmem:[%s435] sm:$0x1f]
  %s437 = scalar_lea.vmem %s1, 388
  %438 = vst [vmem:[%s437] sm:$0xf] %v436
  %s439 = scalar_lea.vmem %s1, 516
  %440 = vst [vmem:[%s439] sm:$0x10] %v436
  %s441 = scalar_lea.vmem %s0, 664
  %v442 = vld [vmem:[%s441] sm:$0x1f]
  %s443 = scalar_lea.vmem %s1, 396
  %444 = vst [vmem:[%s443] sm:$0xf] %v442
  %s445 = scalar_lea.vmem %s1, 524
  %446 = vst [vmem:[%s445] sm:$0x10] %v442

// kernel: depthwise_conv2d_nchw.1
$region0: #{depthwise_conv2d_nchw.1}
  #allocation0 [shape = 'u32[]', space=smem, size = 0x4, offset = 0x4, fixed_abs, tag = 'smem constant byte address 0x4 - core index']
  #allocation1 [shape = 'u32[144,128]{1,0:T(1,128)}', space=vmem, size = 0x12000, scoped, tag = 'internal scratch']
  %s0 = inlined_call_operand.vmem [shape: f32[11,12,2304], index: 0, kind: input, shape index: {}]
  %s1 = inlined_call_operand.vmem [shape: f32[25,2304], index: 1, kind: input, shape index: {}]
  %s2 = inlined_call_operand.vmem [shape: f32[7,8,2304], index: 2, kind: output, shape index: {}]
  %s3 = sld [smem:[#allocation0]]
  $region106: #{depthwise_conv2d_nchw.1} parent=0
    _
  %s5 = ssub.s32 1, %s3
  %s6 = scalar_select 0, %s5, %s3
  $region1: #{depthwise_conv2d_nchw.1} parent=0
    #allocation2 [shape = 'u8[360448]{0}', space=vmem, size = 0x58000, scoped, tag = 'input window, operand 0']
    #allocation3 [shape = 'u8[65536]{0}', space=vmem, size = 0x10000, scoped, tag = 'input window, operand 1']
    #allocation4 [shape = 'u8[114688]{0}', space=vmem, size = 0x1c000, scoped, tag = 'output window, operand 0']
    loop: start=0, step=1, limit=11
    $region2: #{depthwise_conv2d_nchw.1} parent=1 // loop_pre_header
      _
    $region3: #{depthwise_conv2d_nchw.1} parent=1 // loop_header
      %s8 = sphi 0, %s12
      %p9 = scmp.ge.s32.totalorder %s8, 11
      %s18 = sphi 0, %s20
      %s21 = sphi 0, %s18
      %s22 = sphi 0, %s21
      %s38 = sphi 0, %s22
      %s44 = sphi 0, %s46
      %s47 = sphi 0, %s44
      %s48 = sphi 0, %s47
      %s64 = sphi 0, %s48
      %s70 = sphi 0, %s72
      %s73 = sphi 0, %s70
      %s74 = sphi 0, %s73
      %s90 = sphi 0, %s74
    $region4: #{depthwise_conv2d_nchw.1} parent=1 // loop_header_branch
      %11 = sbr.rel (%p9) target = $region8
    $region5: #{depthwise_conv2d_nchw.1} parent=1 // loop_body
      %s13 = ssub.s32 %s8, 1
      %s14 = ssub.s32 %s8, 2
      %s15 = sadd.s32 %s8, 1
      %s16 = ssub.s32 %s8, %s15
      %p17 = scmp.eq.s32.totalorder %s16, 0
      %s19 = sadd.s32 %s18, 1
      %s20 = scalar_select %p17, %s18, %s19
      %p23 = pneg %p17
      %p24 = scmp.eq.s32.totalorder %s8, 8
      %p25 = por %p23, %p24
      %p26 = scmp.ne.s32.totalorder %s18, %s21
      %p27 = scmp.eq.s32.totalorder %s8, 0
      %p28 = por %p26, %p27
      %p29 = scmp.ne.s32.totalorder %s18, %s21
      %p30 = scmp.eq.s32.totalorder %s13, 8
      %p31 = por %p29, %p30
      %p32 = scmp.ne.s32.totalorder %s21, %s22
      %p33 = scmp.eq.s32.totalorder %s13, 0
      %p34 = por %p32, %p33
      %p35 = scmp.ne.s32.totalorder %s21, %s22
      %p36 = scmp.eq.s32.totalorder %s14, 8
      %p37 = por %p35, %p36
      %p39 = scmp.ne.s32.totalorder %s22, %s38
      %p40 = scmp.eq.s32.totalorder %s14, 0
      %p41 = por %p39, %p40
      %s42 = ssub.s32 %s8, %s15
      %p43 = scmp.eq.s32.totalorder %s42, 0
      %s45 = sadd.s32 %s44, 1
      %s46 = scalar_select %p43, %s44, %s45
      %p49 = pneg %p43
      %p50 = scmp.eq.s32.totalorder %s8, 8
      %p51 = por %p49, %p50
      %p52 = scmp.ne.s32.totalorder %s44, %s47
      %p53 = scmp.eq.s32.totalorder %s8, 0
      %p54 = por %p52, %p53
      %p55 = scmp.ne.s32.totalorder %s44, %s47
      %p56 = scmp.eq.s32.totalorder %s13, 8
      %p57 = por %p55, %p56
      %p58 = scmp.ne.s32.totalorder %s47, %s48
      %p59 = scmp.eq.s32.totalorder %s13, 0
      %p60 = por %p58, %p59
      %p61 = scmp.ne.s32.totalorder %s47, %s48
      %p62 = scmp.eq.s32.totalorder %s14, 8
      %p63 = por %p61, %p62
      %p65 = scmp.ne.s32.totalorder %s48, %s64
      %p66 = scmp.eq.s32.totalorder %s14, 0
      %p67 = por %p65, %p66
      %s68 = ssub.s32 %s8, %s15
      %p69 = scmp.eq.s32.totalorder %s68, 0
      %s71 = sadd.s32 %s70, 1
      %s72 = scalar_select %p69, %s70, %s71
      %p75 = pneg %p69
      %p76 = scmp.eq.s32.totalorder %s8, 8
      %p77 = por %p75, %p76
      %p78 = scmp.ne.s32.totalorder %s70, %s73
      %p79 = scmp.eq.s32.totalorder %s8, 0
      %p80 = por %p78, %p79
      %p81 = scmp.ne.s32.totalorder %s70, %s73
      %p82 = scmp.eq.s32.totalorder %s13, 8
      %p83 = por %p81, %p82
      %p84 = scmp.ne.s32.totalorder %s73, %s74
      %p85 = scmp.eq.s32.totalorder %s13, 0
      %p86 = por %p84, %p85
      %p87 = scmp.ne.s32.totalorder %s73, %s74
      %p88 = scmp.eq.s32.totalorder %s14, 8
      %p89 = por %p87, %p88
      %p91 = scmp.ne.s32.totalorder %s74, %s90
      %p92 = scmp.eq.s32.totalorder %s14, 0
      %p93 = por %p91, %p92
      %p94 = scmp.le.s32.totalorder 1, %s8
      %p95 = scmp.lt.s32.totalorder %s8, 10
      %p96 = pnand %p94, %p95
      %p97 = pneg %p96
      // Predicated region
      $region9: #{depthwise_conv2d_nchw.1} parent=5 // pred_check
        _
      $region10: #{depthwise_conv2d_nchw.1} parent=5 // pred_check_branch
        %99 = sbr.rel (%p96) target = $region12
      $region11: #{depthwise_conv2d_nchw.1} parent=5 // pred_region
        %s100 = ssub.s32 %s8, 1
      $region12: #{depthwise_conv2d_nchw.1} parent=5 // pred_fallthru
        _
      %p101 = scmp.lt.s32.totalorder %s8, 9
      // Predicated region
      $region13: #{depthwise_conv2d_nchw.1} parent=5 // pred_check
        %p102 = pneg %p101
      $region14: #{depthwise_conv2d_nchw.1} parent=5 // pred_check_branch
        %104 = sbr.rel (%p102) target = $region16
      $region15: #{depthwise_conv2d_nchw.1} parent=5 // pred_region
        // Predicated region
        $region17: #{depthwise_conv2d_nchw.1} parent=15 // pred_check
          %p105 = pneg %p28
        $region18: #{depthwise_conv2d_nchw.1} parent=15 // pred_check_branch
          %107 = sbr.rel (%p105) target = $region20
        $region19: #{depthwise_conv2d_nchw.1} parent=15 // pred_region
          %s108 = sand.u32 %s18, 1
          %s109 = sand.u32 %s18, 1
          %s110 = smul.addr %s109, 352
          %s111 = scalar_lea.vmem [#allocation2], %s110
          %s112 = smul.u32 2, %s8
          %s113 = smul.addr %s112, 8
          %s114 = scalar_lea.vmem %s0, %s113
          // Predicated region
          $region21: #{depthwise_conv2d_nchw.1} parent=19 // pred_check
            _
          $region22: #{depthwise_conv2d_nchw.1} parent=19 // pred_check_branch
            %116 = sbr.rel (0) target = $region24
          $region23: #{depthwise_conv2d_nchw.1} parent=19 // pred_region
            // Predicated region
            $region25: #{depthwise_conv2d_nchw.1} parent=23 // pred_check
              _
            $region26: #{depthwise_conv2d_nchw.1} parent=23 // pred_check_branch
              %118 = sbr.rel (0) target = $region28
            $region27: #{depthwise_conv2d_nchw.1} parent=23 // pred_region
              loop: start=0, step=1, limit=1
              $region29: #{depthwise_conv2d_nchw.1} parent=27 // loop_pre_header
                _
              $region30: #{depthwise_conv2d_nchw.1} parent=27 // loop_header
                %s120 = sphi 0, %s124
                %p121 = scmp.ge.s32.totalorder %s120, 1
                %s125 = sphi %s114, %s114
                %s126 = sphi %s111, %s111
              $region31: #{depthwise_conv2d_nchw.1} parent=27 // loop_header_branch
                %123 = sbr.rel (%p121) target = $region35
              $region32: #{depthwise_conv2d_nchw.1} parent=27 // loop_body
                %v127 = vld [vmem:[%s125] sm:$0xff]
                %128 = vst [vmem:[%s126] sm:$0xff] %v127
                %v129 = vld [vmem:[%s125 + $0x8] sm:$0xff]
                %130 = vst [vmem:[%s126 + $0x8] sm:$0xff] %v129
                %v131 = vld [vmem:[%s125 + $0x90] sm:$0xff]
                %132 = vst [vmem:[%s126 + $0x10] sm:$0xff] %v131
                %v133 = vld [vmem:[%s125 + $0x98] sm:$0xff]
                %134 = vst [vmem:[%s126 + $0x18] sm:$0xff] %v133
                %v135 = vld [vmem:[%s125 + $0x120] sm:$0xff]
                %136 = vst [vmem:[%s126 + $0x20] sm:$0xff] %v135
                %v137 = vld [vmem:[%s125 + $0x128] sm:$0xff]
                %138 = vst [vmem:[%s126 + $0x28] sm:$0xff] %v137
                %v139 = vld [vmem:[%s125 + $0x1b0] sm:$0xff]
                %140 = vst [vmem:[%s126 + $0x30] sm:$0xff] %v139
                %v141 = vld [vmem:[%s125 + $0x1b8] sm:$0xff]
                %142 = vst [vmem:[%s126 + $0x38] sm:$0xff] %v141
                %v143 = vld [vmem:[%s125 + $0x240] sm:$0xff]
                %144 = vst [vmem:[%s126 + $0x40] sm:$0xff] %v143
                %v145 = vld [vmem:[%s125 + $0x248] sm:$0xff]
                %146 = vst [vmem:[%s126 + $0x48] sm:$0xff] %v145
                %v147 = vld [vmem:[%s125 + $0x2d0] sm:$0xff]
                %148 = vst [vmem:[%s126 + $0x50] sm:$0xff] %v147
                %v149 = vld [vmem:[%s125 + $0x2d8] sm:$0xff]
                %150 = vst [vmem:[%s126 + $0x58] sm:$0xff] %v149
                %v151 = vld [vmem:[%s125 + $0x360] sm:$0xff]
                %152 = vst [vmem:[%s126 + $0x60] sm:$0xff] %v151
                %v153 = vld [vmem:[%s125 + $0x368] sm:$0xff]
                %154 = vst [vmem:[%s126 + $0x68] sm:$0xff] %v153
                %v155 = vld [vmem:[%s125 + $0x3f0] sm:$0xff]
                %156 = vst [vmem:[%s126 + $0x70] sm:$0xff] %v155
                %v157 = vld [vmem:[%s125 + $0x3f8] sm:$0xff]
                %158 = vst [vmem:[%s126 + $0x78] sm:$0xff] %v157
                %v159 = vld [vmem:[%s125 + $0x480] sm:$0xff]
                %160 = vst [vmem:[%s126 + $0x80] sm:$0xff] %v159
                %v161 = vld [vmem:[%s125 + $0x488] sm:$0xff]
                %162 = vst [vmem:[%s126 + $0x88] sm:$0xff] %v161
                %v163 = vld [vmem:[%s125 + $0x510] sm:$0xff]
                %164 = vst [vmem:[%s126 + $0x90] sm:$0xff] %v163
                %v165 = vld [vmem:[%s125 + $0x518] sm:$0xff]
                %166 = vst [vmem:[%s126 + $0x98] sm:$0xff] %v165
                %v167 = vld [vmem:[%s125 + $0x5a0] sm:$0xff]
                %168 = vst [vmem:[%s126 + $0xa0] sm:$0xff] %v167
                %v169 = vld [vmem:[%s125 + $0x5a8] sm:$0xff]
                %170 = vst [vmem:[%s126 + $0xa8] sm:$0xff] %v169
                %v171 = vld [vmem:[%s125 + $0x630] sm:$0xff]
                %172 = vst [vmem:[%s126 + $0xb0] sm:$0xff] %v171
                %v173 = vld [vmem:[%s125 + $0x638] sm:$0xff]
                %174 = vst [vmem:[%s126 + $0xb8] sm:$0xff] %v173
                %v175 = vld [vmem:[%s125 + $0x6c0] sm:$0xff]
                %176 = vst [vmem:[%s126 + $0xc0] sm:$0xff] %v175
                %v177 = vld [vmem:[%s125 + $0x6c8] sm:$0xff]
                %178 = vst [vmem:[%s126 + $0xc8] sm:$0xff] %v177
                %v179 = vld [vmem:[%s125 + $0x750] sm:$0xff]
                %180 = vst [vmem:[%s126 + $0xd0] sm:$0xff] %v179
                %v181 = vld [vmem:[%s125 + $0x758] sm:$0xff]
                %182 = vst [vmem:[%s126 + $0xd8] sm:$0xff] %v181
                %v183 = vld [vmem:[%s125 + $0x7e0] sm:$0xff]
                %184 = vst [vmem:[%s126 + $0xe0] sm:$0xff] %v183
                %v185 = vld [vmem:[%s125 + $0x7e8] sm:$0xff]
                %186 = vst [vmem:[%s126 + $0xe8] sm:$0xff] %v185
                %v187 = vld [vmem:[%s125 + $0x870] sm:$0xff]
                %188 = vst [vmem:[%s126 + $0xf0] sm:$0xff] %v187
                %v189 = vld [vmem:[%s125 + $0x878] sm:$0xff]
                %190 = vst [vmem:[%s126 + $0xf8] sm:$0xff] %v189
                %v191 = vld [vmem:[%s125 + $0x900] sm:$0xff]
                %192 = vst [vmem:[%s126 + $0x100] sm:$0xff] %v191
                %v193 = vld [vmem:[%s125 + $0x908] sm:$0xff]
                %194 = vst [vmem:[%s126 + $0x108] sm:$0xff] %v193
                %v195 = vld [vmem:[%s125 + $0x990] sm:$0xff]
                %196 = vst [vmem:[%s126 + $0x110] sm:$0xff] %v195
                %v197 = vld [vmem:[%s125 + $0x998] sm:$0xff]
                %198 = vst [vmem:[%s126 + $0x118] sm:$0xff] %v197
                %v199 = vld [vmem:[%s125 + $0xa20] sm:$0xff]
                %200 = vst [vmem:[%s126 + $0x120] sm:$0xff] %v199
                %v201 = vld [vmem:[%s125 + $0xa28] sm:$0xff]
                %202 = vst [vmem:[%s126 + $0x128] sm:$0xff] %v201
                %v203 = vld [vmem:[%s125 + $0xab0] sm:$0xff]
                %204 = vst [vmem:[%s126 + $0x130] sm:$0xff] %v203
                %v205 = vld [vmem:[%s125 + $0xab8] sm:$0xff]
                %206 = vst [vmem:[%s126 + $0x138] sm:$0xff] %v205
                %v207 = vld [vmem:[%s125 + $0xb40] sm:$0xff]
                %208 = vst [vmem:[%s126 + $0x140] sm:$0xff] %v207
                %v209 = vld [vmem:[%s125 + $0xb48] sm:$0xff]
                %210 = vst [vmem:[%s126 + $0x148] sm:$0xff] %v209
                %v211 = vld [vmem:[%s125 + $0xbd0] sm:$0xff]
                %212 = vst [vmem:[%s126 + $0x150] sm:$0xff] %v211
                %v213 = vld [vmem:[%s125 + $0xbd8] sm:$0xff]
                %214 = vst [vmem:[%s126 + $0x158] sm:$0xff] %v213
              $region33: #{depthwise_conv2d_nchw.1} parent=27 // loop_footer
                %s124 = sadd.s32 1, %s120
              $region34: #{depthwise_conv2d_nchw.1} parent=27 // loop_footer_branch
                %119 = sbr.rel target = $region30
              $region35: #{depthwise_conv2d_nchw.1} parent=27 // loop_exit
                _
            $region28: #{depthwise_conv2d_nchw.1} parent=23 // pred_fallthru
              _
            // Predicated region
            $region36: #{depthwise_conv2d_nchw.1} parent=23 // pred_check
              _
            $region37: #{depthwise_conv2d_nchw.1} parent=23 // pred_check_branch
              %216 = sbr.rel target = $region39
            $region38: #{depthwise_conv2d_nchw.1} parent=23 // pred_region
              _
            $region39: #{depthwise_conv2d_nchw.1} parent=23 // pred_fallthru
              _
          $region24: #{depthwise_conv2d_nchw.1} parent=19 // pred_fallthru
            _
          %217 = vnop
        $region20: #{depthwise_conv2d_nchw.1} parent=15 // pred_fallthru
          _
        // Predicated region
        $region40: #{depthwise_conv2d_nchw.1} parent=15 // pred_check
          %p218 = pneg %p54
        $region41: #{depthwise_conv2d_nchw.1} parent=15 // pred_check_branch
          %220 = sbr.rel (%p218) target = $region43
        $region42: #{depthwise_conv2d_nchw.1} parent=15 // pred_region
          %s221 = sand.u32 %s44, 1
          %s222 = sand.u32 %s44, 1
          %s223 = smul.addr %s222, 64
          %s224 = scalar_lea.vmem [#allocation3], %s223
          %s225 = smul.u32 2, %s8
          %s226 = smul.addr %s225, 8
          %s227 = scalar_lea.vmem %s1, %s226
          // Predicated region
          $region44: #{depthwise_conv2d_nchw.1} parent=42 // pred_check
            _
          $region45: #{depthwise_conv2d_nchw.1} parent=42 // pred_check_branch
            %229 = sbr.rel (0) target = $region47
          $region46: #{depthwise_conv2d_nchw.1} parent=42 // pred_region
            // Predicated region
            $region48: #{depthwise_conv2d_nchw.1} parent=46 // pred_check
              _
            $region49: #{depthwise_conv2d_nchw.1} parent=46 // pred_check_branch
              %231 = sbr.rel (0) target = $region51
            $region50: #{depthwise_conv2d_nchw.1} parent=46 // pred_region
              loop: start=0, step=1, limit=1
              $region52: #{depthwise_conv2d_nchw.1} parent=50 // loop_pre_header
                _
              $region53: #{depthwise_conv2d_nchw.1} parent=50 // loop_header
                %s233 = sphi 0, %s237
                %p234 = scmp.ge.s32.totalorder %s233, 1
                %s238 = sphi %s227, %s227
                %s239 = sphi %s224, %s224
              $region54: #{depthwise_conv2d_nchw.1} parent=50 // loop_header_branch
                %236 = sbr.rel (%p234) target = $region58
              $region55: #{depthwise_conv2d_nchw.1} parent=50 // loop_body
                %v240 = vld [vmem:[%s238] sm:$0xff]
                %241 = vst [vmem:[%s239] sm:$0xff] %v240
                %v242 = vld [vmem:[%s238 + $0x8] sm:$0xff]
                %243 = vst [vmem:[%s239 + $0x8] sm:$0xff] %v242
                %v244 = vld [vmem:[%s238 + $0x90] sm:$0xff]
                %245 = vst [vmem:[%s239 + $0x10] sm:$0xff] %v244
                %v246 = vld [vmem:[%s238 + $0x98] sm:$0xff]
                %247 = vst [vmem:[%s239 + $0x18] sm:$0xff] %v246
                %v248 = vld [vmem:[%s238 + $0x120] sm:$0xff]
                %249 = vst [vmem:[%s239 + $0x20] sm:$0xff] %v248
                %v250 = vld [vmem:[%s238 + $0x128] sm:$0xff]
                %251 = vst [vmem:[%s239 + $0x28] sm:$0xff] %v250
                %v252 = vld [vmem:[%s238 + $0x1b0] sm:$0xff]
                %253 = vst [vmem:[%s239 + $0x30] sm:$0xff] %v252
                %v254 = vld [vmem:[%s238 + $0x1b8] sm:$0xff]
                %255 = vst [vmem:[%s239 + $0x38] sm:$0xff] %v254
              $region56: #{depthwise_conv2d_nchw.1} parent=50 // loop_footer
                %s237 = sadd.s32 1, %s233
              $region57: #{depthwise_conv2d_nchw.1} parent=50 // loop_footer_branch
                %232 = sbr.rel target = $region53
              $region58: #{depthwise_conv2d_nchw.1} parent=50 // loop_exit
                _
            $region51: #{depthwise_conv2d_nchw.1} parent=46 // pred_fallthru
              _
            // Predicated region
            $region59: #{depthwise_conv2d_nchw.1} parent=46 // pred_check
              _
            $region60: #{depthwise_conv2d_nchw.1} parent=46 // pred_check_branch
              %257 = sbr.rel target = $region62
            $region61: #{depthwise_conv2d_nchw.1} parent=46 // pred_region
              _
            $region62: #{depthwise_conv2d_nchw.1} parent=46 // pred_fallthru
              _
          $region47: #{depthwise_conv2d_nchw.1} parent=42 // pred_fallthru
            _
          %258 = vnop
        $region43: #{depthwise_conv2d_nchw.1} parent=15 // pred_fallthru
          _
      $region16: #{depthwise_conv2d_nchw.1} parent=5 // pred_fallthru
        _
      %p259 = scmp.le.s32.totalorder 1, %s8
      %p260 = scmp.lt.s32.totalorder %s8, 10
      %p261 = pnand %p259, %p260
      %p262 = pneg %p261
      // Predicated region
      $region63: #{depthwise_conv2d_nchw.1} parent=5 // pred_check
        _
      $region64: #{depthwise_conv2d_nchw.1} parent=5 // pred_check_branch
        %264 = sbr.rel (%p261) target = $region66
      $region65: #{depthwise_conv2d_nchw.1} parent=5 // pred_region
        %s265 = ssub.s32 %s8, 1
        %s266 = sand.u32 %s21, 1
        %s267 = sand.u32 %s21, 1
        %s268 = smul.addr %s267, 352
        %s269 = scalar_lea.vmem [#allocation2], %s268
        // Predicated region
        $region67: #{depthwise_conv2d_nchw.1} parent=65 // pred_check
          %p270 = pneg %p34
        $region68: #{depthwise_conv2d_nchw.1} parent=65 // pred_check_branch
          %272 = sbr.rel (%p270) target = $region70
        $region69: #{depthwise_conv2d_nchw.1} parent=65 // pred_region
          _
        $region70: #{depthwise_conv2d_nchw.1} parent=65 // pred_fallthru
          _
        %s273 = sand.u32 %s47, 1
        %s274 = sand.u32 %s47, 1
        %s275 = smul.addr %s274, 64
        %s276 = scalar_lea.vmem [#allocation3], %s275
        // Predicated region
        $region71: #{depthwise_conv2d_nchw.1} parent=65 // pred_check
          %p277 = pneg %p60
        $region72: #{depthwise_conv2d_nchw.1} parent=65 // pred_check_branch
          %279 = sbr.rel (%p277) target = $region74
        $region73: #{depthwise_conv2d_nchw.1} parent=65 // pred_region
          _
        $region74: #{depthwise_conv2d_nchw.1} parent=65 // pred_fallthru
          _
        %s280 = sand.u32 %s21, 1
        %s281 = sand.u32 %s21, 1
        %s282 = smul.addr %s281, 352
        %s283 = scalar_lea.vmem [#allocation2], %s282
        %p284 = pneg %p34
        %p285 = pneg %p31
        %s286 = sand.u32 %s47, 1
        %s287 = sand.u32 %s47, 1
        %s288 = smul.addr %s287, 64
        %s289 = scalar_lea.vmem [#allocation3], %s288
        %p290 = pneg %p60
        %p291 = pneg %p57
        %p292 = pneg %p86
        %p293 = pneg %p83
        %s294 = sand.u32 %s73, 1
        %s295 = sand.u32 %s73, 1
        %s296 = smul.addr %s295, 112
        %s297 = scalar_lea.vmem [#allocation4], %s296
        %s298 = smul.u32 2, %s13
        %s299 = smul.u32 2, %s13
        %s300 = smul.u32 2, %s13
        %v301 = vld [vmem:[%s276] sm:$0xff]
        %v302 = vld [vmem:[%s276 + $0x8] sm:$0xff]
        %v303 = vld [vmem:[%s276 + $0x10] sm:$0xff]
        %v304 = vld [vmem:[%s276 + $0x18] sm:$0xff]
        %v305 = vld [vmem:[%s276 + $0x20] sm:$0xff]
        %v306 = vld [vmem:[%s276 + $0x28] sm:$0xff]
        %v307 = vld [vmem:[%s276 + $0x30] sm:$0x1]
        %v308 = vld [vmem:[%s276 + $0x38] sm:$0x1]
        %v309 = vld [vmem:[%s269] sm:$0xff]
        %v310 = vld [vmem:[%s269 + $0x8] sm:$0xff]
        %v311 = vld [vmem:[%s269 + $0x20] sm:$0xff]
        %v312 = vld [vmem:[%s269 + $0x28] sm:$0xff]
        %v313 = vld [vmem:[%s269 + $0x40] sm:$0xff]
        %v314 = vld [vmem:[%s269 + $0x48] sm:$0xff]
        %v315 = vld [vmem:[%s269 + $0x60] sm:$0xff]
        %v316 = vld [vmem:[%s269 + $0x68] sm:$0xff]
        %v317 = vld [vmem:[%s269 + $0x80] sm:$0xff]
        %v318 = vld [vmem:[%s269 + $0x88] sm:$0xff]
        %v319 = vld [vmem:[%s269 + $0xa0] sm:$0xff]
        %v320 = vld [vmem:[%s269 + $0xa8] sm:$0xff]
        %v321 = vld [vmem:[%s269 + $0xc0] sm:$0xff]
        %v322 = vld [vmem:[%s269 + $0xc8] sm:$0xff]
        %v323 = vld [vmem:[%s269 + $0xe0] sm:$0xff]
        %v324 = vld [vmem:[%s269 + $0xe8] sm:$0xff]
        %v325 = vld [vmem:[%s269 + $0x100] sm:$0xff]
        %v326 = vld [vmem:[%s269 + $0x108] sm:$0xff]
        %v327 = vld [vmem:[%s269 + $0x120] sm:$0xff]
        %v328 = vld [vmem:[%s269 + $0x128] sm:$0xff]
        %v329 = vld [vmem:[%s269 + $0x140] sm:$0xff]
        %v330 = vld [vmem:[%s269 + $0x148] sm:$0xff]
        %v331 = vlaneseq
        %v332 = vshrl.u32 %v331, 7
        %v333 = vsub.s32 0, %v332
        %v334 = vrot.slane %v301, %v333
        %v335 = vlaneseq
        %v336 = vshrl.u32 %v335, 7
        %v337 = vsub.s32 0, %v336
        %v338 = vrot.slane %v302, %v337
        %v339 = vmul.f32 %v309, %v334
        %v340 = vmul.f32 %v310, %v338
        %v341 = vmul.f32 %v311, %v334
        %v342 = vmul.f32 %v312, %v338
        %v343 = vmul.f32 %v313, %v334
        %v344 = vmul.f32 %v314, %v338
        %v345 = vmul.f32 %v315, %v334
        %v346 = vmul.f32 %v316, %v338
        %v347 = vmul.f32 %v317, %v334
        %v348 = vmul.f32 %v318, %v338
        %v349 = vmul.f32 %v319, %v334
        %v350 = vmul.f32 %v320, %v338
        %v351 = vmul.f32 %v321, %v334
        %v352 = vmul.f32 %v322, %v338
        %v353 = vadd.f32 %v339, 0.0
        %v354 = vadd.f32 %v340, 0.0
        %v355 = vadd.f32 %v341, 0.0
        %v356 = vadd.f32 %v342, 0.0
        %v357 = vadd.f32 %v343, 0.0
        %v358 = vadd.f32 %v344, 0.0
        %v359 = vadd.f32 %v345, 0.0
        %v360 = vadd.f32 %v346, 0.0
        %v361 = vadd.f32 %v347, 0.0
        %v362 = vadd.f32 %v348, 0.0
        %v363 = vadd.f32 %v349, 0.0
        %v364 = vadd.f32 %v350, 0.0
        %v365 = vadd.f32 %v351, 0.0
        %v366 = vadd.f32 %v352, 0.0
        %v367 = vlaneseq
        %v368 = vshrl.u32 %v367, 7
        %v369 = vsub.s32 5, %v368
        %v370 = vrot.slane %v301, %v369
        %v371 = vlaneseq
        %v372 = vshrl.u32 %v371, 7
        %v373 = vsub.s32 5, %v372
        %v374 = vrot.slane %v302, %v373
        %v375 = vmul.f32 %v311, %v370
        %v376 = vmul.f32 %v312, %v374
        %v377 = vmul.f32 %v313, %v370
        %v378 = vmul.f32 %v314, %v374
        %v379 = vmul.f32 %v315, %v370
        %v380 = vmul.f32 %v316, %v374
        %v381 = vmul.f32 %v317, %v370
        %v382 = vmul.f32 %v318, %v374
        %v383 = vmul.f32 %v319, %v370
        %v384 = vmul.f32 %v320, %v374
        %v385 = vmul.f32 %v321, %v370
        %v386 = vmul.f32 %v322, %v374
        %v387 = vmul.f32 %v323, %v370
        %v388 = vmul.f32 %v324, %v374
        %v389 = vadd.f32 %v353, %v375
        %v390 = vadd.f32 %v354, %v376
        %v391 = vadd.f32 %v355, %v377
        %v392 = vadd.f32 %v356, %v378
        %v393 = vadd.f32 %v357, %v379
        %v394 = vadd.f32 %v358, %v380
        %v395 = vadd.f32 %v359, %v381
        %v396 = vadd.f32 %v360, %v382
        %v397 = vadd.f32 %v361, %v383
        %v398 = vadd.f32 %v362, %v384
        %v399 = vadd.f32 %v363, %v385
        %v400 = vadd.f32 %v364, %v386
        %v401 = vadd.f32 %v365, %v387
        %v402 = vadd.f32 %v366, %v388
        %v403 = vlaneseq
        %v404 = vshrl.u32 %v403, 7
        %v405 = vsub.s32 2, %v404
        %v406 = vrot.slane %v303, %v405
        %v407 = vlaneseq
        %v408 = vshrl.u32 %v407, 7
        %v409 = vsub.s32 2, %v408
        %v410 = vrot.slane %v304, %v409
        %v411 = vmul.f32 %v313, %v406
        %v412 = vmul.f32 %v314, %v410
        %v413 = vmul.f32 %v315, %v406
        %v414 = vmul.f32 %v316, %v410
        %v415 = vmul.f32 %v317, %v406
        %v416 = vmul.f32 %v318, %v410
        %v417 = vmul.f32 %v319, %v406
        %v418 = vmul.f32 %v320, %v410
        %v419 = vmul.f32 %v321, %v406
        %v420 = vmul.f32 %v322, %v410
        %v421 = vmul.f32 %v323, %v406
        %v422 = vmul.f32 %v324, %v410
        %v423 = vmul.f32 %v325, %v406
        %v424 = vmul.f32 %v326, %v410
        %v425 = vadd.f32 %v389, %v411
        %v426 = vadd.f32 %v390, %v412
        %v427 = vadd.f32 %v391, %v413
        %v428 = vadd.f32 %v392, %v414
        %v429 = vadd.f32 %v393, %v415
        %v430 = vadd.f32 %v394, %v416
        %v431 = vadd.f32 %v395, %v417
        %v432 = vadd.f32 %v396, %v418
        %v433 = vadd.f32 %v397, %v419
        %v434 = vadd.f32 %v398, %v420
        %v435 = vadd.f32 %v399, %v421
        %v436 = vadd.f32 %v400, %v422
        %v437 = vadd.f32 %v401, %v423
        %v438 = vadd.f32 %v402, %v424
        %v439 = vlaneseq
        %v440 = vshrl.u32 %v439, 7
        %v441 = vsub.s32 7, %v440
        %v442 = vrot.slane %v303, %v441
        %v443 = vlaneseq
        %v444 = vshrl.u32 %v443, 7
        %v445 = vsub.s32 7, %v444
        %v446 = vrot.slane %v304, %v445
        %v447 = vmul.f32 %v315, %v442
        %v448 = vmul.f32 %v316, %v446
        %v449 = vmul.f32 %v317, %v442
        %v450 = vmul.f32 %v318, %v446
        %v451 = vmul.f32 %v319, %v442
        %v452 = vmul.f32 %v320, %v446
        %v453 = vmul.f32 %v321, %v442
        %v454 = vmul.f32 %v322, %v446
        %v455 = vmul.f32 %v323, %v442
        %v456 = vmul.f32 %v324, %v446
        %v457 = vmul.f32 %v325, %v442
        %v458 = vmul.f32 %v326, %v446
        %v459 = vmul.f32 %v327, %v442
        %v460 = vmul.f32 %v328, %v446
        %v461 = vadd.f32 %v425, %v447
        %v462 = vadd.f32 %v426, %v448
        %v463 = vadd.f32 %v427, %v449
        %v464 = vadd.f32 %v428, %v450
        %v465 = vadd.f32 %v429, %v451
        %v466 = vadd.f32 %v430, %v452
        %v467 = vadd.f32 %v431, %v453
        %v468 = vadd.f32 %v432, %v454
        %v469 = vadd.f32 %v433, %v455
        %v470 = vadd.f32 %v434, %v456
        %v471 = vadd.f32 %v435, %v457
        %v472 = vadd.f32 %v436, %v458
        %v473 = vadd.f32 %v437, %v459
        %v474 = vadd.f32 %v438, %v460
        %v475 = vlaneseq
        %v476 = vshrl.u32 %v475, 7
        %v477 = vsub.s32 4, %v476
        %v478 = vrot.slane %v305, %v477
        %v479 = vlaneseq
        %v480 = vshrl.u32 %v479, 7
        %v481 = vsub.s32 4, %v480
        %v482 = vrot.slane %v306, %v481
        %v483 = vmul.f32 %v317, %v478
        %v484 = vmul.f32 %v318, %v482
        %v485 = vmul.f32 %v319, %v478
        %v486 = vmul.f32 %v320, %v482
        %v487 = vmul.f32 %v321, %v478
        %v488 = vmul.f32 %v322, %v482
        %v489 = vmul.f32 %v323, %v478
        %v490 = vmul.f32 %v324, %v482
        %v491 = vmul.f32 %v325, %v478
        %v492 = vmul.f32 %v326, %v482
        %v493 = vmul.f32 %v327, %v478
        %v494 = vmul.f32 %v328, %v482
        %v495 = vmul.f32 %v329, %v478
        %v496 = vmul.f32 %v330, %v482
        %v497 = vadd.f32 %v461, %v483
        %v498 = vadd.f32 %v462, %v484
        %v499 = vadd.f32 %v463, %v485
        %v500 = vadd.f32 %v464, %v486
        %v501 = vadd.f32 %v465, %v487
        %v502 = vadd.f32 %v466, %v488
        %v503 = vadd.f32 %v467, %v489
        %v504 = vadd.f32 %v468, %v490
        %v505 = vadd.f32 %v469, %v491
        %v506 = vadd.f32 %v470, %v492
        %v507 = vadd.f32 %v471, %v493
        %v508 = vadd.f32 %v472, %v494
        %v509 = vadd.f32 %v473, %v495
        %v510 = vadd.f32 %v474, %v496
        %v511 = vld [vmem:[%s269] sm:$0xfe]
        %v512 = vld [vmem:[%s269 + $0x8] sm:$0xfe]
        %v513 = vld [vmem:[%s269 + $0x10] sm:$0x1]
        %v514 = vld [vmem:[%s269 + $0x18] sm:$0x1]
        %v515 = vld [vmem:[%s269 + $0x20] sm:$0xfe]
        %v516 = vld [vmem:[%s269 + $0x28] sm:$0xfe]
        %v517 = vld [vmem:[%s269 + $0x30] sm:$0x1]
        %v518 = vld [vmem:[%s269 + $0x38] sm:$0x1]
        %v519 = vld [vmem:[%s269 + $0x40] sm:$0xfe]
        %v520 = vld [vmem:[%s269 + $0x48] sm:$0xfe]
        %v521 = vld [vmem:[%s269 + $0x50] sm:$0x1]
        %v522 = vld [vmem:[%s269 + $0x58] sm:$0x1]
        %v523 = vld [vmem:[%s269 + $0x60] sm:$0xfe]
        %v524 = vld [vmem:[%s269 + $0x68] sm:$0xfe]
        %v525 = vld [vmem:[%s269 + $0x70] sm:$0x1]
        %v526 = vld [vmem:[%s269 + $0x78] sm:$0x1]
        %v527 = vld [vmem:[%s269 + $0x80] sm:$0xfe]
        %v528 = vld [vmem:[%s269 + $0x88] sm:$0xfe]
        %v529 = vld [vmem:[%s269 + $0x90] sm:$0x1]
        %v530 = vld [vmem:[%s269 + $0x98] sm:$0x1]
        %v531 = vld [vmem:[%s269 + $0xa0] sm:$0xfe]
        %v532 = vld [vmem:[%s269 + $0xa8] sm:$0xfe]
        %v533 = vld [vmem:[%s269 + $0xb0] sm:$0x1]
        %v534 = vld [vmem:[%s269 + $0xb8] sm:$0x1]
        %v535 = vld [vmem:[%s269 + $0xc0] sm:$0xfe]
        %v536 = vld [vmem:[%s269 + $0xc8] sm:$0xfe]
        %v537 = vld [vmem:[%s269 + $0xd0] sm:$0x1]
        %v538 = vld [vmem:[%s269 + $0xd8] sm:$0x1]
        %v539 = vld [vmem:[%s269 + $0xe0] sm:$0xfe]
        %v540 = vld [vmem:[%s269 + $0xe8] sm:$0xfe]
        %v541 = vld [vmem:[%s269 + $0xf0] sm:$0x1]
        %v542 = vld [vmem:[%s269 + $0xf8] sm:$0x1]
        %v543 = vld [vmem:[%s269 + $0x100] sm:$0xfe]
        %v544 = vld [vmem:[%s269 + $0x108] sm:$0xfe]
        %v545 = vld [vmem:[%s269 + $0x110] sm:$0x1]
        %v546 = vld [vmem:[%s269 + $0x118] sm:$0x1]
        %v547 = vld [vmem:[%s269 + $0x120] sm:$0xfe]
        %v548 = vld [vmem:[%s269 + $0x128] sm:$0xfe]
        %v549 = vld [vmem:[%s269 + $0x130] sm:$0x1]
        %v550 = vld [vmem:[%s269 + $0x138] sm:$0x1]
        %v551 = vld [vmem:[%s269 + $0x140] sm:$0xfe]
        %v552 = vld [vmem:[%s269 + $0x148] sm:$0xfe]
        %v553 = vld [vmem:[%s269 + $0x150] sm:$0x1]
        %v554 = vld [vmem:[%s269 + $0x158] sm:$0x1]
        %v555 = vlaneseq
        %v556 = vshrl.u32 %v555, 7
        %v557 = vsub.s32 1, %v556
        %v558 = vrot.slane %v301, %v557
        %v559 = vlaneseq
        %v560 = vshrl.u32 %v559, 7
        %v561 = vsub.s32 1, %v560
        %v562 = vrot.slane %v302, %v561
        %v563 = vmul.f32 %v511, %v558
        %v564 = vmul.f32 %v512, %v562
        %v565 = vmul.f32 %v513, %v558
        %v566 = vmul.f32 %v514, %v562
        %v567 = vmul.f32 %v515, %v558
        %v568 = vmul.f32 %v516, %v562
        %v569 = vmul.f32 %v517, %v558
        %v570 = vmul.f32 %v518, %v562
        %v571 = vmul.f32 %v519, %v558
        %v572 = vmul.f32 %v520, %v562
        %v573 = vmul.f32 %v521, %v558
        %v574 = vmul.f32 %v522, %v562
        %v575 = vmul.f32 %v523, %v558
        %v576 = vmul.f32 %v524, %v562
        %v577 = vmul.f32 %v525, %v558
        %v578 = vmul.f32 %v526, %v562
        %v579 = vmul.f32 %v527, %v558
        %v580 = vmul.f32 %v528, %v562
        %v581 = vmul.f32 %v529, %v558
        %v582 = vmul.f32 %v530, %v562
        %v583 = vmul.f32 %v531, %v558
        %v584 = vmul.f32 %v532, %v562
        %v585 = vmul.f32 %v533, %v558
        %v586 = vmul.f32 %v534, %v562
        %v587 = vmul.f32 %v535, %v558
        %v588 = vmul.f32 %v536, %v562
        %v589 = vmul.f32 %v537, %v558
        %v590 = vmul.f32 %v538, %v562
        %vm619 = vcmask 1046528
        %v620 = vrot.slane %v563, 1
        %v621 = vrot.slane %v565, 1
        %v622 = vsel %vm619, %v620, %v621
        %v623 = vrot.slane %v564, 1
        %v624 = vrot.slane %v566, 1
        %v625 = vsel %vm619, %v623, %v624
        %v626 = vrot.slane %v567, 1
        %v627 = vrot.slane %v569, 1
        %v628 = vsel %vm619, %v626, %v627
        %v629 = vrot.slane %v568, 1
        %v630 = vrot.slane %v570, 1
        %v631 = vsel %vm619, %v629, %v630
        %v632 = vrot.slane %v571, 1
        %v633 = vrot.slane %v573, 1
        %v634 = vsel %vm619, %v632, %v633
        %v635 = vrot.slane %v572, 1
        %v636 = vrot.slane %v574, 1
        %v637 = vsel %vm619, %v635, %v636
        %v638 = vrot.slane %v575, 1
        %v639 = vrot.slane %v577, 1
        %v640 = vsel %vm619, %v638, %v639
        %v641 = vrot.slane %v576, 1
        %v642 = vrot.slane %v578, 1
        %v643 = vsel %vm619, %v641, %v642
        %v644 = vrot.slane %v579, 1
        %v645 = vrot.slane %v581, 1
        %v646 = vsel %vm619, %v644, %v645
        %v647 = vrot.slane %v580, 1
        %v648 = vrot.slane %v582, 1
        %v649 = vsel %vm619, %v647, %v648
        %v650 = vrot.slane %v583, 1
        %v651 = vrot.slane %v585, 1
        %v652 = vsel %vm619, %v650, %v651
        %v653 = vrot.slane %v584, 1
        %v654 = vrot.slane %v586, 1
        %v655 = vsel %vm619, %v653, %v654
        %v656 = vrot.slane %v587, 1
        %v657 = vrot.slane %v589, 1
        %v658 = vsel %vm619, %v656, %v657
        %v659 = vrot.slane %v588, 1
        %v660 = vrot.slane %v590, 1
        %v661 = vsel %vm619, %v659, %v660
        %v676 = vadd.f32 %v497, %v622
        %v677 = vadd.f32 %v498, %v625
        %v678 = vadd.f32 %v499, %v628
        %v679 = vadd.f32 %v500, %v631
        %v680 = vadd.f32 %v501, %v634
        %v681 = vadd.f32 %v502, %v637
        %v682 = vadd.f32 %v503, %v640
        %v683 = vadd.f32 %v504, %v643
        %v684 = vadd.f32 %v505, %v646
        %v685 = vadd.f32 %v506, %v649
        %v686 = vadd.f32 %v507, %v652
        %v687 = vadd.f32 %v508, %v655
        %v688 = vadd.f32 %v509, %v658
        %v689 = vadd.f32 %v510, %v661
        %v690 = vlaneseq
        %v691 = vshrl.u32 %v690, 7
        %v692 = vsub.s32 6, %v691
        %v693 = vrot.slane %v301, %v692
        %v694 = vlaneseq
        %v695 = vshrl.u32 %v694, 7
        %v696 = vsub.s32 6, %v695
        %v697 = vrot.slane %v302, %v696
        %v698 = vmul.f32 %v515, %v693
        %v699 = vmul.f32 %v516, %v697
        %v700 = vmul.f32 %v517, %v693
        %v701 = vmul.f32 %v518, %v697
        %v702 = vmul.f32 %v519, %v693
        %v703 = vmul.f32 %v520, %v697
        %v704 = vmul.f32 %v521, %v693
        %v705 = vmul.f32 %v522, %v697
        %v706 = vmul.f32 %v523, %v693
        %v707 = vmul.f32 %v524, %v697
        %v708 = vmul.f32 %v525, %v693
        %v709 = vmul.f32 %v526, %v697
        %v710 = vmul.f32 %v527, %v693
        %v711 = vmul.f32 %v528, %v697
        %v712 = vmul.f32 %v529, %v693
        %v713 = vmul.f32 %v530, %v697
        %v714 = vmul.f32 %v531, %v693
        %v715 = vmul.f32 %v532, %v697
        %v716 = vmul.f32 %v533, %v693
        %v717 = vmul.f32 %v534, %v697
        %v718 = vmul.f32 %v535, %v693
        %v719 = vmul.f32 %v536, %v697
        %v720 = vmul.f32 %v537, %v693
        %v721 = vmul.f32 %v538, %v697
        %v722 = vmul.f32 %v539, %v693
        %v723 = vmul.f32 %v540, %v697
        %v724 = vmul.f32 %v541, %v693
        %v725 = vmul.f32 %v542, %v697
        %v754 = vrot.slane %v698, 1
        %v755 = vrot.slane %v700, 1
        %v756 = vsel %vm619, %v754, %v755
        %v757 = vrot.slane %v699, 1
        %v758 = vrot.slane %v701, 1
        %v759 = vsel %vm619, %v757, %v758
        %v760 = vrot.slane %v702, 1
        %v761 = vrot.slane %v704, 1
        %v762 = vsel %vm619, %v760, %v761
        %v763 = vrot.slane %v703, 1
        %v764 = vrot.slane %v705, 1
        %v765 = vsel %vm619, %v763, %v764
        %v766 = vrot.slane %v706, 1
        %v767 = vrot.slane %v708, 1
        %v768 = vsel %vm619, %v766, %v767
        %v769 = vrot.slane %v707, 1
        %v770 = vrot.slane %v709, 1
        %v771 = vsel %vm619, %v769, %v770
        %v772 = vrot.slane %v710, 1
        %v773 = vrot.slane %v712, 1
        %v774 = vsel %vm619, %v772, %v773
        %v775 = vrot.slane %v711, 1
        %v776 = vrot.slane %v713, 1
        %v777 = vsel %vm619, %v775, %v776
        %v778 = vrot.slane %v714, 1
        %v779 = vrot.slane %v716, 1
        %v780 = vsel %vm619, %v778, %v779
        %v781 = vrot.slane %v715, 1
        %v782 = vrot.slane %v717, 1
        %v783 = vsel %vm619, %v781, %v782
        %v784 = vrot.slane %v718, 1
        %v785 = vrot.slane %v720, 1
        %v786 = vsel %vm619, %v784, %v785
        %v787 = vrot.slane %v719, 1
        %v788 = vrot.slane %v721, 1
        %v789 = vsel %vm619, %v787, %v788
        %v790 = vrot.slane %v722, 1
        %v791 = vrot.slane %v724, 1
        %v792 = vsel %vm619, %v790, %v791
        %v793 = vrot.slane %v723, 1
        %v794 = vrot.slane %v725, 1
        %v795 = vsel %vm619, %v793, %v794
        %v810 = vadd.f32 %v676, %v756
        %v811 = vadd.f32 %v677, %v759
        %v812 = vadd.f32 %v678, %v762
        %v813 = vadd.f32 %v679, %v765
        %v814 = vadd.f32 %v680, %v768
        %v815 = vadd.f32 %v681, %v771
        %v816 = vadd.f32 %v682, %v774
        %v817 = vadd.f32 %v683, %v777
        %v818 = vadd.f32 %v684, %v780
        %v819 = vadd.f32 %v685, %v783
        %v820 = vadd.f32 %v686, %v786
        %v821 = vadd.f32 %v687, %v789
        %v822 = vadd.f32 %v688, %v792
        %v823 = vadd.f32 %v689, %v795
        %v824 = vlaneseq
        %v825 = vshrl.u32 %v824, 7
        %v826 = vsub.s32 3, %v825
        %v827 = vrot.slane %v303, %v826
        %v828 = vlaneseq
        %v829 = vshrl.u32 %v828, 7
        %v830 = vsub.s32 3, %v829
        %v831 = vrot.slane %v304, %v830
        %v832 = vmul.f32 %v519, %v827
        %v833 = vmul.f32 %v520, %v831
        %v834 = vmul.f32 %v521, %v827
        %v835 = vmul.f32 %v522, %v831
        %v836 = vmul.f32 %v523, %v827
        %v837 = vmul.f32 %v524, %v831
        %v838 = vmul.f32 %v525, %v827
        %v839 = vmul.f32 %v526, %v831
        %v840 = vmul.f32 %v527, %v827
        %v841 = vmul.f32 %v528, %v831
        %v842 = vmul.f32 %v529, %v827
        %v843 = vmul.f32 %v530, %v831
        %v844 = vmul.f32 %v531, %v827
        %v845 = vmul.f32 %v532, %v831
        %v846 = vmul.f32 %v533, %v827
        %v847 = vmul.f32 %v534, %v831
        %v848 = vmul.f32 %v535, %v827
        %v849 = vmul.f32 %v536, %v831
        %v850 = vmul.f32 %v537, %v827
        %v851 = vmul.f32 %v538, %v831
        %v852 = vmul.f32 %v539, %v827
        %v853 = vmul.f32 %v540, %v831
        %v854 = vmul.f32 %v541, %v827
        %v855 = vmul.f32 %v542, %v831
        %v856 = vmul.f32 %v543, %v827
        %v857 = vmul.f32 %v544, %v831
        %v858 = vmul.f32 %v545, %v827
        %v859 = vmul.f32 %v546, %v831
        %v888 = vrot.slane %v832, 1
        %v889 = vrot.slane %v834, 1
        %v890 = vsel %vm619, %v888, %v889
        %v891 = vrot.slane %v833, 1
        %v892 = vrot.slane %v835, 1
        %v893 = vsel %vm619, %v891, %v892
        %v894 = vrot.slane %v836, 1
        %v895 = vrot.slane %v838, 1
        %v896 = vsel %vm619, %v894, %v895
        %v897 = vrot.slane %v837, 1
        %v898 = vrot.slane %v839, 1
        %v899 = vsel %vm619, %v897, %v898
        %v900 = vrot.slane %v840, 1
        %v901 = vrot.slane %v842, 1
        %v902 = vsel %vm619, %v900, %v901
        %v903 = vrot.slane %v841, 1
        %v904 = vrot.slane %v843, 1
        %v905 = vsel %vm619, %v903, %v904
        %v906 = vrot.slane %v844, 1
        %v907 = vrot.slane %v846, 1
        %v908 = vsel %vm619, %v906, %v907
        %v909 = vrot.slane %v845, 1
        %v910 = vrot.slane %v847, 1
        %v911 = vsel %vm619, %v909, %v910
        %v912 = vrot.slane %v848, 1
        %v913 = vrot.slane %v850, 1
        %v914 = vsel %vm619, %v912, %v913
        %v915 = vrot.slane %v849, 1
        %v916 = vrot.slane %v851, 1
        %v917 = vsel %vm619, %v915, %v916
        %v918 = vrot.slane %v852, 1
        %v919 = vrot.slane %v854, 1
        %v920 = vsel %vm619, %v918, %v919
        %v921 = vrot.slane %v853, 1
        %v922 = vrot.slane %v855, 1
        %v923 = vsel %vm619, %v921, %v922
        %v924 = vrot.slane %v856, 1
        %v925 = vrot.slane %v858, 1
        %v926 = vsel %vm619, %v924, %v925
        %v927 = vrot.slane %v857, 1
        %v928 = vrot.slane %v859, 1
        %v929 = vsel %vm619, %v927, %v928
        %v944 = vadd.f32 %v810, %v890
        %v945 = vadd.f32 %v811, %v893
        %v946 = vadd.f32 %v812, %v896
        %v947 = vadd.f32 %v813, %v899
        %v948 = vadd.f32 %v814, %v902
        %v949 = vadd.f32 %v815, %v905
        %v950 = vadd.f32 %v816, %v908
        %v951 = vadd.f32 %v817, %v911
        %v952 = vadd.f32 %v818, %v914
        %v953 = vadd.f32 %v819, %v917
        %v954 = vadd.f32 %v820, %v920
        %v955 = vadd.f32 %v821, %v923
        %v956 = vadd.f32 %v822, %v926
        %v957 = vadd.f32 %v823, %v929
        %v958 = vlaneseq
        %v959 = vshrl.u32 %v958, 7
        %v960 = vsub.s32 0, %v959
        %v961 = vrot.slane %v305, %v960
        %v962 = vlaneseq
        %v963 = vshrl.u32 %v962, 7
        %v964 = vsub.s32 0, %v963
        %v965 = vrot.slane %v306, %v964
        %v966 = vmul.f32 %v523, %v961
        %v967 = vmul.f32 %v524, %v965
        %v968 = vmul.f32 %v525, %v961
        %v969 = vmul.f32 %v526, %v965
        %v970 = vmul.f32 %v527, %v961
        %v971 = vmul.f32 %v528, %v965
        %v972 = vmul.f32 %v529, %v961
        %v973 = vmul.f32 %v530, %v965
        %v974 = vmul.f32 %v531, %v961
        %v975 = vmul.f32 %v532, %v965
        %v976 = vmul.f32 %v533, %v961
        %v977 = vmul.f32 %v534, %v965
        %v978 = vmul.f32 %v535, %v961
        %v979 = vmul.f32 %v536, %v965
        %v980 = vmul.f32 %v537, %v961
        %v981 = vmul.f32 %v538, %v965
        %v982 = vmul.f32 %v539, %v961
        %v983 = vmul.f32 %v540, %v965
        %v984 = vmul.f32 %v541, %v961
        %v985 = vmul.f32 %v542, %v965
        %v986 = vmul.f32 %v543, %v961
        %v987 = vmul.f32 %v544, %v965
        %v988 = vmul.f32 %v545, %v961
        %v989 = vmul.f32 %v546, %v965
        %v990 = vmul.f32 %v547, %v961
        %v991 = vmul.f32 %v548, %v965
        %v992 = vmul.f32 %v549, %v961
        %v993 = vmul.f32 %v550, %v965
        %v1022 = vrot.slane %v966, 1
        %v1023 = vrot.slane %v968, 1
        %v1024 = vsel %vm619, %v1022, %v1023
        %v1025 = vrot.slane %v967, 1
        %v1026 = vrot.slane %v969, 1
        %v1027 = vsel %vm619, %v1025, %v1026
        %v1028 = vrot.slane %v970, 1
        %v1029 = vrot.slane %v972, 1
        %v1030 = vsel %vm619, %v1028, %v1029
        %v1031 = vrot.slane %v971, 1
        %v1032 = vrot.slane %v973, 1
        %v1033 = vsel %vm619, %v1031, %v1032
        %v1034 = vrot.slane %v974, 1
        %v1035 = vrot.slane %v976, 1
        %v1036 = vsel %vm619, %v1034, %v1035
        %v1037 = vrot.slane %v975, 1
        %v1038 = vrot.slane %v977, 1
        %v1039 = vsel %vm619, %v1037, %v1038
        %v1040 = vrot.slane %v978, 1
        %v1041 = vrot.slane %v980, 1
        %v1042 = vsel %vm619, %v1040, %v1041
        %v1043 = vrot.slane %v979, 1
        %v1044 = vrot.slane %v981, 1
        %v1045 = vsel %vm619, %v1043, %v1044
        %v1046 = vrot.slane %v982, 1
        %v1047 = vrot.slane %v984, 1
        %v1048 = vsel %vm619, %v1046, %v1047
        %v1049 = vrot.slane %v983, 1
        %v1050 = vrot.slane %v985, 1
        %v1051 = vsel %vm619, %v1049, %v1050
        %v1052 = vrot.slane %v986, 1
        %v1053 = vrot.slane %v988, 1
        %v1054 = vsel %vm619, %v1052, %v1053
        %v1055 = vrot.slane %v987, 1
        %v1056 = vrot.slane %v989, 1
        %v1057 = vsel %vm619, %v1055, %v1056
        %v1058 = vrot.slane %v990, 1
        %v1059 = vrot.slane %v992, 1
        %v1060 = vsel %vm619, %v1058, %v1059
        %v1061 = vrot.slane %v991, 1
        %v1062 = vrot.slane %v993, 1
        %v1063 = vsel %vm619, %v1061, %v1062
        %v1078 = vadd.f32 %v944, %v1024
        %v1079 = vadd.f32 %v945, %v1027
        %v1080 = vadd.f32 %v946, %v1030
        %v1081 = vadd.f32 %v947, %v1033
        %v1082 = vadd.f32 %v948, %v1036
        %v1083 = vadd.f32 %v949, %v1039
        %v1084 = vadd.f32 %v950, %v1042
        %v1085 = vadd.f32 %v951, %v1045
        %v1086 = vadd.f32 %v952, %v1048
        %v1087 = vadd.f32 %v953, %v1051
        %v1088 = vadd.f32 %v954, %v1054
        %v1089 = vadd.f32 %v955, %v1057
        %v1090 = vadd.f32 %v956, %v1060
        %v1091 = vadd.f32 %v957, %v1063
        %v1092 = vlaneseq
        %v1093 = vshrl.u32 %v1092, 7
        %v1094 = vsub.s32 5, %v1093
        %v1095 = vrot.slane %v305, %v1094
        %v1096 = vlaneseq
        %v1097 = vshrl.u32 %v1096, 7
        %v1098 = vsub.s32 5, %v1097
        %v1099 = vrot.slane %v306, %v1098
        %v1100 = vmul.f32 %v527, %v1095
        %v1101 = vmul.f32 %v528, %v1099
        %v1102 = vmul.f32 %v529, %v1095
        %v1103 = vmul.f32 %v530, %v1099
        %v1104 = vmul.f32 %v531, %v1095
        %v1105 = vmul.f32 %v532, %v1099
        %v1106 = vmul.f32 %v533, %v1095
        %v1107 = vmul.f32 %v534, %v1099
        %v1108 = vmul.f32 %v535, %v1095
        %v1109 = vmul.f32 %v536, %v1099
        %v1110 = vmul.f32 %v537, %v1095
        %v1111 = vmul.f32 %v538, %v1099
        %v1112 = vmul.f32 %v539, %v1095
        %v1113 = vmul.f32 %v540, %v1099
        %v1114 = vmul.f32 %v541, %v1095
        %v1115 = vmul.f32 %v542, %v1099
        %v1116 = vmul.f32 %v543, %v1095
        %v1117 = vmul.f32 %v544, %v1099
        %v1118 = vmul.f32 %v545, %v1095
        %v1119 = vmul.f32 %v546, %v1099
        %v1120 = vmul.f32 %v547, %v1095
        %v1121 = vmul.f32 %v548, %v1099
        %v1122 = vmul.f32 %v549, %v1095
        %v1123 = vmul.f32 %v550, %v1099
        %v1124 = vmul.f32 %v551, %v1095
        %v1125 = vmul.f32 %v552, %v1099
        %v1126 = vmul.f32 %v553, %v1095
        %v1127 = vmul.f32 %v554, %v1099
        %v1156 = vrot.slane %v1100, 1
        %v1157 = vrot.slane %v1102, 1
        %v1158 = vsel %vm619, %v1156, %v1157
        %v1159 = vrot.slane %v1101, 1
        %v1160 = vrot.slane %v1103, 1
        %v1161 = vsel %vm619, %v1159, %v1160
        %v1162 = vrot.slane %v1104, 1
        %v1163 = vrot.slane %v1106, 1
        %v1164 = vsel %vm619, %v1162, %v1163
        %v1165 = vrot.slane %v1105, 1
        %v1166 = vrot.slane %v1107, 1
        %v1167 = vsel %vm619, %v1165, %v1166
        %v1168 = vrot.slane %v1108, 1
        %v1169 = vrot.slane %v1110, 1
        %v1170 = vsel %vm619, %v1168, %v1169
        %v1171 = vrot.slane %v1109, 1
        %v1172 = vrot.slane %v1111, 1
        %v1173 = vsel %vm619, %v1171, %v1172
        %v1174 = vrot.slane %v1112, 1
        %v1175 = vrot.slane %v1114, 1
        %v1176 = vsel %vm619, %v1174, %v1175
        %v1177 = vrot.slane %v1113, 1
        %v1178 = vrot.slane %v1115, 1
        %v1179 = vsel %vm619, %v1177, %v1178
        %v1180 = vrot.slane %v1116, 1
        %v1181 = vrot.slane %v1118, 1
        %v1182 = vsel %vm619, %v1180, %v1181
        %v1183 = vrot.slane %v1117, 1
        %v1184 = vrot.slane %v1119, 1
        %v1185 = vsel %vm619, %v1183, %v1184
        %v1186 = vrot.slane %v1120, 1
        %v1187 = vrot.slane %v1122, 1
        %v1188 = vsel %vm619, %v1186, %v1187
        %v1189 = vrot.slane %v1121, 1
        %v1190 = vrot.slane %v1123, 1
        %v1191 = vsel %vm619, %v1189, %v1190
        %v1192 = vrot.slane %v1124, 1
        %v1193 = vrot.slane %v1126, 1
        %v1194 = vsel %vm619, %v1192, %v1193
        %v1195 = vrot.slane %v1125, 1
        %v1196 = vrot.slane %v1127, 1
        %v1197 = vsel %vm619, %v1195, %v1196
        %v1212 = vadd.f32 %v1078, %v1158
        %v1213 = vadd.f32 %v1079, %v1161
        %v1214 = vadd.f32 %v1080, %v1164
        %v1215 = vadd.f32 %v1081, %v1167
        %v1216 = vadd.f32 %v1082, %v1170
        %v1217 = vadd.f32 %v1083, %v1173
        %v1218 = vadd.f32 %v1084, %v1176
        %v1219 = vadd.f32 %v1085, %v1179
        %v1220 = vadd.f32 %v1086, %v1182
        %v1221 = vadd.f32 %v1087, %v1185
        %v1222 = vadd.f32 %v1088, %v1188
        %v1223 = vadd.f32 %v1089, %v1191
        %v1224 = vadd.f32 %v1090, %v1194
        %v1225 = vadd.f32 %v1091, %v1197
        %v1226 = vld [vmem:[%s269] sm:$0xfc]
        %v1227 = vld [vmem:[%s269 + $0x8] sm:$0xfc]
        %v1228 = vld [vmem:[%s269 + $0x10] sm:$0x3]
        %v1229 = vld [vmem:[%s269 + $0x18] sm:$0x3]
        %v1230 = vld [vmem:[%s269 + $0x20] sm:$0xfc]
        %v1231 = vld [vmem:[%s269 + $0x28] sm:$0xfc]
        %v1232 = vld [vmem:[%s269 + $0x30] sm:$0x3]
        %v1233 = vld [vmem:[%s269 + $0x38] sm:$0x3]
        %v1234 = vld [vmem:[%s269 + $0x40] sm:$0xfc]
        %v1235 = vld [vmem:[%s269 + $0x48] sm:$0xfc]
        %v1236 = vld [vmem:[%s269 + $0x50] sm:$0x3]
        %v1237 = vld [vmem:[%s269 + $0x58] sm:$0x3]
        %v1238 = vld [vmem:[%s269 + $0x60] sm:$0xfc]
        %v1239 = vld [vmem:[%s269 + $0x68] sm:$0xfc]
        %v1240 = vld [vmem:[%s269 + $0x70] sm:$0x3]
        %v1241 = vld [vmem:[%s269 + $0x78] sm:$0x3]
        %v1242 = vld [vmem:[%s269 + $0x80] sm:$0xfc]
        %v1243 = vld [vmem:[%s269 + $0x88] sm:$0xfc]
        %v1244 = vld [vmem:[%s269 + $0x90] sm:$0x3]
        %v1245 = vld [vmem:[%s269 + $0x98] sm:$0x3]
        %v1246 = vld [vmem:[%s269 + $0xa0] sm:$0xfc]
        %v1247 = vld [vmem:[%s269 + $0xa8] sm:$0xfc]
        %v1248 = vld [vmem:[%s269 + $0xb0] sm:$0x3]
        %v1249 = vld [vmem:[%s269 + $0xb8] sm:$0x3]
        %v1250 = vld [vmem:[%s269 + $0xc0] sm:$0xfc]
        %v1251 = vld [vmem:[%s269 + $0xc8] sm:$0xfc]
        %v1252 = vld [vmem:[%s269 + $0xd0] sm:$0x3]
        %v1253 = vld [vmem:[%s269 + $0xd8] sm:$0x3]
        %v1254 = vld [vmem:[%s269 + $0xe0] sm:$0xfc]
        %v1255 = vld [vmem:[%s269 + $0xe8] sm:$0xfc]
        %v1256 = vld [vmem:[%s269 + $0xf0] sm:$0x3]
        %v1257 = vld [vmem:[%s269 + $0xf8] sm:$0x3]
        %v1258 = vld [vmem:[%s269 + $0x100] sm:$0xfc]
        %v1259 = vld [vmem:[%s269 + $0x108] sm:$0xfc]
        %v1260 = vld [vmem:[%s269 + $0x110] sm:$0x3]
        %v1261 = vld [vmem:[%s269 + $0x118] sm:$0x3]
        %v1262 = vld [vmem:[%s269 + $0x120] sm:$0xfc]
        %v1263 = vld [vmem:[%s269 + $0x128] sm:$0xfc]
        %v1264 = vld [vmem:[%s269 + $0x130] sm:$0x3]
        %v1265 = vld [vmem:[%s269 + $0x138] sm:$0x3]
        %v1266 = vld [vmem:[%s269 + $0x140] sm:$0xfc]
        %v1267 = vld [vmem:[%s269 + $0x148] sm:$0xfc]
        %v1268 = vld [vmem:[%s269 + $0x150] sm:$0x3]
        %v1269 = vld [vmem:[%s269 + $0x158] sm:$0x3]
        %v1270 = vlaneseq
        %v1271 = vshrl.u32 %v1270, 7
        %v1272 = vsub.s32 2, %v1271
        %v1273 = vrot.slane %v301, %v1272
        %v1274 = vlaneseq
        %v1275 = vshrl.u32 %v1274, 7
        %v1276 = vsub.s32 2, %v1275
        %v1277 = vrot.slane %v302, %v1276
        %v1278 = vmul.f32 %v1226, %v1273
        %v1279 = vmul.f32 %v1227, %v1277
        %v1280 = vmul.f32 %v1228, %v1273
        %v1281 = vmul.f32 %v1229, %v1277
        %v1282 = vmul.f32 %v1230, %v1273
        %v1283 = vmul.f32 %v1231, %v1277
        %v1284 = vmul.f32 %v1232, %v1273
        %v1285 = vmul.f32 %v1233, %v1277
        %v1286 = vmul.f32 %v1234, %v1273
        %v1287 = vmul.f32 %v1235, %v1277
        %v1288 = vmul.f32 %v1236, %v1273
        %v1289 = vmul.f32 %v1237, %v1277
        %v1290 = vmul.f32 %v1238, %v1273
        %v1291 = vmul.f32 %v1239, %v1277
        %v1292 = vmul.f32 %v1240, %v1273
        %v1293 = vmul.f32 %v1241, %v1277
        %v1294 = vmul.f32 %v1242, %v1273
        %v1295 = vmul.f32 %v1243, %v1277
        %v1296 = vmul.f32 %v1244, %v1273
        %v1297 = vmul.f32 %v1245, %v1277
        %v1298 = vmul.f32 %v1246, %v1273
        %v1299 = vmul.f32 %v1247, %v1277
        %v1300 = vmul.f32 %v1248, %v1273
        %v1301 = vmul.f32 %v1249, %v1277
        %v1302 = vmul.f32 %v1250, %v1273
        %v1303 = vmul.f32 %v1251, %v1277
        %v1304 = vmul.f32 %v1252, %v1273
        %v1305 = vmul.f32 %v1253, %v1277
        %vm1334 = vcmask 1045504
        %v1335 = vrot.slane %v1278, 2
        %v1336 = vrot.slane %v1280, 2
        %v1337 = vsel %vm1334, %v1335, %v1336
        %v1338 = vrot.slane %v1279, 2
        %v1339 = vrot.slane %v1281, 2
        %v1340 = vsel %vm1334, %v1338, %v1339
        %v1341 = vrot.slane %v1282, 2
        %v1342 = vrot.slane %v1284, 2
        %v1343 = vsel %vm1334, %v1341, %v1342
        %v1344 = vrot.slane %v1283, 2
        %v1345 = vrot.slane %v1285, 2
        %v1346 = vsel %vm1334, %v1344, %v1345
        %v1347 = vrot.slane %v1286, 2
        %v1348 = vrot.slane %v1288, 2
        %v1349 = vsel %vm1334, %v1347, %v1348
        %v1350 = vrot.slane %v1287, 2
        %v1351 = vrot.slane %v1289, 2
        %v1352 = vsel %vm1334, %v1350, %v1351
        %v1353 = vrot.slane %v1290, 2
        %v1354 = vrot.slane %v1292, 2
        %v1355 = vsel %vm1334, %v1353, %v1354
        %v1356 = vrot.slane %v1291, 2
        %v1357 = vrot.slane %v1293, 2
        %v1358 = vsel %vm1334, %v1356, %v1357
        %v1359 = vrot.slane %v1294, 2
        %v1360 = vrot.slane %v1296, 2
        %v1361 = vsel %vm1334, %v1359, %v1360
        %v1362 = vrot.slane %v1295, 2
        %v1363 = vrot.slane %v1297, 2
        %v1364 = vsel %vm1334, %v1362, %v1363
        %v1365 = vrot.slane %v1298, 2
        %v1366 = vrot.slane %v1300, 2
        %v1367 = vsel %vm1334, %v1365, %v1366
        %v1368 = vrot.slane %v1299, 2
        %v1369 = vrot.slane %v1301, 2
        %v1370 = vsel %vm1334, %v1368, %v1369
        %v1371 = vrot.slane %v1302, 2
        %v1372 = vrot.slane %v1304, 2
        %v1373 = vsel %vm1334, %v1371, %v1372
        %v1374 = vrot.slane %v1303, 2
        %v1375 = vrot.slane %v1305, 2
        %v1376 = vsel %vm1334, %v1374, %v1375
        %v1391 = vadd.f32 %v1212, %v1337
        %v1392 = vadd.f32 %v1213, %v1340
        %v1393 = vadd.f32 %v1214, %v1343
        %v1394 = vadd.f32 %v1215, %v1346
        %v1395 = vadd.f32 %v1216, %v1349
        %v1396 = vadd.f32 %v1217, %v1352
        %v1397 = vadd.f32 %v1218, %v1355
        %v1398 = vadd.f32 %v1219, %v1358
        %v1399 = vadd.f32 %v1220, %v1361
        %v1400 = vadd.f32 %v1221, %v1364
        %v1401 = vadd.f32 %v1222, %v1367
        %v1402 = vadd.f32 %v1223, %v1370
        %v1403 = vadd.f32 %v1224, %v1373
        %v1404 = vadd.f32 %v1225, %v1376
        %v1405 = vlaneseq
        %v1406 = vshrl.u32 %v1405, 7
        %v1407 = vsub.s32 7, %v1406
        %v1408 = vrot.slane %v301, %v1407
        %v1409 = vlaneseq
        %v1410 = vshrl.u32 %v1409, 7
        %v1411 = vsub.s32 7, %v1410
        %v1412 = vrot.slane %v302, %v1411
        %v1413 = vmul.f32 %v1230, %v1408
        %v1414 = vmul.f32 %v1231, %v1412
        %v1415 = vmul.f32 %v1232, %v1408
        %v1416 = vmul.f32 %v1233, %v1412
        %v1417 = vmul.f32 %v1234, %v1408
        %v1418 = vmul.f32 %v1235, %v1412
        %v1419 = vmul.f32 %v1236, %v1408
        %v1420 = vmul.f32 %v1237, %v1412
        %v1421 = vmul.f32 %v1238, %v1408
        %v1422 = vmul.f32 %v1239, %v1412
        %v1423 = vmul.f32 %v1240, %v1408
        %v1424 = vmul.f32 %v1241, %v1412
        %v1425 = vmul.f32 %v1242, %v1408
        %v1426 = vmul.f32 %v1243, %v1412
        %v1427 = vmul.f32 %v1244, %v1408
        %v1428 = vmul.f32 %v1245, %v1412
        %v1429 = vmul.f32 %v1246, %v1408
        %v1430 = vmul.f32 %v1247, %v1412
        %v1431 = vmul.f32 %v1248, %v1408
        %v1432 = vmul.f32 %v1249, %v1412
        %v1433 = vmul.f32 %v1250, %v1408
        %v1434 = vmul.f32 %v1251, %v1412
        %v1435 = vmul.f32 %v1252, %v1408
        %v1436 = vmul.f32 %v1253, %v1412
        %v1437 = vmul.f32 %v1254, %v1408
        %v1438 = vmul.f32 %v1255, %v1412
        %v1439 = vmul.f32 %v1256, %v1408
        %v1440 = vmul.f32 %v1257, %v1412
        %v1469 = vrot.slane %v1413, 2
        %v1470 = vrot.slane %v1415, 2
        %v1471 = vsel %vm1334, %v1469, %v1470
        %v1472 = vrot.slane %v1414, 2
        %v1473 = vrot.slane %v1416, 2
        %v1474 = vsel %vm1334, %v1472, %v1473
        %v1475 = vrot.slane %v1417, 2
        %v1476 = vrot.slane %v1419, 2
        %v1477 = vsel %vm1334, %v1475, %v1476
        %v1478 = vrot.slane %v1418, 2
        %v1479 = vrot.slane %v1420, 2
        %v1480 = vsel %vm1334, %v1478, %v1479
        %v1481 = vrot.slane %v1421, 2
        %v1482 = vrot.slane %v1423, 2
        %v1483 = vsel %vm1334, %v1481, %v1482
        %v1484 = vrot.slane %v1422, 2
        %v1485 = vrot.slane %v1424, 2
        %v1486 = vsel %vm1334, %v1484, %v1485
        %v1487 = vrot.slane %v1425, 2
        %v1488 = vrot.slane %v1427, 2
        %v1489 = vsel %vm1334, %v1487, %v1488
        %v1490 = vrot.slane %v1426, 2
        %v1491 = vrot.slane %v1428, 2
        %v1492 = vsel %vm1334, %v1490, %v1491
        %v1493 = vrot.slane %v1429, 2
        %v1494 = vrot.slane %v1431, 2
        %v1495 = vsel %vm1334, %v1493, %v1494
        %v1496 = vrot.slane %v1430, 2
        %v1497 = vrot.slane %v1432, 2
        %v1498 = vsel %vm1334, %v1496, %v1497
        %v1499 = vrot.slane %v1433, 2
        %v1500 = vrot.slane %v1435, 2
        %v1501 = vsel %vm1334, %v1499, %v1500
        %v1502 = vrot.slane %v1434, 2
        %v1503 = vrot.slane %v1436, 2
        %v1504 = vsel %vm1334, %v1502, %v1503
        %v1505 = vrot.slane %v1437, 2
        %v1506 = vrot.slane %v1439, 2
        %v1507 = vsel %vm1334, %v1505, %v1506
        %v1508 = vrot.slane %v1438, 2
        %v1509 = vrot.slane %v1440, 2
        %v1510 = vsel %vm1334, %v1508, %v1509
        %v1525 = vadd.f32 %v1391, %v1471
        %v1526 = vadd.f32 %v1392, %v1474
        %v1527 = vadd.f32 %v1393, %v1477
        %v1528 = vadd.f32 %v1394, %v1480
        %v1529 = vadd.f32 %v1395, %v1483
        %v1530 = vadd.f32 %v1396, %v1486
        %v1531 = vadd.f32 %v1397, %v1489
        %v1532 = vadd.f32 %v1398, %v1492
        %v1533 = vadd.f32 %v1399, %v1495
        %v1534 = vadd.f32 %v1400, %v1498
        %v1535 = vadd.f32 %v1401, %v1501
        %v1536 = vadd.f32 %v1402, %v1504
        %v1537 = vadd.f32 %v1403, %v1507
        %v1538 = vadd.f32 %v1404, %v1510
        %v1539 = vlaneseq
        %v1540 = vshrl.u32 %v1539, 7
        %v1541 = vsub.s32 4, %v1540
        %v1542 = vrot.slane %v303, %v1541
        %v1543 = vlaneseq
        %v1544 = vshrl.u32 %v1543, 7
        %v1545 = vsub.s32 4, %v1544
        %v1546 = vrot.slane %v304, %v1545
        %v1547 = vmul.f32 %v1234, %v1542
        %v1548 = vmul.f32 %v1235, %v1546
        %v1549 = vmul.f32 %v1236, %v1542
        %v1550 = vmul.f32 %v1237, %v1546
        %v1551 = vmul.f32 %v1238, %v1542
        %v1552 = vmul.f32 %v1239, %v1546
        %v1553 = vmul.f32 %v1240, %v1542
        %v1554 = vmul.f32 %v1241, %v1546
        %v1555 = vmul.f32 %v1242, %v1542
        %v1556 = vmul.f32 %v1243, %v1546
        %v1557 = vmul.f32 %v1244, %v1542
        %v1558 = vmul.f32 %v1245, %v1546
        %v1559 = vmul.f32 %v1246, %v1542
        %v1560 = vmul.f32 %v1247, %v1546
        %v1561 = vmul.f32 %v1248, %v1542
        %v1562 = vmul.f32 %v1249, %v1546
        %v1563 = vmul.f32 %v1250, %v1542
        %v1564 = vmul.f32 %v1251, %v1546
        %v1565 = vmul.f32 %v1252, %v1542
        %v1566 = vmul.f32 %v1253, %v1546
        %v1567 = vmul.f32 %v1254, %v1542
        %v1568 = vmul.f32 %v1255, %v1546
        %v1569 = vmul.f32 %v1256, %v1542
        %v1570 = vmul.f32 %v1257, %v1546
        %v1571 = vmul.f32 %v1258, %v1542
        %v1572 = vmul.f32 %v1259, %v1546
        %v1573 = vmul.f32 %v1260, %v1542
        %v1574 = vmul.f32 %v1261, %v1546
        %v1603 = vrot.slane %v1547, 2
        %v1604 = vrot.slane %v1549, 2
        %v1605 = vsel %vm1334, %v1603, %v1604
        %v1606 = vrot.slane %v1548, 2
        %v1607 = vrot.slane %v1550, 2
        %v1608 = vsel %vm1334, %v1606, %v1607
        %v1609 = vrot.slane %v1551, 2
        %v1610 = vrot.slane %v1553, 2
        %v1611 = vsel %vm1334, %v1609, %v1610
        %v1612 = vrot.slane %v1552, 2
        %v1613 = vrot.slane %v1554, 2
        %v1614 = vsel %vm1334, %v1612, %v1613
        %v1615 = vrot.slane %v1555, 2
        %v1616 = vrot.slane %v1557, 2
        %v1617 = vsel %vm1334, %v1615, %v1616
        %v1618 = vrot.slane %v1556, 2
        %v1619 = vrot.slane %v1558, 2
        %v1620 = vsel %vm1334, %v1618, %v1619
        %v1621 = vrot.slane %v1559, 2
        %v1622 = vrot.slane %v1561, 2
        %v1623 = vsel %vm1334, %v1621, %v1622
        %v1624 = vrot.slane %v1560, 2
        %v1625 = vrot.slane %v1562, 2
        %v1626 = vsel %vm1334, %v1624, %v1625
        %v1627 = vrot.slane %v1563, 2
        %v1628 = vrot.slane %v1565, 2
        %v1629 = vsel %vm1334, %v1627, %v1628
        %v1630 = vrot.slane %v1564, 2
        %v1631 = vrot.slane %v1566, 2
        %v1632 = vsel %vm1334, %v1630, %v1631
        %v1633 = vrot.slane %v1567, 2
        %v1634 = vrot.slane %v1569, 2
        %v1635 = vsel %vm1334, %v1633, %v1634
        %v1636 = vrot.slane %v1568, 2
        %v1637 = vrot.slane %v1570, 2
        %v1638 = vsel %vm1334, %v1636, %v1637
        %v1639 = vrot.slane %v1571, 2
        %v1640 = vrot.slane %v1573, 2
        %v1641 = vsel %vm1334, %v1639, %v1640
        %v1642 = vrot.slane %v1572, 2
        %v1643 = vrot.slane %v1574, 2
        %v1644 = vsel %vm1334, %v1642, %v1643
        %v1659 = vadd.f32 %v1525, %v1605
        %v1660 = vadd.f32 %v1526, %v1608
        %v1661 = vadd.f32 %v1527, %v1611
        %v1662 = vadd.f32 %v1528, %v1614
        %v1663 = vadd.f32 %v1529, %v1617
        %v1664 = vadd.f32 %v1530, %v1620
        %v1665 = vadd.f32 %v1531, %v1623
        %v1666 = vadd.f32 %v1532, %v1626
        %v1667 = vadd.f32 %v1533, %v1629
        %v1668 = vadd.f32 %v1534, %v1632
        %v1669 = vadd.f32 %v1535, %v1635
        %v1670 = vadd.f32 %v1536, %v1638
        %v1671 = vadd.f32 %v1537, %v1641
        %v1672 = vadd.f32 %v1538, %v1644
        %v1673 = vlaneseq
        %v1674 = vshrl.u32 %v1673, 7
        %v1675 = vsub.s32 1, %v1674
        %v1676 = vrot.slane %v305, %v1675
        %v1677 = vlaneseq
        %v1678 = vshrl.u32 %v1677, 7
        %v1679 = vsub.s32 1, %v1678
        %v1680 = vrot.slane %v306, %v1679
        %v1681 = vmul.f32 %v1238, %v1676
        %v1682 = vmul.f32 %v1239, %v1680
        %v1683 = vmul.f32 %v1240, %v1676
        %v1684 = vmul.f32 %v1241, %v1680
        %v1685 = vmul.f32 %v1242, %v1676
        %v1686 = vmul.f32 %v1243, %v1680
        %v1687 = vmul.f32 %v1244, %v1676
        %v1688 = vmul.f32 %v1245, %v1680
        %v1689 = vmul.f32 %v1246, %v1676
        %v1690 = vmul.f32 %v1247, %v1680
        %v1691 = vmul.f32 %v1248, %v1676
        %v1692 = vmul.f32 %v1249, %v1680
        %v1693 = vmul.f32 %v1250, %v1676
        %v1694 = vmul.f32 %v1251, %v1680
        %v1695 = vmul.f32 %v1252, %v1676
        %v1696 = vmul.f32 %v1253, %v1680
        %v1697 = vmul.f32 %v1254, %v1676
        %v1698 = vmul.f32 %v1255, %v1680
        %v1699 = vmul.f32 %v1256, %v1676
        %v1700 = vmul.f32 %v1257, %v1680
        %v1701 = vmul.f32 %v1258, %v1676
        %v1702 = vmul.f32 %v1259, %v1680
        %v1703 = vmul.f32 %v1260, %v1676
        %v1704 = vmul.f32 %v1261, %v1680
        %v1705 = vmul.f32 %v1262, %v1676
        %v1706 = vmul.f32 %v1263, %v1680
        %v1707 = vmul.f32 %v1264, %v1676
        %v1708 = vmul.f32 %v1265, %v1680
        %v1737 = vrot.slane %v1681, 2
        %v1738 = vrot.slane %v1683, 2
        %v1739 = vsel %vm1334, %v1737, %v1738
        %v1740 = vrot.slane %v1682, 2
        %v1741 = vrot.slane %v1684, 2
        %v1742 = vsel %vm1334, %v1740, %v1741
        %v1743 = vrot.slane %v1685, 2
        %v1744 = vrot.slane %v1687, 2
        %v1745 = vsel %vm1334, %v1743, %v1744
        %v1746 = vrot.slane %v1686, 2
        %v1747 = vrot.slane %v1688, 2
        %v1748 = vsel %vm1334, %v1746, %v1747
        %v1749 = vrot.slane %v1689, 2
        %v1750 = vrot.slane %v1691, 2
        %v1751 = vsel %vm1334, %v1749, %v1750
        %v1752 = vrot.slane %v1690, 2
        %v1753 = vrot.slane %v1692, 2
        %v1754 = vsel %vm1334, %v1752, %v1753
        %v1755 = vrot.slane %v1693, 2
        %v1756 = vrot.slane %v1695, 2
        %v1757 = vsel %vm1334, %v1755, %v1756
        %v1758 = vrot.slane %v1694, 2
        %v1759 = vrot.slane %v1696, 2
        %v1760 = vsel %vm1334, %v1758, %v1759
        %v1761 = vrot.slane %v1697, 2
        %v1762 = vrot.slane %v1699, 2
        %v1763 = vsel %vm1334, %v1761, %v1762
        %v1764 = vrot.slane %v1698, 2
        %v1765 = vrot.slane %v1700, 2
        %v1766 = vsel %vm1334, %v1764, %v1765
        %v1767 = vrot.slane %v1701, 2
        %v1768 = vrot.slane %v1703, 2
        %v1769 = vsel %vm1334, %v1767, %v1768
        %v1770 = vrot.slane %v1702, 2
        %v1771 = vrot.slane %v1704, 2
        %v1772 = vsel %vm1334, %v1770, %v1771
        %v1773 = vrot.slane %v1705, 2
        %v1774 = vrot.slane %v1707, 2
        %v1775 = vsel %vm1334, %v1773, %v1774
        %v1776 = vrot.slane %v1706, 2
        %v1777 = vrot.slane %v1708, 2
        %v1778 = vsel %vm1334, %v1776, %v1777
        %v1793 = vadd.f32 %v1659, %v1739
        %v1794 = vadd.f32 %v1660, %v1742
        %v1795 = vadd.f32 %v1661, %v1745
        %v1796 = vadd.f32 %v1662, %v1748
        %v1797 = vadd.f32 %v1663, %v1751
        %v1798 = vadd.f32 %v1664, %v1754
        %v1799 = vadd.f32 %v1665, %v1757
        %v1800 = vadd.f32 %v1666, %v1760
        %v1801 = vadd.f32 %v1667, %v1763
        %v1802 = vadd.f32 %v1668, %v1766
        %v1803 = vadd.f32 %v1669, %v1769
        %v1804 = vadd.f32 %v1670, %v1772
        %v1805 = vadd.f32 %v1671, %v1775
        %v1806 = vadd.f32 %v1672, %v1778
        %v1807 = vlaneseq
        %v1808 = vshrl.u32 %v1807, 7
        %v1809 = vsub.s32 6, %v1808
        %v1810 = vrot.slane %v305, %v1809
        %v1811 = vlaneseq
        %v1812 = vshrl.u32 %v1811, 7
        %v1813 = vsub.s32 6, %v1812
        %v1814 = vrot.slane %v306, %v1813
        %v1815 = vmul.f32 %v1242, %v1810
        %v1816 = vmul.f32 %v1243, %v1814
        %v1817 = vmul.f32 %v1244, %v1810
        %v1818 = vmul.f32 %v1245, %v1814
        %v1819 = vmul.f32 %v1246, %v1810
        %v1820 = vmul.f32 %v1247, %v1814
        %v1821 = vmul.f32 %v1248, %v1810
        %v1822 = vmul.f32 %v1249, %v1814
        %v1823 = vmul.f32 %v1250, %v1810
        %v1824 = vmul.f32 %v1251, %v1814
        %v1825 = vmul.f32 %v1252, %v1810
        %v1826 = vmul.f32 %v1253, %v1814
        %v1827 = vmul.f32 %v1254, %v1810
        %v1828 = vmul.f32 %v1255, %v1814
        %v1829 = vmul.f32 %v1256, %v1810
        %v1830 = vmul.f32 %v1257, %v1814
        %v1831 = vmul.f32 %v1258, %v1810
        %v1832 = vmul.f32 %v1259, %v1814
        %v1833 = vmul.f32 %v1260, %v1810
        %v1834 = vmul.f32 %v1261, %v1814
        %v1835 = vmul.f32 %v1262, %v1810
        %v1836 = vmul.f32 %v1263, %v1814
        %v1837 = vmul.f32 %v1264, %v1810
        %v1838 = vmul.f32 %v1265, %v1814
        %v1839 = vmul.f32 %v1266, %v1810
        %v1840 = vmul.f32 %v1267, %v1814
        %v1841 = vmul.f32 %v1268, %v1810
        %v1842 = vmul.f32 %v1269, %v1814
        %v1871 = vrot.slane %v1815, 2
        %v1872 = vrot.slane %v1817, 2
        %v1873 = vsel %vm1334, %v1871, %v1872
        %v1874 = vrot.slane %v1816, 2
        %v1875 = vrot.slane %v1818, 2
        %v1876 = vsel %vm1334, %v1874, %v1875
        %v1877 = vrot.slane %v1819, 2
        %v1878 = vrot.slane %v1821, 2
        %v1879 = vsel %vm1334, %v1877, %v1878
        %v1880 = vrot.slane %v1820, 2
        %v1881 = vrot.slane %v1822, 2
        %v1882 = vsel %vm1334, %v1880, %v1881
        %v1883 = vrot.slane %v1823, 2
        %v1884 = vrot.slane %v1825, 2
        %v1885 = vsel %vm1334, %v1883, %v1884
        %v1886 = vrot.slane %v1824, 2
        %v1887 = vrot.slane %v1826, 2
        %v1888 = vsel %vm1334, %v1886, %v1887
        %v1889 = vrot.slane %v1827, 2
        %v1890 = vrot.slane %v1829, 2
        %v1891 = vsel %vm1334, %v1889, %v1890
        %v1892 = vrot.slane %v1828, 2
        %v1893 = vrot.slane %v1830, 2
        %v1894 = vsel %vm1334, %v1892, %v1893
        %v1895 = vrot.slane %v1831, 2
        %v1896 = vrot.slane %v1833, 2
        %v1897 = vsel %vm1334, %v1895, %v1896
        %v1898 = vrot.slane %v1832, 2
        %v1899 = vrot.slane %v1834, 2
        %v1900 = vsel %vm1334, %v1898, %v1899
        %v1901 = vrot.slane %v1835, 2
        %v1902 = vrot.slane %v1837, 2
        %v1903 = vsel %vm1334, %v1901, %v1902
        %v1904 = vrot.slane %v1836, 2
        %v1905 = vrot.slane %v1838, 2
        %v1906 = vsel %vm1334, %v1904, %v1905
        %v1907 = vrot.slane %v1839, 2
        %v1908 = vrot.slane %v1841, 2
        %v1909 = vsel %vm1334, %v1907, %v1908
        %v1910 = vrot.slane %v1840, 2
        %v1911 = vrot.slane %v1842, 2
        %v1912 = vsel %vm1334, %v1910, %v1911
        %v1927 = vadd.f32 %v1793, %v1873
        %v1928 = vadd.f32 %v1794, %v1876
        %v1929 = vadd.f32 %v1795, %v1879
        %v1930 = vadd.f32 %v1796, %v1882
        %v1931 = vadd.f32 %v1797, %v1885
        %v1932 = vadd.f32 %v1798, %v1888
        %v1933 = vadd.f32 %v1799, %v1891
        %v1934 = vadd.f32 %v1800, %v1894
        %v1935 = vadd.f32 %v1801, %v1897
        %v1936 = vadd.f32 %v1802, %v1900
        %v1937 = vadd.f32 %v1803, %v1903
        %v1938 = vadd.f32 %v1804, %v1906
        %v1939 = vadd.f32 %v1805, %v1909
        %v1940 = vadd.f32 %v1806, %v1912
        %v1941 = vld [vmem:[%s269] sm:$0xf8]
        %v1942 = vld [vmem:[%s269 + $0x8] sm:$0xf8]
        %v1943 = vld [vmem:[%s269 + $0x10] sm:$0x7]
        %v1944 = vld [vmem:[%s269 + $0x18] sm:$0x7]
        %v1945 = vld [vmem:[%s269 + $0x20] sm:$0xf8]
        %v1946 = vld [vmem:[%s269 + $0x28] sm:$0xf8]
        %v1947 = vld [vmem:[%s269 + $0x30] sm:$0x7]
        %v1948 = vld [vmem:[%s269 + $0x38] sm:$0x7]
        %v1949 = vld [vmem:[%s269 + $0x40] sm:$0xf8]
        %v1950 = vld [vmem:[%s269 + $0x48] sm:$0xf8]
        %v1951 = vld [vmem:[%s269 + $0x50] sm:$0x7]
        %v1952 = vld [vmem:[%s269 + $0x58] sm:$0x7]
        %v1953 = vld [vmem:[%s269 + $0x60] sm:$0xf8]
        %v1954 = vld [vmem:[%s269 + $0x68] sm:$0xf8]
        %v1955 = vld [vmem:[%s269 + $0x70] sm:$0x7]
        %v1956 = vld [vmem:[%s269 + $0x78] sm:$0x7]
        %v1957 = vld [vmem:[%s269 + $0x80] sm:$0xf8]
        %v1958 = vld [vmem:[%s269 + $0x88] sm:$0xf8]
        %v1959 = vld [vmem:[%s269 + $0x90] sm:$0x7]
        %v1960 = vld [vmem:[%s269 + $0x98] sm:$0x7]
        %v1961 = vld [vmem:[%s269 + $0xa0] sm:$0xf8]
        %v1962 = vld [vmem:[%s269 + $0xa8] sm:$0xf8]
        %v1963 = vld [vmem:[%s269 + $0xb0] sm:$0x7]
        %v1964 = vld [vmem:[%s269 + $0xb8] sm:$0x7]
        %v1965 = vld [vmem:[%s269 + $0xc0] sm:$0xf8]
        %v1966 = vld [vmem:[%s269 + $0xc8] sm:$0xf8]
        %v1967 = vld [vmem:[%s269 + $0xd0] sm:$0x7]
        %v1968 = vld [vmem:[%s269 + $0xd8] sm:$0x7]
        %v1969 = vld [vmem:[%s269 + $0xe0] sm:$0xf8]
        %v1970 = vld [vmem:[%s269 + $0xe8] sm:$0xf8]
        %v1971 = vld [vmem:[%s269 + $0xf0] sm:$0x7]
        %v1972 = vld [vmem:[%s269 + $0xf8] sm:$0x7]
        %v1973 = vld [vmem:[%s269 + $0x100] sm:$0xf8]
        %v1974 = vld [vmem:[%s269 + $0x108] sm:$0xf8]
        %v1975 = vld [vmem:[%s269 + $0x110] sm:$0x7]
        %v1976 = vld [vmem:[%s269 + $0x118] sm:$0x7]
        %v1977 = vld [vmem:[%s269 + $0x120] sm:$0xf8]
        %v1978 = vld [vmem:[%s269 + $0x128] sm:$0xf8]
        %v1979 = vld [vmem:[%s269 + $0x130] sm:$0x7]
        %v1980 = vld [vmem:[%s269 + $0x138] sm:$0x7]
        %v1981 = vld [vmem:[%s269 + $0x140] sm:$0xf8]
        %v1982 = vld [vmem:[%s269 + $0x148] sm:$0xf8]
        %v1983 = vld [vmem:[%s269 + $0x150] sm:$0x7]
        %v1984 = vld [vmem:[%s269 + $0x158] sm:$0x7]
        %v1985 = vlaneseq
        %v1986 = vshrl.u32 %v1985, 7
        %v1987 = vsub.s32 3, %v1986
        %v1988 = vrot.slane %v301, %v1987
        %v1989 = vlaneseq
        %v1990 = vshrl.u32 %v1989, 7
        %v1991 = vsub.s32 3, %v1990
        %v1992 = vrot.slane %v302, %v1991
        %v1993 = vmul.f32 %v1941, %v1988
        %v1994 = vmul.f32 %v1942, %v1992
        %v1995 = vmul.f32 %v1943, %v1988
        %v1996 = vmul.f32 %v1944, %v1992
        %v1997 = vmul.f32 %v1945, %v1988
        %v1998 = vmul.f32 %v1946, %v1992
        %v1999 = vmul.f32 %v1947, %v1988
        %v2000 = vmul.f32 %v1948, %v1992
        %v2001 = vmul.f32 %v1949, %v1988
        %v2002 = vmul.f32 %v1950, %v1992
        %v2003 = vmul.f32 %v1951, %v1988
        %v2004 = vmul.f32 %v1952, %v1992
        %v2005 = vmul.f32 %v1953, %v1988
        %v2006 = vmul.f32 %v1954, %v1992
        %v2007 = vmul.f32 %v1955, %v1988
        %v2008 = vmul.f32 %v1956, %v1992
        %v2009 = vmul.f32 %v1957, %v1988
        %v2010 = vmul.f32 %v1958, %v1992
        %v2011 = vmul.f32 %v1959, %v1988
        %v2012 = vmul.f32 %v1960, %v1992
        %v2013 = vmul.f32 %v1961, %v1988
        %v2014 = vmul.f32 %v1962, %v1992
        %v2015 = vmul.f32 %v1963, %v1988
        %v2016 = vmul.f32 %v1964, %v1992
        %v2017 = vmul.f32 %v1965, %v1988
        %v2018 = vmul.f32 %v1966, %v1992
        %v2019 = vmul.f32 %v1967, %v1988
        %v2020 = vmul.f32 %v1968, %v1992
        %vm2049 = vcmask 1044480
        %v2050 = vrot.slane %v1993, 3
        %v2051 = vrot.slane %v1995, 3
        %v2052 = vsel %vm2049, %v2050, %v2051
        %v2053 = vrot.slane %v1994, 3
        %v2054 = vrot.slane %v1996, 3
        %v2055 = vsel %vm2049, %v2053, %v2054
        %v2056 = vrot.slane %v1997, 3
        %v2057 = vrot.slane %v1999, 3
        %v2058 = vsel %vm2049, %v2056, %v2057
        %v2059 = vrot.slane %v1998, 3
        %v2060 = vrot.slane %v2000, 3
        %v2061 = vsel %vm2049, %v2059, %v2060
        %v2062 = vrot.slane %v2001, 3
        %v2063 = vrot.slane %v2003, 3
        %v2064 = vsel %vm2049, %v2062, %v2063
        %v2065 = vrot.slane %v2002, 3
        %v2066 = vrot.slane %v2004, 3
        %v2067 = vsel %vm2049, %v2065, %v2066
        %v2068 = vrot.slane %v2005, 3
        %v2069 = vrot.slane %v2007, 3
        %v2070 = vsel %vm2049, %v2068, %v2069
        %v2071 = vrot.slane %v2006, 3
        %v2072 = vrot.slane %v2008, 3
        %v2073 = vsel %vm2049, %v2071, %v2072
        %v2074 = vrot.slane %v2009, 3
        %v2075 = vrot.slane %v2011, 3
        %v2076 = vsel %vm2049, %v2074, %v2075
        %v2077 = vrot.slane %v2010, 3
        %v2078 = vrot.slane %v2012, 3
        %v2079 = vsel %vm2049, %v2077, %v2078
        %v2080 = vrot.slane %v2013, 3
        %v2081 = vrot.slane %v2015, 3
        %v2082 = vsel %vm2049, %v2080, %v2081
        %v2083 = vrot.slane %v2014, 3
        %v2084 = vrot.slane %v2016, 3
        %v2085 = vsel %vm2049, %v2083, %v2084
        %v2086 = vrot.slane %v2017, 3
        %v2087 = vrot.slane %v2019, 3
        %v2088 = vsel %vm2049, %v2086, %v2087
        %v2089 = vrot.slane %v2018, 3
        %v2090 = vrot.slane %v2020, 3
        %v2091 = vsel %vm2049, %v2089, %v2090
        %v2106 = vadd.f32 %v1927, %v2052
        %v2107 = vadd.f32 %v1928, %v2055
        %v2108 = vadd.f32 %v1929, %v2058
        %v2109 = vadd.f32 %v1930, %v2061
        %v2110 = vadd.f32 %v1931, %v2064
        %v2111 = vadd.f32 %v1932, %v2067
        %v2112 = vadd.f32 %v1933, %v2070
        %v2113 = vadd.f32 %v1934, %v2073
        %v2114 = vadd.f32 %v1935, %v2076
        %v2115 = vadd.f32 %v1936, %v2079
        %v2116 = vadd.f32 %v1937, %v2082
        %v2117 = vadd.f32 %v1938, %v2085
        %v2118 = vadd.f32 %v1939, %v2088
        %v2119 = vadd.f32 %v1940, %v2091
        %v2120 = vlaneseq
        %v2121 = vshrl.u32 %v2120, 7
        %v2122 = vsub.s32 0, %v2121
        %v2123 = vrot.slane %v303, %v2122
        %v2124 = vlaneseq
        %v2125 = vshrl.u32 %v2124, 7
        %v2126 = vsub.s32 0, %v2125
        %v2127 = vrot.slane %v304, %v2126
        %v2128 = vmul.f32 %v1945, %v2123
        %v2129 = vmul.f32 %v1946, %v2127
        %v2130 = vmul.f32 %v1947, %v2123
        %v2131 = vmul.f32 %v1948, %v2127
        %v2132 = vmul.f32 %v1949, %v2123
        %v2133 = vmul.f32 %v1950, %v2127
        %v2134 = vmul.f32 %v1951, %v2123
        %v2135 = vmul.f32 %v1952, %v2127
        %v2136 = vmul.f32 %v1953, %v2123
        %v2137 = vmul.f32 %v1954, %v2127
        %v2138 = vmul.f32 %v1955, %v2123
        %v2139 = vmul.f32 %v1956, %v2127
        %v2140 = vmul.f32 %v1957, %v2123
        %v2141 = vmul.f32 %v1958, %v2127
        %v2142 = vmul.f32 %v1959, %v2123
        %v2143 = vmul.f32 %v1960, %v2127
        %v2144 = vmul.f32 %v1961, %v2123
        %v2145 = vmul.f32 %v1962, %v2127
        %v2146 = vmul.f32 %v1963, %v2123
        %v2147 = vmul.f32 %v1964, %v2127
        %v2148 = vmul.f32 %v1965, %v2123
        %v2149 = vmul.f32 %v1966, %v2127
        %v2150 = vmul.f32 %v1967, %v2123
        %v2151 = vmul.f32 %v1968, %v2127
        %v2152 = vmul.f32 %v1969, %v2123
        %v2153 = vmul.f32 %v1970, %v2127
        %v2154 = vmul.f32 %v1971, %v2123
        %v2155 = vmul.f32 %v1972, %v2127
        %v2184 = vrot.slane %v2128, 3
        %v2185 = vrot.slane %v2130, 3
        %v2186 = vsel %vm2049, %v2184, %v2185
        %v2187 = vrot.slane %v2129, 3
        %v2188 = vrot.slane %v2131, 3
        %v2189 = vsel %vm2049, %v2187, %v2188
        %v2190 = vrot.slane %v2132, 3
        %v2191 = vrot.slane %v2134, 3
        %v2192 = vsel %vm2049, %v2190, %v2191
        %v2193 = vrot.slane %v2133, 3
        %v2194 = vrot.slane %v2135, 3
        %v2195 = vsel %vm2049, %v2193, %v2194
        %v2196 = vrot.slane %v2136, 3
        %v2197 = vrot.slane %v2138, 3
        %v2198 = vsel %vm2049, %v2196, %v2197
        %v2199 = vrot.slane %v2137, 3
        %v2200 = vrot.slane %v2139, 3
        %v2201 = vsel %vm2049, %v2199, %v2200
        %v2202 = vrot.slane %v2140, 3
        %v2203 = vrot.slane %v2142, 3
        %v2204 = vsel %vm2049, %v2202, %v2203
        %v2205 = vrot.slane %v2141, 3
        %v2206 = vrot.slane %v2143, 3
        %v2207 = vsel %vm2049, %v2205, %v2206
        %v2208 = vrot.slane %v2144, 3
        %v2209 = vrot.slane %v2146, 3
        %v2210 = vsel %vm2049, %v2208, %v2209
        %v2211 = vrot.slane %v2145, 3
        %v2212 = vrot.slane %v2147, 3
        %v2213 = vsel %vm2049, %v2211, %v2212
        %v2214 = vrot.slane %v2148, 3
        %v2215 = vrot.slane %v2150, 3
        %v2216 = vsel %vm2049, %v2214, %v2215
        %v2217 = vrot.slane %v2149, 3
        %v2218 = vrot.slane %v2151, 3
        %v2219 = vsel %vm2049, %v2217, %v2218
        %v2220 = vrot.slane %v2152, 3
        %v2221 = vrot.slane %v2154, 3
        %v2222 = vsel %vm2049, %v2220, %v2221
        %v2223 = vrot.slane %v2153, 3
        %v2224 = vrot.slane %v2155, 3
        %v2225 = vsel %vm2049, %v2223, %v2224
        %v2240 = vadd.f32 %v2106, %v2186
        %v2241 = vadd.f32 %v2107, %v2189
        %v2242 = vadd.f32 %v2108, %v2192
        %v2243 = vadd.f32 %v2109, %v2195
        %v2244 = vadd.f32 %v2110, %v2198
        %v2245 = vadd.f32 %v2111, %v2201
        %v2246 = vadd.f32 %v2112, %v2204
        %v2247 = vadd.f32 %v2113, %v2207
        %v2248 = vadd.f32 %v2114, %v2210
        %v2249 = vadd.f32 %v2115, %v2213
        %v2250 = vadd.f32 %v2116, %v2216
        %v2251 = vadd.f32 %v2117, %v2219
        %v2252 = vadd.f32 %v2118, %v2222
        %v2253 = vadd.f32 %v2119, %v2225
        %v2254 = vlaneseq
        %v2255 = vshrl.u32 %v2254, 7
        %v2256 = vsub.s32 5, %v2255
        %v2257 = vrot.slane %v303, %v2256
        %v2258 = vlaneseq
        %v2259 = vshrl.u32 %v2258, 7
        %v2260 = vsub.s32 5, %v2259
        %v2261 = vrot.slane %v304, %v2260
        %v2262 = vmul.f32 %v1949, %v2257
        %v2263 = vmul.f32 %v1950, %v2261
        %v2264 = vmul.f32 %v1951, %v2257
        %v2265 = vmul.f32 %v1952, %v2261
        %v2266 = vmul.f32 %v1953, %v2257
        %v2267 = vmul.f32 %v1954, %v2261
        %v2268 = vmul.f32 %v1955, %v2257
        %v2269 = vmul.f32 %v1956, %v2261
        %v2270 = vmul.f32 %v1957, %v2257
        %v2271 = vmul.f32 %v1958, %v2261
        %v2272 = vmul.f32 %v1959, %v2257
        %v2273 = vmul.f32 %v1960, %v2261
        %v2274 = vmul.f32 %v1961, %v2257
        %v2275 = vmul.f32 %v1962, %v2261
        %v2276 = vmul.f32 %v1963, %v2257
        %v2277 = vmul.f32 %v1964, %v2261
        %v2278 = vmul.f32 %v1965, %v2257
        %v2279 = vmul.f32 %v1966, %v2261
        %v2280 = vmul.f32 %v1967, %v2257
        %v2281 = vmul.f32 %v1968, %v2261
        %v2282 = vmul.f32 %v1969, %v2257
        %v2283 = vmul.f32 %v1970, %v2261
        %v2284 = vmul.f32 %v1971, %v2257
        %v2285 = vmul.f32 %v1972, %v2261
        %v2286 = vmul.f32 %v1973, %v2257
        %v2287 = vmul.f32 %v1974, %v2261
        %v2288 = vmul.f32 %v1975, %v2257
        %v2289 = vmul.f32 %v1976, %v2261
        %v2318 = vrot.slane %v2262, 3
        %v2319 = vrot.slane %v2264, 3
        %v2320 = vsel %vm2049, %v2318, %v2319
        %v2321 = vrot.slane %v2263, 3
        %v2322 = vrot.slane %v2265, 3
        %v2323 = vsel %vm2049, %v2321, %v2322
        %v2324 = vrot.slane %v2266, 3
        %v2325 = vrot.slane %v2268, 3
        %v2326 = vsel %vm2049, %v2324, %v2325
        %v2327 = vrot.slane %v2267, 3
        %v2328 = vrot.slane %v2269, 3
        %v2329 = vsel %vm2049, %v2327, %v2328
        %v2330 = vrot.slane %v2270, 3
        %v2331 = vrot.slane %v2272, 3
        %v2332 = vsel %vm2049, %v2330, %v2331
        %v2333 = vrot.slane %v2271, 3
        %v2334 = vrot.slane %v2273, 3
        %v2335 = vsel %vm2049, %v2333, %v2334
        %v2336 = vrot.slane %v2274, 3
        %v2337 = vrot.slane %v2276, 3
        %v2338 = vsel %vm2049, %v2336, %v2337
        %v2339 = vrot.slane %v2275, 3
        %v2340 = vrot.slane %v2277, 3
        %v2341 = vsel %vm2049, %v2339, %v2340
        %v2342 = vrot.slane %v2278, 3
        %v2343 = vrot.slane %v2280, 3
        %v2344 = vsel %vm2049, %v2342, %v2343
        %v2345 = vrot.slane %v2279, 3
        %v2346 = vrot.slane %v2281, 3
        %v2347 = vsel %vm2049, %v2345, %v2346
        %v2348 = vrot.slane %v2282, 3
        %v2349 = vrot.slane %v2284, 3
        %v2350 = vsel %vm2049, %v2348, %v2349
        %v2351 = vrot.slane %v2283, 3
        %v2352 = vrot.slane %v2285, 3
        %v2353 = vsel %vm2049, %v2351, %v2352
        %v2354 = vrot.slane %v2286, 3
        %v2355 = vrot.slane %v2288, 3
        %v2356 = vsel %vm2049, %v2354, %v2355
        %v2357 = vrot.slane %v2287, 3
        %v2358 = vrot.slane %v2289, 3
        %v2359 = vsel %vm2049, %v2357, %v2358
        %v2374 = vadd.f32 %v2240, %v2320
        %v2375 = vadd.f32 %v2241, %v2323
        %v2376 = vadd.f32 %v2242, %v2326
        %v2377 = vadd.f32 %v2243, %v2329
        %v2378 = vadd.f32 %v2244, %v2332
        %v2379 = vadd.f32 %v2245, %v2335
        %v2380 = vadd.f32 %v2246, %v2338
        %v2381 = vadd.f32 %v2247, %v2341
        %v2382 = vadd.f32 %v2248, %v2344
        %v2383 = vadd.f32 %v2249, %v2347
        %v2384 = vadd.f32 %v2250, %v2350
        %v2385 = vadd.f32 %v2251, %v2353
        %v2386 = vadd.f32 %v2252, %v2356
        %v2387 = vadd.f32 %v2253, %v2359
        %v2388 = vlaneseq
        %v2389 = vshrl.u32 %v2388, 7
        %v2390 = vsub.s32 2, %v2389
        %v2391 = vrot.slane %v305, %v2390
        %v2392 = vlaneseq
        %v2393 = vshrl.u32 %v2392, 7
        %v2394 = vsub.s32 2, %v2393
        %v2395 = vrot.slane %v306, %v2394
        %v2396 = vmul.f32 %v1953, %v2391
        %v2397 = vmul.f32 %v1954, %v2395
        %v2398 = vmul.f32 %v1955, %v2391
        %v2399 = vmul.f32 %v1956, %v2395
        %v2400 = vmul.f32 %v1957, %v2391
        %v2401 = vmul.f32 %v1958, %v2395
        %v2402 = vmul.f32 %v1959, %v2391
        %v2403 = vmul.f32 %v1960, %v2395
        %v2404 = vmul.f32 %v1961, %v2391
        %v2405 = vmul.f32 %v1962, %v2395
        %v2406 = vmul.f32 %v1963, %v2391
        %v2407 = vmul.f32 %v1964, %v2395
        %v2408 = vmul.f32 %v1965, %v2391
        %v2409 = vmul.f32 %v1966, %v2395
        %v2410 = vmul.f32 %v1967, %v2391
        %v2411 = vmul.f32 %v1968, %v2395
        %v2412 = vmul.f32 %v1969, %v2391
        %v2413 = vmul.f32 %v1970, %v2395
        %v2414 = vmul.f32 %v1971, %v2391
        %v2415 = vmul.f32 %v1972, %v2395
        %v2416 = vmul.f32 %v1973, %v2391
        %v2417 = vmul.f32 %v1974, %v2395
        %v2418 = vmul.f32 %v1975, %v2391
        %v2419 = vmul.f32 %v1976, %v2395
        %v2420 = vmul.f32 %v1977, %v2391
        %v2421 = vmul.f32 %v1978, %v2395
        %v2422 = vmul.f32 %v1979, %v2391
        %v2423 = vmul.f32 %v1980, %v2395
        %v2452 = vrot.slane %v2396, 3
        %v2453 = vrot.slane %v2398, 3
        %v2454 = vsel %vm2049, %v2452, %v2453
        %v2455 = vrot.slane %v2397, 3
        %v2456 = vrot.slane %v2399, 3
        %v2457 = vsel %vm2049, %v2455, %v2456
        %v2458 = vrot.slane %v2400, 3
        %v2459 = vrot.slane %v2402, 3
        %v2460 = vsel %vm2049, %v2458, %v2459
        %v2461 = vrot.slane %v2401, 3
        %v2462 = vrot.slane %v2403, 3
        %v2463 = vsel %vm2049, %v2461, %v2462
        %v2464 = vrot.slane %v2404, 3
        %v2465 = vrot.slane %v2406, 3
        %v2466 = vsel %vm2049, %v2464, %v2465
        %v2467 = vrot.slane %v2405, 3
        %v2468 = vrot.slane %v2407, 3
        %v2469 = vsel %vm2049, %v2467, %v2468
        %v2470 = vrot.slane %v2408, 3
        %v2471 = vrot.slane %v2410, 3
        %v2472 = vsel %vm2049, %v2470, %v2471
        %v2473 = vrot.slane %v2409, 3
        %v2474 = vrot.slane %v2411, 3
        %v2475 = vsel %vm2049, %v2473, %v2474
        %v2476 = vrot.slane %v2412, 3
        %v2477 = vrot.slane %v2414, 3
        %v2478 = vsel %vm2049, %v2476, %v2477
        %v2479 = vrot.slane %v2413, 3
        %v2480 = vrot.slane %v2415, 3
        %v2481 = vsel %vm2049, %v2479, %v2480
        %v2482 = vrot.slane %v2416, 3
        %v2483 = vrot.slane %v2418, 3
        %v2484 = vsel %vm2049, %v2482, %v2483
        %v2485 = vrot.slane %v2417, 3
        %v2486 = vrot.slane %v2419, 3
        %v2487 = vsel %vm2049, %v2485, %v2486
        %v2488 = vrot.slane %v2420, 3
        %v2489 = vrot.slane %v2422, 3
        %v2490 = vsel %vm2049, %v2488, %v2489
        %v2491 = vrot.slane %v2421, 3
        %v2492 = vrot.slane %v2423, 3
        %v2493 = vsel %vm2049, %v2491, %v2492
        %v2508 = vadd.f32 %v2374, %v2454
        %v2509 = vadd.f32 %v2375, %v2457
        %v2510 = vadd.f32 %v2376, %v2460
        %v2511 = vadd.f32 %v2377, %v2463
        %v2512 = vadd.f32 %v2378, %v2466
        %v2513 = vadd.f32 %v2379, %v2469
        %v2514 = vadd.f32 %v2380, %v2472
        %v2515 = vadd.f32 %v2381, %v2475
        %v2516 = vadd.f32 %v2382, %v2478
        %v2517 = vadd.f32 %v2383, %v2481
        %v2518 = vadd.f32 %v2384, %v2484
        %v2519 = vadd.f32 %v2385, %v2487
        %v2520 = vadd.f32 %v2386, %v2490
        %v2521 = vadd.f32 %v2387, %v2493
        %v2522 = vlaneseq
        %v2523 = vshrl.u32 %v2522, 7
        %v2524 = vsub.s32 7, %v2523
        %v2525 = vrot.slane %v305, %v2524
        %v2526 = vlaneseq
        %v2527 = vshrl.u32 %v2526, 7
        %v2528 = vsub.s32 7, %v2527
        %v2529 = vrot.slane %v306, %v2528
        %v2530 = vmul.f32 %v1957, %v2525
        %v2531 = vmul.f32 %v1958, %v2529
        %v2532 = vmul.f32 %v1959, %v2525
        %v2533 = vmul.f32 %v1960, %v2529
        %v2534 = vmul.f32 %v1961, %v2525
        %v2535 = vmul.f32 %v1962, %v2529
        %v2536 = vmul.f32 %v1963, %v2525
        %v2537 = vmul.f32 %v1964, %v2529
        %v2538 = vmul.f32 %v1965, %v2525
        %v2539 = vmul.f32 %v1966, %v2529
        %v2540 = vmul.f32 %v1967, %v2525
        %v2541 = vmul.f32 %v1968, %v2529
        %v2542 = vmul.f32 %v1969, %v2525
        %v2543 = vmul.f32 %v1970, %v2529
        %v2544 = vmul.f32 %v1971, %v2525
        %v2545 = vmul.f32 %v1972, %v2529
        %v2546 = vmul.f32 %v1973, %v2525
        %v2547 = vmul.f32 %v1974, %v2529
        %v2548 = vmul.f32 %v1975, %v2525
        %v2549 = vmul.f32 %v1976, %v2529
        %v2550 = vmul.f32 %v1977, %v2525
        %v2551 = vmul.f32 %v1978, %v2529
        %v2552 = vmul.f32 %v1979, %v2525
        %v2553 = vmul.f32 %v1980, %v2529
        %v2554 = vmul.f32 %v1981, %v2525
        %v2555 = vmul.f32 %v1982, %v2529
        %v2556 = vmul.f32 %v1983, %v2525
        %v2557 = vmul.f32 %v1984, %v2529
        %v2586 = vrot.slane %v2530, 3
        %v2587 = vrot.slane %v2532, 3
        %v2588 = vsel %vm2049, %v2586, %v2587
        %v2589 = vrot.slane %v2531, 3
        %v2590 = vrot.slane %v2533, 3
        %v2591 = vsel %vm2049, %v2589, %v2590
        %v2592 = vrot.slane %v2534, 3
        %v2593 = vrot.slane %v2536, 3
        %v2594 = vsel %vm2049, %v2592, %v2593
        %v2595 = vrot.slane %v2535, 3
        %v2596 = vrot.slane %v2537, 3
        %v2597 = vsel %vm2049, %v2595, %v2596
        %v2598 = vrot.slane %v2538, 3
        %v2599 = vrot.slane %v2540, 3
        %v2600 = vsel %vm2049, %v2598, %v2599
        %v2601 = vrot.slane %v2539, 3
        %v2602 = vrot.slane %v2541, 3
        %v2603 = vsel %vm2049, %v2601, %v2602
        %v2604 = vrot.slane %v2542, 3
        %v2605 = vrot.slane %v2544, 3
        %v2606 = vsel %vm2049, %v2604, %v2605
        %v2607 = vrot.slane %v2543, 3
        %v2608 = vrot.slane %v2545, 3
        %v2609 = vsel %vm2049, %v2607, %v2608
        %v2610 = vrot.slane %v2546, 3
        %v2611 = vrot.slane %v2548, 3
        %v2612 = vsel %vm2049, %v2610, %v2611
        %v2613 = vrot.slane %v2547, 3
        %v2614 = vrot.slane %v2549, 3
        %v2615 = vsel %vm2049, %v2613, %v2614
        %v2616 = vrot.slane %v2550, 3
        %v2617 = vrot.slane %v2552, 3
        %v2618 = vsel %vm2049, %v2616, %v2617
        %v2619 = vrot.slane %v2551, 3
        %v2620 = vrot.slane %v2553, 3
        %v2621 = vsel %vm2049, %v2619, %v2620
        %v2622 = vrot.slane %v2554, 3
        %v2623 = vrot.slane %v2556, 3
        %v2624 = vsel %vm2049, %v2622, %v2623
        %v2625 = vrot.slane %v2555, 3
        %v2626 = vrot.slane %v2557, 3
        %v2627 = vsel %vm2049, %v2625, %v2626
        %v2642 = vadd.f32 %v2508, %v2588
        %v2643 = vadd.f32 %v2509, %v2591
        %v2644 = vadd.f32 %v2510, %v2594
        %v2645 = vadd.f32 %v2511, %v2597
        %v2646 = vadd.f32 %v2512, %v2600
        %v2647 = vadd.f32 %v2513, %v2603
        %v2648 = vadd.f32 %v2514, %v2606
        %v2649 = vadd.f32 %v2515, %v2609
        %v2650 = vadd.f32 %v2516, %v2612
        %v2651 = vadd.f32 %v2517, %v2615
        %v2652 = vadd.f32 %v2518, %v2618
        %v2653 = vadd.f32 %v2519, %v2621
        %v2654 = vadd.f32 %v2520, %v2624
        %v2655 = vadd.f32 %v2521, %v2627
        %v2656 = vld [vmem:[%s269] sm:$0xf0]
        %v2657 = vld [vmem:[%s269 + $0x8] sm:$0xf0]
        %v2658 = vld [vmem:[%s269 + $0x10] sm:$0xf]
        %v2659 = vld [vmem:[%s269 + $0x18] sm:$0xf]
        %v2660 = vld [vmem:[%s269 + $0x20] sm:$0xf0]
        %v2661 = vld [vmem:[%s269 + $0x28] sm:$0xf0]
        %v2662 = vld [vmem:[%s269 + $0x30] sm:$0xf]
        %v2663 = vld [vmem:[%s269 + $0x38] sm:$0xf]
        %v2664 = vld [vmem:[%s269 + $0x40] sm:$0xf0]
        %v2665 = vld [vmem:[%s269 + $0x48] sm:$0xf0]
        %v2666 = vld [vmem:[%s269 + $0x50] sm:$0xf]
        %v2667 = vld [vmem:[%s269 + $0x58] sm:$0xf]
        %v2668 = vld [vmem:[%s269 + $0x60] sm:$0xf0]
        %v2669 = vld [vmem:[%s269 + $0x68] sm:$0xf0]
        %v2670 = vld [vmem:[%s269 + $0x70] sm:$0xf]
        %v2671 = vld [vmem:[%s269 + $0x78] sm:$0xf]
        %v2672 = vld [vmem:[%s269 + $0x80] sm:$0xf0]
        %v2673 = vld [vmem:[%s269 + $0x88] sm:$0xf0]
        %v2674 = vld [vmem:[%s269 + $0x90] sm:$0xf]
        %v2675 = vld [vmem:[%s269 + $0x98] sm:$0xf]
        %v2676 = vld [vmem:[%s269 + $0xa0] sm:$0xf0]
        %v2677 = vld [vmem:[%s269 + $0xa8] sm:$0xf0]
        %v2678 = vld [vmem:[%s269 + $0xb0] sm:$0xf]
        %v2679 = vld [vmem:[%s269 + $0xb8] sm:$0xf]
        %v2680 = vld [vmem:[%s269 + $0xc0] sm:$0xf0]
        %v2681 = vld [vmem:[%s269 + $0xc8] sm:$0xf0]
        %v2682 = vld [vmem:[%s269 + $0xd0] sm:$0xf]
        %v2683 = vld [vmem:[%s269 + $0xd8] sm:$0xf]
        %v2684 = vld [vmem:[%s269 + $0xe0] sm:$0xf0]
        %v2685 = vld [vmem:[%s269 + $0xe8] sm:$0xf0]
        %v2686 = vld [vmem:[%s269 + $0xf0] sm:$0xf]
        %v2687 = vld [vmem:[%s269 + $0xf8] sm:$0xf]
        %v2688 = vld [vmem:[%s269 + $0x100] sm:$0xf0]
        %v2689 = vld [vmem:[%s269 + $0x108] sm:$0xf0]
        %v2690 = vld [vmem:[%s269 + $0x110] sm:$0xf]
        %v2691 = vld [vmem:[%s269 + $0x118] sm:$0xf]
        %v2692 = vld [vmem:[%s269 + $0x120] sm:$0xf0]
        %v2693 = vld [vmem:[%s269 + $0x128] sm:$0xf0]
        %v2694 = vld [vmem:[%s269 + $0x130] sm:$0xf]
        %v2695 = vld [vmem:[%s269 + $0x138] sm:$0xf]
        %v2696 = vld [vmem:[%s269 + $0x140] sm:$0xf0]
        %v2697 = vld [vmem:[%s269 + $0x148] sm:$0xf0]
        %v2698 = vld [vmem:[%s269 + $0x150] sm:$0xf]
        %v2699 = vld [vmem:[%s269 + $0x158] sm:$0xf]
        %v2700 = vlaneseq
        %v2701 = vshrl.u32 %v2700, 7
        %v2702 = vsub.s32 4, %v2701
        %v2703 = vrot.slane %v301, %v2702
        %v2704 = vlaneseq
        %v2705 = vshrl.u32 %v2704, 7
        %v2706 = vsub.s32 4, %v2705
        %v2707 = vrot.slane %v302, %v2706
        %v2708 = vmul.f32 %v2656, %v2703
        %v2709 = vmul.f32 %v2657, %v2707
        %v2710 = vmul.f32 %v2658, %v2703
        %v2711 = vmul.f32 %v2659, %v2707
        %v2712 = vmul.f32 %v2660, %v2703
        %v2713 = vmul.f32 %v2661, %v2707
        %v2714 = vmul.f32 %v2662, %v2703
        %v2715 = vmul.f32 %v2663, %v2707
        %v2716 = vmul.f32 %v2664, %v2703
        %v2717 = vmul.f32 %v2665, %v2707
        %v2718 = vmul.f32 %v2666, %v2703
        %v2719 = vmul.f32 %v2667, %v2707
        %v2720 = vmul.f32 %v2668, %v2703
        %v2721 = vmul.f32 %v2669, %v2707
        %v2722 = vmul.f32 %v2670, %v2703
        %v2723 = vmul.f32 %v2671, %v2707
        %v2724 = vmul.f32 %v2672, %v2703
        %v2725 = vmul.f32 %v2673, %v2707
        %v2726 = vmul.f32 %v2674, %v2703
        %v2727 = vmul.f32 %v2675, %v2707
        %v2728 = vmul.f32 %v2676, %v2703
        %v2729 = vmul.f32 %v2677, %v2707
        %v2730 = vmul.f32 %v2678, %v2703
        %v2731 = vmul.f32 %v2679, %v2707
        %v2732 = vmul.f32 %v2680, %v2703
        %v2733 = vmul.f32 %v2681, %v2707
        %v2734 = vmul.f32 %v2682, %v2703
        %v2735 = vmul.f32 %v2683, %v2707
        %vm2764 = vcmask 1043456
        %v2765 = vrot.slane %v2708, 4
        %v2766 = vrot.slane %v2710, 4
        %v2767 = vsel %vm2764, %v2765, %v2766
        %v2768 = vrot.slane %v2709, 4
        %v2769 = vrot.slane %v2711, 4
        %v2770 = vsel %vm2764, %v2768, %v2769
        %v2771 = vrot.slane %v2712, 4
        %v2772 = vrot.slane %v2714, 4
        %v2773 = vsel %vm2764, %v2771, %v2772
        %v2774 = vrot.slane %v2713, 4
        %v2775 = vrot.slane %v2715, 4
        %v2776 = vsel %vm2764, %v2774, %v2775
        %v2777 = vrot.slane %v2716, 4
        %v2778 = vrot.slane %v2718, 4
        %v2779 = vsel %vm2764, %v2777, %v2778
        %v2780 = vrot.slane %v2717, 4
        %v2781 = vrot.slane %v2719, 4
        %v2782 = vsel %vm2764, %v2780, %v2781
        %v2783 = vrot.slane %v2720, 4
        %v2784 = vrot.slane %v2722, 4
        %v2785 = vsel %vm2764, %v2783, %v2784
        %v2786 = vrot.slane %v2721, 4
        %v2787 = vrot.slane %v2723, 4
        %v2788 = vsel %vm2764, %v2786, %v2787
        %v2789 = vrot.slane %v2724, 4
        %v2790 = vrot.slane %v2726, 4
        %v2791 = vsel %vm2764, %v2789, %v2790
        %v2792 = vrot.slane %v2725, 4
        %v2793 = vrot.slane %v2727, 4
        %v2794 = vsel %vm2764, %v2792, %v2793
        %v2795 = vrot.slane %v2728, 4
        %v2796 = vrot.slane %v2730, 4
        %v2797 = vsel %vm2764, %v2795, %v2796
        %v2798 = vrot.slane %v2729, 4
        %v2799 = vrot.slane %v2731, 4
        %v2800 = vsel %vm2764, %v2798, %v2799
        %v2801 = vrot.slane %v2732, 4
        %v2802 = vrot.slane %v2734, 4
        %v2803 = vsel %vm2764, %v2801, %v2802
        %v2804 = vrot.slane %v2733, 4
        %v2805 = vrot.slane %v2735, 4
        %v2806 = vsel %vm2764, %v2804, %v2805
        %v2821 = vadd.f32 %v2642, %v2767
        %v2822 = vadd.f32 %v2643, %v2770
        %v2823 = vadd.f32 %v2644, %v2773
        %v2824 = vadd.f32 %v2645, %v2776
        %v2825 = vadd.f32 %v2646, %v2779
        %v2826 = vadd.f32 %v2647, %v2782
        %v2827 = vadd.f32 %v2648, %v2785
        %v2828 = vadd.f32 %v2649, %v2788
        %v2829 = vadd.f32 %v2650, %v2791
        %v2830 = vadd.f32 %v2651, %v2794
        %v2831 = vadd.f32 %v2652, %v2797
        %v2832 = vadd.f32 %v2653, %v2800
        %v2833 = vadd.f32 %v2654, %v2803
        %v2834 = vadd.f32 %v2655, %v2806
        %v2835 = vlaneseq
        %v2836 = vshrl.u32 %v2835, 7
        %v2837 = vsub.s32 1, %v2836
        %v2838 = vrot.slane %v303, %v2837
        %v2839 = vlaneseq
        %v2840 = vshrl.u32 %v2839, 7
        %v2841 = vsub.s32 1, %v2840
        %v2842 = vrot.slane %v304, %v2841
        %v2843 = vmul.f32 %v2660, %v2838
        %v2844 = vmul.f32 %v2661, %v2842
        %v2845 = vmul.f32 %v2662, %v2838
        %v2846 = vmul.f32 %v2663, %v2842
        %v2847 = vmul.f32 %v2664, %v2838
        %v2848 = vmul.f32 %v2665, %v2842
        %v2849 = vmul.f32 %v2666, %v2838
        %v2850 = vmul.f32 %v2667, %v2842
        %v2851 = vmul.f32 %v2668, %v2838
        %v2852 = vmul.f32 %v2669, %v2842
        %v2853 = vmul.f32 %v2670, %v2838
        %v2854 = vmul.f32 %v2671, %v2842
        %v2855 = vmul.f32 %v2672, %v2838
        %v2856 = vmul.f32 %v2673, %v2842
        %v2857 = vmul.f32 %v2674, %v2838
        %v2858 = vmul.f32 %v2675, %v2842
        %v2859 = vmul.f32 %v2676, %v2838
        %v2860 = vmul.f32 %v2677, %v2842
        %v2861 = vmul.f32 %v2678, %v2838
        %v2862 = vmul.f32 %v2679, %v2842
        %v2863 = vmul.f32 %v2680, %v2838
        %v2864 = vmul.f32 %v2681, %v2842
        %v2865 = vmul.f32 %v2682, %v2838
        %v2866 = vmul.f32 %v2683, %v2842
        %v2867 = vmul.f32 %v2684, %v2838
        %v2868 = vmul.f32 %v2685, %v2842
        %v2869 = vmul.f32 %v2686, %v2838
        %v2870 = vmul.f32 %v2687, %v2842
        %v2899 = vrot.slane %v2843, 4
        %v2900 = vrot.slane %v2845, 4
        %v2901 = vsel %vm2764, %v2899, %v2900
        %v2902 = vrot.slane %v2844, 4
        %v2903 = vrot.slane %v2846, 4
        %v2904 = vsel %vm2764, %v2902, %v2903
        %v2905 = vrot.slane %v2847, 4
        %v2906 = vrot.slane %v2849, 4
        %v2907 = vsel %vm2764, %v2905, %v2906
        %v2908 = vrot.slane %v2848, 4
        %v2909 = vrot.slane %v2850, 4
        %v2910 = vsel %vm2764, %v2908, %v2909
        %v2911 = vrot.slane %v2851, 4
        %v2912 = vrot.slane %v2853, 4
        %v2913 = vsel %vm2764, %v2911, %v2912
        %v2914 = vrot.slane %v2852, 4
        %v2915 = vrot.slane %v2854, 4
        %v2916 = vsel %vm2764, %v2914, %v2915
        %v2917 = vrot.slane %v2855, 4
        %v2918 = vrot.slane %v2857, 4
        %v2919 = vsel %vm2764, %v2917, %v2918
        %v2920 = vrot.slane %v2856, 4
        %v2921 = vrot.slane %v2858, 4
        %v2922 = vsel %vm2764, %v2920, %v2921
        %v2923 = vrot.slane %v2859, 4
        %v2924 = vrot.slane %v2861, 4
        %v2925 = vsel %vm2764, %v2923, %v2924
        %v2926 = vrot.slane %v2860, 4
        %v2927 = vrot.slane %v2862, 4
        %v2928 = vsel %vm2764, %v2926, %v2927
        %v2929 = vrot.slane %v2863, 4
        %v2930 = vrot.slane %v2865, 4
        %v2931 = vsel %vm2764, %v2929, %v2930
        %v2932 = vrot.slane %v2864, 4
        %v2933 = vrot.slane %v2866, 4
        %v2934 = vsel %vm2764, %v2932, %v2933
        %v2935 = vrot.slane %v2867, 4
        %v2936 = vrot.slane %v2869, 4
        %v2937 = vsel %vm2764, %v2935, %v2936
        %v2938 = vrot.slane %v2868, 4
        %v2939 = vrot.slane %v2870, 4
        %v2940 = vsel %vm2764, %v2938, %v2939
        %v2955 = vadd.f32 %v2821, %v2901
        %v2956 = vadd.f32 %v2822, %v2904
        %v2957 = vadd.f32 %v2823, %v2907
        %v2958 = vadd.f32 %v2824, %v2910
        %v2959 = vadd.f32 %v2825, %v2913
        %v2960 = vadd.f32 %v2826, %v2916
        %v2961 = vadd.f32 %v2827, %v2919
        %v2962 = vadd.f32 %v2828, %v2922
        %v2963 = vadd.f32 %v2829, %v2925
        %v2964 = vadd.f32 %v2830, %v2928
        %v2965 = vadd.f32 %v2831, %v2931
        %v2966 = vadd.f32 %v2832, %v2934
        %v2967 = vadd.f32 %v2833, %v2937
        %v2968 = vadd.f32 %v2834, %v2940
        %v2969 = vlaneseq
        %v2970 = vshrl.u32 %v2969, 7
        %v2971 = vsub.s32 6, %v2970
        %v2972 = vrot.slane %v303, %v2971
        %v2973 = vlaneseq
        %v2974 = vshrl.u32 %v2973, 7
        %v2975 = vsub.s32 6, %v2974
        %v2976 = vrot.slane %v304, %v2975
        %v2977 = vmul.f32 %v2664, %v2972
        %v2978 = vmul.f32 %v2665, %v2976
        %v2979 = vmul.f32 %v2666, %v2972
        %v2980 = vmul.f32 %v2667, %v2976
        %v2981 = vmul.f32 %v2668, %v2972
        %v2982 = vmul.f32 %v2669, %v2976
        %v2983 = vmul.f32 %v2670, %v2972
        %v2984 = vmul.f32 %v2671, %v2976
        %v2985 = vmul.f32 %v2672, %v2972
        %v2986 = vmul.f32 %v2673, %v2976
        %v2987 = vmul.f32 %v2674, %v2972
        %v2988 = vmul.f32 %v2675, %v2976
        %v2989 = vmul.f32 %v2676, %v2972
        %v2990 = vmul.f32 %v2677, %v2976
        %v2991 = vmul.f32 %v2678, %v2972
        %v2992 = vmul.f32 %v2679, %v2976
        %v2993 = vmul.f32 %v2680, %v2972
        %v2994 = vmul.f32 %v2681, %v2976
        %v2995 = vmul.f32 %v2682, %v2972
        %v2996 = vmul.f32 %v2683, %v2976
        %v2997 = vmul.f32 %v2684, %v2972
        %v2998 = vmul.f32 %v2685, %v2976
        %v2999 = vmul.f32 %v2686, %v2972
        %v3000 = vmul.f32 %v2687, %v2976
        %v3001 = vmul.f32 %v2688, %v2972
        %v3002 = vmul.f32 %v2689, %v2976
        %v3003 = vmul.f32 %v2690, %v2972
        %v3004 = vmul.f32 %v2691, %v2976
        %v3033 = vrot.slane %v2977, 4
        %v3034 = vrot.slane %v2979, 4
        %v3035 = vsel %vm2764, %v3033, %v3034
        %v3036 = vrot.slane %v2978, 4
        %v3037 = vrot.slane %v2980, 4
        %v3038 = vsel %vm2764, %v3036, %v3037
        %v3039 = vrot.slane %v2981, 4
        %v3040 = vrot.slane %v2983, 4
        %v3041 = vsel %vm2764, %v3039, %v3040
        %v3042 = vrot.slane %v2982, 4
        %v3043 = vrot.slane %v2984, 4
        %v3044 = vsel %vm2764, %v3042, %v3043
        %v3045 = vrot.slane %v2985, 4
        %v3046 = vrot.slane %v2987, 4
        %v3047 = vsel %vm2764, %v3045, %v3046
        %v3048 = vrot.slane %v2986, 4
        %v3049 = vrot.slane %v2988, 4
        %v3050 = vsel %vm2764, %v3048, %v3049
        %v3051 = vrot.slane %v2989, 4
        %v3052 = vrot.slane %v2991, 4
        %v3053 = vsel %vm2764, %v3051, %v3052
        %v3054 = vrot.slane %v2990, 4
        %v3055 = vrot.slane %v2992, 4
        %v3056 = vsel %vm2764, %v3054, %v3055
        %v3057 = vrot.slane %v2993, 4
        %v3058 = vrot.slane %v2995, 4
        %v3059 = vsel %vm2764, %v3057, %v3058
        %v3060 = vrot.slane %v2994, 4
        %v3061 = vrot.slane %v2996, 4
        %v3062 = vsel %vm2764, %v3060, %v3061
        %v3063 = vrot.slane %v2997, 4
        %v3064 = vrot.slane %v2999, 4
        %v3065 = vsel %vm2764, %v3063, %v3064
        %v3066 = vrot.slane %v2998, 4
        %v3067 = vrot.slane %v3000, 4
        %v3068 = vsel %vm2764, %v3066, %v3067
        %v3069 = vrot.slane %v3001, 4
        %v3070 = vrot.slane %v3003, 4
        %v3071 = vsel %vm2764, %v3069, %v3070
        %v3072 = vrot.slane %v3002, 4
        %v3073 = vrot.slane %v3004, 4
        %v3074 = vsel %vm2764, %v3072, %v3073
        %v3089 = vadd.f32 %v2955, %v3035
        %v3090 = vadd.f32 %v2956, %v3038
        %v3091 = vadd.f32 %v2957, %v3041
        %v3092 = vadd.f32 %v2958, %v3044
        %v3093 = vadd.f32 %v2959, %v3047
        %v3094 = vadd.f32 %v2960, %v3050
        %v3095 = vadd.f32 %v2961, %v3053
        %v3096 = vadd.f32 %v2962, %v3056
        %v3097 = vadd.f32 %v2963, %v3059
        %v3098 = vadd.f32 %v2964, %v3062
        %v3099 = vadd.f32 %v2965, %v3065
        %v3100 = vadd.f32 %v2966, %v3068
        %v3101 = vadd.f32 %v2967, %v3071
        %v3102 = vadd.f32 %v2968, %v3074
        %v3103 = vlaneseq
        %v3104 = vshrl.u32 %v3103, 7
        %v3105 = vsub.s32 3, %v3104
        %v3106 = vrot.slane %v305, %v3105
        %v3107 = vlaneseq
        %v3108 = vshrl.u32 %v3107, 7
        %v3109 = vsub.s32 3, %v3108
        %v3110 = vrot.slane %v306, %v3109
        %v3111 = vmul.f32 %v2668, %v3106
        %v3112 = vmul.f32 %v2669, %v3110
        %v3113 = vmul.f32 %v2670, %v3106
        %v3114 = vmul.f32 %v2671, %v3110
        %v3115 = vmul.f32 %v2672, %v3106
        %v3116 = vmul.f32 %v2673, %v3110
        %v3117 = vmul.f32 %v2674, %v3106
        %v3118 = vmul.f32 %v2675, %v3110
        %v3119 = vmul.f32 %v2676, %v3106
        %v3120 = vmul.f32 %v2677, %v3110
        %v3121 = vmul.f32 %v2678, %v3106
        %v3122 = vmul.f32 %v2679, %v3110
        %v3123 = vmul.f32 %v2680, %v3106
        %v3124 = vmul.f32 %v2681, %v3110
        %v3125 = vmul.f32 %v2682, %v3106
        %v3126 = vmul.f32 %v2683, %v3110
        %v3127 = vmul.f32 %v2684, %v3106
        %v3128 = vmul.f32 %v2685, %v3110
        %v3129 = vmul.f32 %v2686, %v3106
        %v3130 = vmul.f32 %v2687, %v3110
        %v3131 = vmul.f32 %v2688, %v3106
        %v3132 = vmul.f32 %v2689, %v3110
        %v3133 = vmul.f32 %v2690, %v3106
        %v3134 = vmul.f32 %v2691, %v3110
        %v3135 = vmul.f32 %v2692, %v3106
        %v3136 = vmul.f32 %v2693, %v3110
        %v3137 = vmul.f32 %v2694, %v3106
        %v3138 = vmul.f32 %v2695, %v3110
        %v3167 = vrot.slane %v3111, 4
        %v3168 = vrot.slane %v3113, 4
        %v3169 = vsel %vm2764, %v3167, %v3168
        %v3170 = vrot.slane %v3112, 4
        %v3171 = vrot.slane %v3114, 4
        %v3172 = vsel %vm2764, %v3170, %v3171
        %v3173 = vrot.slane %v3115, 4
        %v3174 = vrot.slane %v3117, 4
        %v3175 = vsel %vm2764, %v3173, %v3174
        %v3176 = vrot.slane %v3116, 4
        %v3177 = vrot.slane %v3118, 4
        %v3178 = vsel %vm2764, %v3176, %v3177
        %v3179 = vrot.slane %v3119, 4
        %v3180 = vrot.slane %v3121, 4
        %v3181 = vsel %vm2764, %v3179, %v3180
        %v3182 = vrot.slane %v3120, 4
        %v3183 = vrot.slane %v3122, 4
        %v3184 = vsel %vm2764, %v3182, %v3183
        %v3185 = vrot.slane %v3123, 4
        %v3186 = vrot.slane %v3125, 4
        %v3187 = vsel %vm2764, %v3185, %v3186
        %v3188 = vrot.slane %v3124, 4
        %v3189 = vrot.slane %v3126, 4
        %v3190 = vsel %vm2764, %v3188, %v3189
        %v3191 = vrot.slane %v3127, 4
        %v3192 = vrot.slane %v3129, 4
        %v3193 = vsel %vm2764, %v3191, %v3192
        %v3194 = vrot.slane %v3128, 4
        %v3195 = vrot.slane %v3130, 4
        %v3196 = vsel %vm2764, %v3194, %v3195
        %v3197 = vrot.slane %v3131, 4
        %v3198 = vrot.slane %v3133, 4
        %v3199 = vsel %vm2764, %v3197, %v3198
        %v3200 = vrot.slane %v3132, 4
        %v3201 = vrot.slane %v3134, 4
        %v3202 = vsel %vm2764, %v3200, %v3201
        %v3203 = vrot.slane %v3135, 4
        %v3204 = vrot.slane %v3137, 4
        %v3205 = vsel %vm2764, %v3203, %v3204
        %v3206 = vrot.slane %v3136, 4
        %v3207 = vrot.slane %v3138, 4
        %v3208 = vsel %vm2764, %v3206, %v3207
        %v3223 = vadd.f32 %v3089, %v3169
        %v3224 = vadd.f32 %v3090, %v3172
        %v3225 = vadd.f32 %v3091, %v3175
        %v3226 = vadd.f32 %v3092, %v3178
        %v3227 = vadd.f32 %v3093, %v3181
        %v3228 = vadd.f32 %v3094, %v3184
        %v3229 = vadd.f32 %v3095, %v3187
        %v3230 = vadd.f32 %v3096, %v3190
        %v3231 = vadd.f32 %v3097, %v3193
        %v3232 = vadd.f32 %v3098, %v3196
        %v3233 = vadd.f32 %v3099, %v3199
        %v3234 = vadd.f32 %v3100, %v3202
        %v3235 = vadd.f32 %v3101, %v3205
        %v3236 = vadd.f32 %v3102, %v3208
        %v3237 = vlaneseq
        %v3238 = vshrl.u32 %v3237, 7
        %v3239 = vsub.s32 0, %v3238
        %v3240 = vrot.slane %v307, %v3239
        %v3241 = vlaneseq
        %v3242 = vshrl.u32 %v3241, 7
        %v3243 = vsub.s32 0, %v3242
        %v3244 = vrot.slane %v308, %v3243
        %v3245 = vmul.f32 %v2672, %v3240
        %v3246 = vmul.f32 %v2673, %v3244
        %v3247 = vmul.f32 %v2674, %v3240
        %v3248 = vmul.f32 %v2675, %v3244
        %v3249 = vmul.f32 %v2676, %v3240
        %v3250 = vmul.f32 %v2677, %v3244
        %v3251 = vmul.f32 %v2678, %v3240
        %v3252 = vmul.f32 %v2679, %v3244
        %v3253 = vmul.f32 %v2680, %v3240
        %v3254 = vmul.f32 %v2681, %v3244
        %v3255 = vmul.f32 %v2682, %v3240
        %v3256 = vmul.f32 %v2683, %v3244
        %v3257 = vmul.f32 %v2684, %v3240
        %v3258 = vmul.f32 %v2685, %v3244
        %v3259 = vmul.f32 %v2686, %v3240
        %v3260 = vmul.f32 %v2687, %v3244
        %v3261 = vmul.f32 %v2688, %v3240
        %v3262 = vmul.f32 %v2689, %v3244
        %v3263 = vmul.f32 %v2690, %v3240
        %v3264 = vmul.f32 %v2691, %v3244
        %v3265 = vmul.f32 %v2692, %v3240
        %v3266 = vmul.f32 %v2693, %v3244
        %v3267 = vmul.f32 %v2694, %v3240
        %v3268 = vmul.f32 %v2695, %v3244
        %v3269 = vmul.f32 %v2696, %v3240
        %v3270 = vmul.f32 %v2697, %v3244
        %v3271 = vmul.f32 %v2698, %v3240
        %v3272 = vmul.f32 %v2699, %v3244
        %v3301 = vrot.slane %v3245, 4
        %v3302 = vrot.slane %v3247, 4
        %v3303 = vsel %vm2764, %v3301, %v3302
        %v3304 = vrot.slane %v3246, 4
        %v3305 = vrot.slane %v3248, 4
        %v3306 = vsel %vm2764, %v3304, %v3305
        %v3307 = vrot.slane %v3249, 4
        %v3308 = vrot.slane %v3251, 4
        %v3309 = vsel %vm2764, %v3307, %v3308
        %v3310 = vrot.slane %v3250, 4
        %v3311 = vrot.slane %v3252, 4
        %v3312 = vsel %vm2764, %v3310, %v3311
        %v3313 = vrot.slane %v3253, 4
        %v3314 = vrot.slane %v3255, 4
        %v3315 = vsel %vm2764, %v3313, %v3314
        %v3316 = vrot.slane %v3254, 4
        %v3317 = vrot.slane %v3256, 4
        %v3318 = vsel %vm2764, %v3316, %v3317
        %v3319 = vrot.slane %v3257, 4
        %v3320 = vrot.slane %v3259, 4
        %v3321 = vsel %vm2764, %v3319, %v3320
        %v3322 = vrot.slane %v3258, 4
        %v3323 = vrot.slane %v3260, 4
        %v3324 = vsel %vm2764, %v3322, %v3323
        %v3325 = vrot.slane %v3261, 4
        %v3326 = vrot.slane %v3263, 4
        %v3327 = vsel %vm2764, %v3325, %v3326
        %v3328 = vrot.slane %v3262, 4
        %v3329 = vrot.slane %v3264, 4
        %v3330 = vsel %vm2764, %v3328, %v3329
        %v3331 = vrot.slane %v3265, 4
        %v3332 = vrot.slane %v3267, 4
        %v3333 = vsel %vm2764, %v3331, %v3332
        %v3334 = vrot.slane %v3266, 4
        %v3335 = vrot.slane %v3268, 4
        %v3336 = vsel %vm2764, %v3334, %v3335
        %v3337 = vrot.slane %v3269, 4
        %v3338 = vrot.slane %v3271, 4
        %v3339 = vsel %vm2764, %v3337, %v3338
        %v3340 = vrot.slane %v3270, 4
        %v3341 = vrot.slane %v3272, 4
        %v3342 = vsel %vm2764, %v3340, %v3341
        %v3357 = vadd.f32 %v3223, %v3303
        %v3358 = vadd.f32 %v3224, %v3306
        %v3359 = vadd.f32 %v3225, %v3309
        %v3360 = vadd.f32 %v3226, %v3312
        %v3361 = vadd.f32 %v3227, %v3315
        %v3362 = vadd.f32 %v3228, %v3318
        %v3363 = vadd.f32 %v3229, %v3321
        %v3364 = vadd.f32 %v3230, %v3324
        %v3365 = vadd.f32 %v3231, %v3327
        %v3366 = vadd.f32 %v3232, %v3330
        %v3367 = vadd.f32 %v3233, %v3333
        %v3368 = vadd.f32 %v3234, %v3336
        %v3369 = vadd.f32 %v3235, %v3339
        %v3370 = vadd.f32 %v3236, %v3342
        %3371 = vst [vmem:[%s297] sm:$0xff] %v3357
        %3372 = vst [vmem:[%s297 + $0x8] sm:$0xff] %v3358
        %3373 = vst [vmem:[%s297 + $0x10] sm:$0xff] %v3359
        %3374 = vst [vmem:[%s297 + $0x18] sm:$0xff] %v3360
        %3375 = vst [vmem:[%s297 + $0x20] sm:$0xff] %v3361
        %3376 = vst [vmem:[%s297 + $0x28] sm:$0xff] %v3362
        %3377 = vst [vmem:[%s297 + $0x30] sm:$0xff] %v3363
        %3378 = vst [vmem:[%s297 + $0x38] sm:$0xff] %v3364
        %3379 = vst [vmem:[%s297 + $0x40] sm:$0xff] %v3365
        %3380 = vst [vmem:[%s297 + $0x48] sm:$0xff] %v3366
        %3381 = vst [vmem:[%s297 + $0x50] sm:$0xff] %v3367
        %3382 = vst [vmem:[%s297 + $0x58] sm:$0xff] %v3368
        %3383 = vst [vmem:[%s297 + $0x60] sm:$0xff] %v3369
        %3384 = vst [vmem:[%s297 + $0x68] sm:$0xff] %v3370
        %s3385 = sand.u32 %s73, 1
        %s3386 = sand.u32 %s73, 1
        %s3387 = smul.addr %s3386, 112
        %s3388 = scalar_lea.vmem [#allocation4], %s3387
        // Predicated region
        $region75: #{depthwise_conv2d_nchw.1} parent=65 // pred_check
          %p3389 = pneg %p83
        $region76: #{depthwise_conv2d_nchw.1} parent=65 // pred_check_branch
          %3391 = sbr.rel (%p3389) target = $region78
        $region77: #{depthwise_conv2d_nchw.1} parent=65 // pred_region
          %s3392 = smul.u32 2, %s13
          %s3393 = smul.addr %s3392, 8
          %s3394 = scalar_lea.vmem %s2, %s3393
          // Predicated region
          $region79: #{depthwise_conv2d_nchw.1} parent=77 // pred_check
            _
          $region80: #{depthwise_conv2d_nchw.1} parent=77 // pred_check_branch
            %3396 = sbr.rel (0) target = $region82
          $region81: #{depthwise_conv2d_nchw.1} parent=77 // pred_region
            // Predicated region
            $region83: #{depthwise_conv2d_nchw.1} parent=81 // pred_check
              _
            $region84: #{depthwise_conv2d_nchw.1} parent=81 // pred_check_branch
              %3398 = sbr.rel (0) target = $region86
            $region85: #{depthwise_conv2d_nchw.1} parent=81 // pred_region
              loop: start=0, step=1, limit=1
              $region87: #{depthwise_conv2d_nchw.1} parent=85 // loop_pre_header
                _
              $region88: #{depthwise_conv2d_nchw.1} parent=85 // loop_header
                %s3400 = sphi 0, %s3404
                %p3401 = scmp.ge.s32.totalorder %s3400, 1
                %s3405 = sphi %s3388, %s3388
                %s3406 = sphi %s3394, %s3394
              $region89: #{depthwise_conv2d_nchw.1} parent=85 // loop_header_branch
                %3403 = sbr.rel (%p3401) target = $region93
              $region90: #{depthwise_conv2d_nchw.1} parent=85 // loop_body
                %v3407 = vld [vmem:[%s3405] sm:$0xff]
                %3408 = vst [vmem:[%s3406] sm:$0xff] %v3407
                %v3409 = vld [vmem:[%s3405 + $0x8] sm:$0xff]
                %3410 = vst [vmem:[%s3406 + $0x8] sm:$0xff] %v3409
                %v3411 = vld [vmem:[%s3405 + $0x10] sm:$0xff]
                %3412 = vst [vmem:[%s3406 + $0x90] sm:$0xff] %v3411
                %v3413 = vld [vmem:[%s3405 + $0x18] sm:$0xff]
                %3414 = vst [vmem:[%s3406 + $0x98] sm:$0xff] %v3413
                %v3415 = vld [vmem:[%s3405 + $0x20] sm:$0xff]
                %3416 = vst [vmem:[%s3406 + $0x120] sm:$0xff] %v3415
                %v3417 = vld [vmem:[%s3405 + $0x28] sm:$0xff]
                %3418 = vst [vmem:[%s3406 + $0x128] sm:$0xff] %v3417
                %v3419 = vld [vmem:[%s3405 + $0x30] sm:$0xff]
                %3420 = vst [vmem:[%s3406 + $0x1b0] sm:$0xff] %v3419
                %v3421 = vld [vmem:[%s3405 + $0x38] sm:$0xff]
                %3422 = vst [vmem:[%s3406 + $0x1b8] sm:$0xff] %v3421
                %v3423 = vld [vmem:[%s3405 + $0x40] sm:$0xff]
                %3424 = vst [vmem:[%s3406 + $0x240] sm:$0xff] %v3423
                %v3425 = vld [vmem:[%s3405 + $0x48] sm:$0xff]
                %3426 = vst [vmem:[%s3406 + $0x248] sm:$0xff] %v3425
                %v3427 = vld [vmem:[%s3405 + $0x50] sm:$0xff]
                %3428 = vst [vmem:[%s3406 + $0x2d0] sm:$0xff] %v3427
                %v3429 = vld [vmem:[%s3405 + $0x58] sm:$0xff]
                %3430 = vst [vmem:[%s3406 + $0x2d8] sm:$0xff] %v3429
                %v3431 = vld [vmem:[%s3405 + $0x60] sm:$0xff]
                %3432 = vst [vmem:[%s3406 + $0x360] sm:$0xff] %v3431
                %v3433 = vld [vmem:[%s3405 + $0x68] sm:$0xff]
                %3434 = vst [vmem:[%s3406 + $0x368] sm:$0xff] %v3433
              $region91: #{depthwise_conv2d_nchw.1} parent=85 // loop_footer
                %s3404 = sadd.s32 1, %s3400
              $region92: #{depthwise_conv2d_nchw.1} parent=85 // loop_footer_branch
                %3399 = sbr.rel target = $region88
              $region93: #{depthwise_conv2d_nchw.1} parent=85 // loop_exit
                _
            $region86: #{depthwise_conv2d_nchw.1} parent=81 // pred_fallthru
              _
            // Predicated region
            $region94: #{depthwise_conv2d_nchw.1} parent=81 // pred_check
              _
            $region95: #{depthwise_conv2d_nchw.1} parent=81 // pred_check_branch
              %3436 = sbr.rel target = $region97
            $region96: #{depthwise_conv2d_nchw.1} parent=81 // pred_region
              _
            $region97: #{depthwise_conv2d_nchw.1} parent=81 // pred_fallthru
              _
          $region82: #{depthwise_conv2d_nchw.1} parent=77 // pred_fallthru
            _
          %3437 = vnop
        $region78: #{depthwise_conv2d_nchw.1} parent=65 // pred_fallthru
          _
      $region66: #{depthwise_conv2d_nchw.1} parent=5 // pred_fallthru
        _
      %p3438 = scmp.le.s32.totalorder 2, %s8
      // Predicated region
      $region98: #{depthwise_conv2d_nchw.1} parent=5 // pred_check
        %p3439 = pneg %p3438
      $region99: #{depthwise_conv2d_nchw.1} parent=5 // pred_check_branch
        %3441 = sbr.rel (%p3439) target = $region101
      $region100: #{depthwise_conv2d_nchw.1} parent=5 // pred_region
        %s3442 = ssub.s32 %s8, 2
        // Predicated region
        $region102: #{depthwise_conv2d_nchw.1} parent=100 // pred_check
          %p3443 = pneg %p89
        $region103: #{depthwise_conv2d_nchw.1} parent=100 // pred_check_branch
          %3445 = sbr.rel (%p3443) target = $region105
        $region104: #{depthwise_conv2d_nchw.1} parent=100 // pred_region
          %s3446 = sand.u32 %s74, 1
          %s3447 = sand.u32 %s74, 1
          %s3448 = smul.addr %s3447, 112
          %s3449 = scalar_lea.vmem [#allocation4], %s3448
        $region105: #{depthwise_conv2d_nchw.1} parent=100 // pred_fallthru
          _
      $region101: #{depthwise_conv2d_nchw.1} parent=5 // pred_fallthru
        _
    $region6: #{depthwise_conv2d_nchw.1} parent=1 // loop_footer
      %s12 = sadd.s32 1, %s8
    $region7: #{depthwise_conv2d_nchw.1} parent=1 // loop_footer_branch
      %7 = sbr.rel target = $region3
    $region8: #{depthwise_conv2d_nchw.1} parent=1 // loop_exit
      _

</llo_original>
